<compile_context>
chip_gen: v5e
topology: v5e:2x2
jax: 0.10.0
libtpu: 0.0.40
codegen_flags: <defaults>
</compile_context>

<pallas_src>
import jax
import jax.numpy as jnp
from jax.experimental import pallas as pl
from jax.experimental.pallas import tpu as pltpu

BN_EPS = 1e-5


# ----------------------------------------------------------------------------
# Kernel 1: fused Conv5x5(+folded BN) + ReLU + MaxPool2 as 4 matmuls + max.
#   p_ref : (4, TM, K)   im2col patches, one slab per 2x2 pooling position
#   w_ref : (K, Cout)    BN-scale-folded conv weight (K = 25*Cin)
#   b_ref : (1, Cout)    BN-shift-folded conv bias
#   o_ref : (TM, Cout)
# The 2x2 max-pool commutes with the shared bias add and the monotonic ReLU,
# so pooling is just an elementwise max over the four matmul results.
# ----------------------------------------------------------------------------
def conv_bn_relu_pool_kernel(p_ref, w_ref, b_ref, o_ref):
    w = w_ref[...]
    acc = jnp.dot(p_ref[0], w, preferred_element_type=jnp.float32)
    for p in range(1, 4):
        acc = jnp.maximum(
            acc, jnp.dot(p_ref[p], w, preferred_element_type=jnp.float32))
    o_ref[...] = jnp.maximum(acc + b_ref[...], 0.0).astype(o_ref.dtype)


def _extract_pool_patches(x_nhwc, ksize=5, pad=2):
    """im2col glue (pure data movement): (N,H,W,C) -> (4, N*H/2*W/2, k*k*C).

    patches[p, n*Ho*Wo + ho*Wo + wo, (ky*k+kx)*C + c]
        = x_padded[n, 2*ho + py + ky, 2*wo + px + kx, c],  p = 2*py + px.
    """
    N, H, W, C = x_nhwc.shape
    xp = jnp.pad(x_nhwc, ((0, 0), (pad, pad), (pad, pad), (0, 0)))
    cols = [xp[:, ky:ky + H, kx:kx + W, :]
            for ky in range(ksize) for kx in range(ksize)]
    imcol = jnp.concatenate(cols, axis=-1)                 # (N, H, W, k*k*C)
    Ho, Wo = H // 2, W // 2
    pats = [imcol[:, py::2, px::2, :].reshape(N * Ho * Wo, ksize * ksize * C)
            for py in range(2) for px in range(2)]
    return jnp.stack(pats, axis=0)                         # (4, M, K)


def conv_bn_relu_pool(x_nhwc, w_mat, bias):
    """x: (N,H,W,Cin); w_mat: (25*Cin, Cout) folded; bias: (1, Cout) folded.

    Returns (N*H/2*W/2, Cout) with rows in NHWC order (n, ho, wo).
    """
    patches = _extract_pool_patches(x_nhwc)
    _, M, K = patches.shape
    Cout = w_mat.shape[1]
    tm = 256 if M % 256 == 0 else M                        # row tile
    return pl.pallas_call(
        conv_bn_relu_pool_kernel,
        out_shape=jax.ShapeDtypeStruct((M, Cout), jnp.float32),
        grid_spec=pltpu.PrefetchScalarGridSpec(
            num_scalar_prefetch=0,
            grid=(M // tm,),
            in_specs=[
                pl.BlockSpec((4, tm, K), lambda i: (0, i, 0)),
                pl.BlockSpec((K, Cout), lambda i: (0, 0)),
                pl.BlockSpec((1, Cout), lambda i: (0, 0)),
            ],
            out_specs=pl.BlockSpec((tm, Cout), lambda i: (i, 0)),
        ),
        compiler_params=pltpu.CompilerParams(
            dimension_semantics=("parallel",)),
    )(patches, w_mat, bias)


# ----------------------------------------------------------------------------
# Kernel 2: fused Linear + log_softmax(dim=1).
# ----------------------------------------------------------------------------
def fc_logsoftmax_kernel(x_ref, w_ref, b_ref, o_ref):
    logits = jnp.dot(x_ref[...], w_ref[...],
                     preferred_element_type=jnp.float32) + b_ref[...]
    m = jnp.max(logits, axis=-1, keepdims=True)
    s = logits - m
    lse = jnp.log(jnp.sum(jnp.exp(s), axis=-1, keepdims=True))
    o_ref[...] = (s - lse).astype(o_ref.dtype)


def fc_logsoftmax(x, w_t, b):
    """x: (N, F); w_t: (F, num_classes) pre-transposed; b: (1, num_classes)."""
    N, F = x.shape
    C = w_t.shape[1]
    return pl.pallas_call(
        fc_logsoftmax_kernel,
        out_shape=jax.ShapeDtypeStruct((N, C), jnp.float32),
        grid_spec=pltpu.PrefetchScalarGridSpec(
            num_scalar_prefetch=0,
            grid=(1,),
            in_specs=[
                pl.BlockSpec((N, F), lambda i: (0, 0)),
                pl.BlockSpec((F, C), lambda i: (0, 0)),
                pl.BlockSpec((1, C), lambda i: (0, 0)),
            ],
            out_specs=pl.BlockSpec((N, C), lambda i: (0, 0)),
        ),
    )(x, w_t, b)


# ----------------------------------------------------------------------------
# Parameter prep: done ONCE (BN fold, conv weight reshape, fc column reorder).
# ----------------------------------------------------------------------------
def prepare_params(params):
    prep = {}
    for li in (1, 2):
        w, b, gamma, beta, mean, var = params[f"layer{li}"]
        Cout, Cin, KH, KW = w.shape
        scale = gamma / jnp.sqrt(var + BN_EPS)                        # (Cout,)
        # im2col row order is (ky, kx, cin): OIHW -> (KH, KW, Cin, Cout)
        w_mat = jnp.transpose(w, (2, 3, 1, 0)).reshape(KH * KW * Cin, Cout)
        prep[f"w{li}"] = (w_mat * scale[None, :]).astype(jnp.float32)
        prep[f"b{li}"] = (((b - mean) * scale + beta)
                          .reshape(1, Cout).astype(jnp.float32))
    fc_w, fc_b = params["fc_w"], params["fc_b"]       # (10, 8*8*32) NCHW-flat
    ncls = fc_w.shape[0]
    # Reorder columns from PyTorch NCHW flatten (c*64 + h*8 + w) to the NHWC
    # flatten order produced by the Pallas path (h*256 + w*32 + c).
    fc_w_nhwc = (fc_w.reshape(ncls, 32, 8, 8)
                 .transpose(0, 2, 3, 1).reshape(ncls, 8 * 8 * 32))
    prep["fc_wT"] = jnp.asarray(fc_w_nhwc.T, jnp.float32)             # (F, 10)
    prep["fc_b"] = jnp.asarray(fc_b.reshape(1, ncls), jnp.float32)
    return prep


# ----------------------------------------------------------------------------
# CNNCifar forward (Pallas path).
# ----------------------------------------------------------------------------
def cnn_cifar_forward(prep, x_nchw):
    N = x_nchw.shape[0]
    x = jnp.transpose(x_nchw, (0, 2, 3, 1)).astype(jnp.float32)   # NHWC
    h = conv_bn_relu_pool(x, prep["w1"], prep["b1"])              # (N*16*16, 16)
    h = h.reshape(N, 16, 16, 16)
    h = conv_bn_relu_pool(h, prep["w2"], prep["b2"])              # (N*8*8, 32)
    h = h.reshape(N, 8 * 8 * 32)                                  # NHWC flatten
    return fc_logsoftmax(h, prep["fc_wT"], prep["fc_b"])          # (N, 10)


# ----------------------------------------------------------------------------
# Pure-JAX reference (faithful to the PyTorch module, eval-mode BN).
# ----------------------------------------------------------------------------
def cnn_cifar_reference(params, x_nchw):
    def block(x, w, b, gamma, beta, mean, var):
        y = jax.lax.conv_general_dilated(
            x, w, window_strides=(1, 1), padding=[(2, 2), (2, 2)],
            dimension_numbers=("NCHW", "OIHW", "NCHW"))
        y = y + b[None, :, None, None]
        y = ((y - mean[None, :, None, None])
             / jnp.sqrt(var[None, :, None, None] + BN_EPS)
             * gamma[None, :, None, None] + beta[None, :, None, None])
        y = jnp.maximum(y, 0.0)
        n, c, hh, ww = y.shape
        return y.reshape(n, c, hh // 2, 2, ww // 2, 2).max(axis=(3, 5))

    h = block(x_nchw, *params["layer1"])
    h = block(h, *params["layer2"])
    n = h.shape[0]
    logits = h.reshape(n, -1) @ params["fc_w"].T + params["fc_b"]
    return jax.nn.log_softmax(logits, axis=1)


def init_params(key):
    ks = jax.random.split(key, 14)

    def conv_block(kslice, cin, cout):
        kw, kb, kg, kbt, km, kv = kslice
        return (
            0.1 * jax.random.normal(kw, (cout, cin, 5, 5), jnp.float32),
            0.1 * jax.random.normal(kb, (cout,), jnp.float32),
            1.0 + 0.1 * jax.random.normal(kg, (cout,), jnp.float32),
            0.1 * jax.random.normal(kbt, (cout,), jnp.float32),
            0.1 * jax.random.normal(km, (cout,), jnp.float32),
            jnp.abs(1.0 + 0.1 * jax.random.normal(kv, (cout,), jnp.float32)),
        )

    return {
        "layer1": conv_block(ks[0:6], 3, 16),
        "layer2": conv_block(ks[6:12], 16, 32),
        "fc_w": 0.05 * jax.random.normal(ks[12], (10, 8 * 8 * 32), jnp.float32),
        "fc_b": 0.05 * jax.random.normal(ks[13], (10,), jnp.float32),
    }


if __name__ == "__main__":
    key = jax.random.PRNGKey(0)
    pkey, xkey = jax.random.split(key)
    params = init_params(pkey)
    prep = prepare_params(params)

    # CIFAR-shaped input implied by the module (fc expects 8*8*32 after 2 pools)
    x = jax.random.normal(xkey, (2, 3, 32, 32), jnp.float32)

    fwd = jax.jit(cnn_cifar_forward)
    out = jax.block_until_ready(fwd(prep, x))

    ref = cnn_cifar_reference(params, x)
    assert out.shape == (2, 10)
    max_err = jnp.max(jnp.abs(out - ref))
    assert jnp.allclose(out, ref, atol=1e-4, rtol=1e-4), (
        f"mismatch vs reference: max abs err {max_err:.3e}")

    print("KERNEL_OK")
</pallas_src>

<mosaic_0001>
module attributes {stable_mosaic.version = 11 : i64} {
  func.func @conv_bn_relu_pool_kernel(%arg0: i32, %arg1: memref<4x256x75xf32, #tpu.memory_space<vmem>>, %arg2: memref<75x16xf32, #tpu.memory_space<vmem>>, %arg3: memref<1x16xf32, #tpu.memory_space<vmem>>, %arg4: memref<256x16xf32, #tpu.memory_space<vmem>>) attributes {dimension_semantics = [#tpu.dimension_semantics<parallel>], iteration_bounds = array<i64: 2>, scalar_prefetch = 0 : i64, scratch_operands = 0 : i64, tpu.core_type = #tpu.core_type<tc>, window_params = [{transform_indices = @transform_0, window_bounds = array<i64: 4, 256, 75>}, {pipeline_mode = #tpu.pipeline_mode<synchronous>, transform_indices = @transform_1, window_bounds = array<i64: 75, 16>}, {pipeline_mode = #tpu.pipeline_mode<synchronous>, transform_indices = @transform_2, window_bounds = array<i64: 1, 16>}, {transform_indices = @transform_3, window_bounds = array<i64: 256, 16>}]} {
    %c0 = arith.constant 0 : index
    %c0_0 = arith.constant 0 : index
    %0 = vector.load %arg2[%c0, %c0_0] : memref<75x16xf32, #tpu.memory_space<vmem>>, vector<75x16xf32>
    %c0_1 = arith.constant 0 : index
    %c0_2 = arith.constant 0 : index
    %c0_3 = arith.constant 0 : index
    %1 = vector.load %arg1[%c0_1, %c0_2, %c0_3] : memref<4x256x75xf32, #tpu.memory_space<vmem>>, vector<1x256x75xf32>
    %2 = vector.shape_cast %1 : vector<1x256x75xf32> to vector<256x75xf32>
    %cst = arith.constant dense<0.000000e+00> : vector<256x16xf32>
    %3 = tpu.matmul %2, %0, %cst {dimension_numbers = #tpu.dot_dimension_numbers<[1], [0], [0], [1], [0, 0, 1, 1], [], []>} : vector<256x75xf32>, vector<75x16xf32>, vector<256x16xf32> -> vector<256x16xf32>
    %c1 = arith.constant 1 : index
    %c0_4 = arith.constant 0 : index
    %c0_5 = arith.constant 0 : index
    %4 = vector.load %arg1[%c1, %c0_4, %c0_5] : memref<4x256x75xf32, #tpu.memory_space<vmem>>, vector<1x256x75xf32>
    %5 = vector.shape_cast %4 : vector<1x256x75xf32> to vector<256x75xf32>
    %cst_6 = arith.constant dense<0.000000e+00> : vector<256x16xf32>
    %6 = tpu.matmul %5, %0, %cst_6 {dimension_numbers = #tpu.dot_dimension_numbers<[1], [0], [0], [1], [0, 0, 1, 1], [], []>} : vector<256x75xf32>, vector<75x16xf32>, vector<256x16xf32> -> vector<256x16xf32>
    %7 = arith.maximumf %3, %6 : vector<256x16xf32>
    %c2 = arith.constant 2 : index
    %c0_7 = arith.constant 0 : index
    %c0_8 = arith.constant 0 : index
    %8 = vector.load %arg1[%c2, %c0_7, %c0_8] : memref<4x256x75xf32, #tpu.memory_space<vmem>>, vector<1x256x75xf32>
    %9 = vector.shape_cast %8 : vector<1x256x75xf32> to vector<256x75xf32>
    %cst_9 = arith.constant dense<0.000000e+00> : vector<256x16xf32>
    %10 = tpu.matmul %9, %0, %cst_9 {dimension_numbers = #tpu.dot_dimension_numbers<[1], [0], [0], [1], [0, 0, 1, 1], [], []>} : vector<256x75xf32>, vector<75x16xf32>, vector<256x16xf32> -> vector<256x16xf32>
    %11 = arith.maximumf %7, %10 : vector<256x16xf32>
    %c3 = arith.constant 3 : index
    %c0_10 = arith.constant 0 : index
    %c0_11 = arith.constant 0 : index
    %12 = vector.load %arg1[%c3, %c0_10, %c0_11] : memref<4x256x75xf32, #tpu.memory_space<vmem>>, vector<1x256x75xf32>
    %13 = vector.shape_cast %12 : vector<1x256x75xf32> to vector<256x75xf32>
    %cst_12 = arith.constant dense<0.000000e+00> : vector<256x16xf32>
    %14 = tpu.matmul %13, %0, %cst_12 {dimension_numbers = #tpu.dot_dimension_numbers<[1], [0], [0], [1], [0, 0, 1, 1], [], []>} : vector<256x75xf32>, vector<75x16xf32>, vector<256x16xf32> -> vector<256x16xf32>
    %15 = arith.maximumf %11, %14 : vector<256x16xf32>
    %c0_13 = arith.constant 0 : index
    %c0_14 = arith.constant 0 : index
    %16 = vector.load %arg3[%c0_13, %c0_14] : memref<1x16xf32, #tpu.memory_space<vmem>>, vector<1x16xf32>
    %17 = vector.broadcast %16 : vector<1x16xf32> to vector<256x16xf32>
    %18 = arith.addf %15, %17 : vector<256x16xf32>
    %cst_15 = arith.constant 0.000000e+00 : f32
    %19 = vector.broadcast %cst_15 : f32 to vector<256x16xf32>
    %20 = arith.maximumf %18, %19 : vector<256x16xf32>
    %c0_16 = arith.constant 0 : index
    %c0_17 = arith.constant 0 : index
    %21 = vector.load %arg4[%c0_16, %c0_17] : memref<256x16xf32, #tpu.memory_space<vmem>>, vector<256x16xf32>
    tpu.vector_store %arg4[%c0_16, %c0_17], %20 {strides = array<i32>} : memref<256x16xf32, #tpu.memory_space<vmem>>, vector<256x16xf32>,
    return
  }
  func.func @transform_0(%arg0: i32) -> (i32, i32, i32) {
    %c0_i32 = arith.constant 0 : i32
    %c0_i32_0 = arith.constant 0 : i32
    %c0_i32_1 = arith.constant 0 : i32
    return %c0_i32, %arg0, %c0_i32_0 : i32, i32, i32
  }
  func.func @transform_1(%arg0: i32) -> (i32, i32) {
    %c0_i32 = arith.constant 0 : i32
    %c0_i32_0 = arith.constant 0 : i32
    %c0_i32_1 = arith.constant 0 : i32
    return %c0_i32, %c0_i32_0 : i32, i32
  }
  func.func @transform_2(%arg0: i32) -> (i32, i32) {
    %c0_i32 = arith.constant 0 : i32
    %c0_i32_0 = arith.constant 0 : i32
    %c0_i32_1 = arith.constant 0 : i32
    return %c0_i32, %c0_i32_0 : i32, i32
  }
  func.func @transform_3(%arg0: i32) -> (i32, i32) {
    %c0_i32 = arith.constant 0 : i32
    %c0_i32_0 = arith.constant 0 : i32
    return %arg0, %c0_i32 : i32, i32
  }
}

module attributes {stable_mosaic.version = 11 : i64} {
  func.func @conv_bn_relu_pool_kernel(%arg0: i32, %arg1: memref<4x128x400xf32, #tpu.memory_space<vmem>>, %arg2: memref<400x32xf32, #tpu.memory_space<vmem>>, %arg3: memref<1x32xf32, #tpu.memory_space<vmem>>, %arg4: memref<128x32xf32, #tpu.memory_space<vmem>>) attributes {dimension_semantics = [#tpu.dimension_semantics<parallel>], iteration_bounds = array<i64: 1>, scalar_prefetch = 0 : i64, scratch_operands = 0 : i64, tpu.core_type = #tpu.core_type<tc>, window_params = [{transform_indices = @transform_0, window_bounds = array<i64: 4, 128, 400>}, {pipeline_mode = #tpu.pipeline_mode<synchronous>, transform_indices = @transform_1, window_bounds = array<i64: 400, 32>}, {pipeline_mode = #tpu.pipeline_mode<synchronous>, transform_indices = @transform_2, window_bounds = array<i64: 1, 32>}, {transform_indices = @transform_3, window_bounds = array<i64: 128, 32>}]} {
    %c0 = arith.constant 0 : index
    %c0_0 = arith.constant 0 : index
    %0 = vector.load %arg2[%c0, %c0_0] : memref<400x32xf32, #tpu.memory_space<vmem>>, vector<400x32xf32>
    %c0_1 = arith.constant 0 : index
    %c0_2 = arith.constant 0 : index
    %c0_3 = arith.constant 0 : index
    %1 = vector.load %arg1[%c0_1, %c0_2, %c0_3] : memref<4x128x400xf32, #tpu.memory_space<vmem>>, vector<1x128x400xf32>
    %2 = vector.shape_cast %1 : vector<1x128x400xf32> to vector<128x400xf32>
    %cst = arith.constant dense<0.000000e+00> : vector<128x32xf32>
    %3 = tpu.matmul %2, %0, %cst {dimension_numbers = #tpu.dot_dimension_numbers<[1], [0], [0], [1], [0, 0, 1, 1], [], []>} : vector<128x400xf32>, vector<400x32xf32>, vector<128x32xf32> -> vector<128x32xf32>
    %c1 = arith.constant 1 : index
    %c0_4 = arith.constant 0 : index
    %c0_5 = arith.constant 0 : index
    %4 = vector.load %arg1[%c1, %c0_4, %c0_5] : memref<4x128x400xf32, #tpu.memory_space<vmem>>, vector<1x128x400xf32>
    %5 = vector.shape_cast %4 : vector<1x128x400xf32> to vector<128x400xf32>
    %cst_6 = arith.constant dense<0.000000e+00> : vector<128x32xf32>
    %6 = tpu.matmul %5, %0, %cst_6 {dimension_numbers = #tpu.dot_dimension_numbers<[1], [0], [0], [1], [0, 0, 1, 1], [], []>} : vector<128x400xf32>, vector<400x32xf32>, vector<128x32xf32> -> vector<128x32xf32>
    %7 = arith.maximumf %3, %6 : vector<128x32xf32>
    %c2 = arith.constant 2 : index
    %c0_7 = arith.constant 0 : index
    %c0_8 = arith.constant 0 : index
    %8 = vector.load %arg1[%c2, %c0_7, %c0_8] : memref<4x128x400xf32, #tpu.memory_space<vmem>>, vector<1x128x400xf32>
    %9 = vector.shape_cast %8 : vector<1x128x400xf32> to vector<128x400xf32>
    %cst_9 = arith.constant dense<0.000000e+00> : vector<128x32xf32>
    %10 = tpu.matmul %9, %0, %cst_9 {dimension_numbers = #tpu.dot_dimension_numbers<[1], [0], [0], [1], [0, 0, 1, 1], [], []>} : vector<128x400xf32>, vector<400x32xf32>, vector<128x32xf32> -> vector<128x32xf32>
    %11 = arith.maximumf %7, %10 : vector<128x32xf32>
    %c3 = arith.constant 3 : index
    %c0_10 = arith.constant 0 : index
    %c0_11 = arith.constant 0 : index
    %12 = vector.load %arg1[%c3, %c0_10, %c0_11] : memref<4x128x400xf32, #tpu.memory_space<vmem>>, vector<1x128x400xf32>
    %13 = vector.shape_cast %12 : vector<1x128x400xf32> to vector<128x400xf32>
    %cst_12 = arith.constant dense<0.000000e+00> : vector<128x32xf32>
    %14 = tpu.matmul %13, %0, %cst_12 {dimension_numbers = #tpu.dot_dimension_numbers<[1], [0], [0], [1], [0, 0, 1, 1], [], []>} : vector<128x400xf32>, vector<400x32xf32>, vector<128x32xf32> -> vector<128x32xf32>
    %15 = arith.maximumf %11, %14 : vector<128x32xf32>
    %c0_13 = arith.constant 0 : index
    %c0_14 = arith.constant 0 : index
    %16 = vector.load %arg3[%c0_13, %c0_14] : memref<1x32xf32, #tpu.memory_space<vmem>>, vector<1x32xf32>
    %17 = vector.broadcast %16 : vector<1x32xf32> to vector<128x32xf32>
    %18 = arith.addf %15, %17 : vector<128x32xf32>
    %cst_15 = arith.constant 0.000000e+00 : f32
    %19 = vector.broadcast %cst_15 : f32 to vector<128x32xf32>
    %20 = arith.maximumf %18, %19 : vector<128x32xf32>
    %c0_16 = arith.constant 0 : index
    %c0_17 = arith.constant 0 : index
    %21 = vector.load %arg4[%c0_16, %c0_17] : memref<128x32xf32, #tpu.memory_space<vmem>>, vector<128x32xf32>
    tpu.vector_store %arg4[%c0_16, %c0_17], %20 {strides = array<i32>} : memref<128x32xf32, #tpu.memory_space<vmem>>, vector<128x32xf32>,
    return
  }
  func.func @transform_0(%arg0: i32) -> (i32, i32, i32) {
    %c0_i32 = arith.constant 0 : i32
    %c0_i32_0 = arith.constant 0 : i32
    %c0_i32_1 = arith.constant 0 : i32
    return %c0_i32, %arg0, %c0_i32_0 : i32, i32, i32
  }
  func.func @transform_1(%arg0: i32) -> (i32, i32) {
    %c0_i32 = arith.constant 0 : i32
    %c0_i32_0 = arith.constant 0 : i32
    %c0_i32_1 = arith.constant 0 : i32
    return %c0_i32, %c0_i32_0 : i32, i32
  }
  func.func @transform_2(%arg0: i32) -> (i32, i32) {
    %c0_i32 = arith.constant 0 : i32
    %c0_i32_0 = arith.constant 0 : i32
    %c0_i32_1 = arith.constant 0 : i32
    return %c0_i32, %c0_i32_0 : i32, i32
  }
  func.func @transform_3(%arg0: i32) -> (i32, i32) {
    %c0_i32 = arith.constant 0 : i32
    %c0_i32_0 = arith.constant 0 : i32
    return %arg0, %c0_i32 : i32, i32
  }
}

module attributes {stable_mosaic.version = 11 : i64} {
  func.func @fc_logsoftmax_kernel(%arg0: i32, %arg1: memref<2x2048xf32, #tpu.memory_space<vmem>>, %arg2: memref<2048x10xf32, #tpu.memory_space<vmem>>, %arg3: memref<1x10xf32, #tpu.memory_space<vmem>>, %arg4: memref<2x10xf32, #tpu.memory_space<vmem>>) attributes {dimension_semantics = [#tpu.dimension_semantics<arbitrary>], iteration_bounds = array<i64: 1>, scalar_prefetch = 0 : i64, scratch_operands = 0 : i64, tpu.core_type = #tpu.core_type<tc>, window_params = [{pipeline_mode = #tpu.pipeline_mode<synchronous>, transform_indices = @transform_0, window_bounds = array<i64: 2, 2048>}, {pipeline_mode = #tpu.pipeline_mode<synchronous>, transform_indices = @transform_1, window_bounds = array<i64: 2048, 10>}, {pipeline_mode = #tpu.pipeline_mode<synchronous>, transform_indices = @transform_2, window_bounds = array<i64: 1, 10>}, {pipeline_mode = #tpu.pipeline_mode<synchronous>, transform_indices = @transform_3, window_bounds = array<i64: 2, 10>}]} {
    %c0 = arith.constant 0 : index
    %c0_0 = arith.constant 0 : index
    %0 = vector.load %arg1[%c0, %c0_0] : memref<2x2048xf32, #tpu.memory_space<vmem>>, vector<2x2048xf32>
    %c0_1 = arith.constant 0 : index
    %c0_2 = arith.constant 0 : index
    %1 = vector.load %arg2[%c0_1, %c0_2] : memref<2048x10xf32, #tpu.memory_space<vmem>>, vector<2048x10xf32>
    %cst = arith.constant dense<0.000000e+00> : vector<2x10xf32>
    %2 = tpu.matmul %0, %1, %cst {dimension_numbers = #tpu.dot_dimension_numbers<[1], [0], [0], [1], [0, 0, 1, 1], [], []>} : vector<2x2048xf32>, vector<2048x10xf32>, vector<2x10xf32> -> vector<2x10xf32>
    %c0_3 = arith.constant 0 : index
    %c0_4 = arith.constant 0 : index
    %3 = vector.load %arg3[%c0_3, %c0_4] : memref<1x10xf32, #tpu.memory_space<vmem>>, vector<1x10xf32>
    %4 = vector.broadcast %3 : vector<1x10xf32> to vector<2x10xf32>
    %5 = arith.addf %2, %4 : vector<2x10xf32>
    %cst_5 = arith.constant dense<0xFF800000> : vector<2xf32>
    %6 = vector.multi_reduction <maximumf>, %5, %cst_5 [1] : vector<2x10xf32> to vector<2xf32>
    %7 = vector.shape_cast %6 : vector<2xf32> to vector<2x1xf32>
    %8 = vector.broadcast %7 : vector<2x1xf32> to vector<2x10xf32>
    %9 = arith.subf %5, %8 : vector<2x10xf32>
    %10 = math.exp %9 : vector<2x10xf32>
    %cst_6 = arith.constant dense<0.000000e+00> : vector<2xf32>
    %11 = vector.multi_reduction <add>, %10, %cst_6 [1] : vector<2x10xf32> to vector<2xf32>
    %12 = vector.shape_cast %11 : vector<2xf32> to vector<2x1xf32>
    %13 = math.log %12 : vector<2x1xf32>
    %14 = vector.broadcast %13 : vector<2x1xf32> to vector<2x10xf32>
    %15 = arith.subf %9, %14 : vector<2x10xf32>
    %c0_7 = arith.constant 0 : index
    %c0_8 = arith.constant 0 : index
    %16 = vector.load %arg4[%c0_7, %c0_8] : memref<2x10xf32, #tpu.memory_space<vmem>>, vector<2x10xf32>
    tpu.vector_store %arg4[%c0_7, %c0_8], %15 {strides = array<i32>} : memref<2x10xf32, #tpu.memory_space<vmem>>, vector<2x10xf32>,
    return
  }
  func.func @transform_0(%arg0: i32) -> (i32, i32) {
    %c0_i32 = arith.constant 0 : i32
    %c0_i32_0 = arith.constant 0 : i32
    %c0_i32_1 = arith.constant 0 : i32
    return %c0_i32, %c0_i32_0 : i32, i32
  }
  func.func @transform_1(%arg0: i32) -> (i32, i32) {
    %c0_i32 = arith.constant 0 : i32
    %c0_i32_0 = arith.constant 0 : i32
    %c0_i32_1 = arith.constant 0 : i32
    return %c0_i32, %c0_i32_0 : i32, i32
  }
  func.func @transform_2(%arg0: i32) -> (i32, i32) {
    %c0_i32 = arith.constant 0 : i32
    %c0_i32_0 = arith.constant 0 : i32
    %c0_i32_1 = arith.constant 0 : i32
    return %c0_i32, %c0_i32_0 : i32, i32
  }
  func.func @transform_3(%arg0: i32) -> (i32, i32) {
    %c0_i32 = arith.constant 0 : i32
    %c0_i32_0 = arith.constant 0 : i32
    %c0_i32_1 = arith.constant 0 : i32
    return %c0_i32, %c0_i32_0 : i32, i32
  }
}

</mosaic_0001>

<llo_original>
// kernel: cnn_cifar_forward.3
$region0: #{cnn_cifar_forward.3}
  #allocation0 [shape = 'u32[]', space=smem, size = 0x4, offset = 0x4, fixed_abs, tag = 'smem constant byte address 0x4 - core index']
  #allocation1 [shape = 'u32[72,128]{1,0:T(1,128)}', space=vmem, size = 0x9000, scoped, tag = 'internal scratch']
  %s0 = inlined_call_operand.vmem [shape: f32[4,512,75], index: 0, kind: input, shape index: {}]
  %s1 = inlined_call_operand.vmem [shape: f32[75,16], index: 1, kind: input, shape index: {}]
  %s2 = inlined_call_operand.vmem [shape: f32[1,16], index: 2, kind: input, shape index: {}]
  %s3 = inlined_call_operand.vmem [shape: f32[512,16], index: 3, kind: output, shape index: {}]
  %s4 = sld [smem:[#allocation0]]
  $region83: #{cnn_cifar_forward.3} parent=0
    _
  %s6 = ssub.s32 1, %s4
  %s7 = scalar_select 0, %s6, %s4
  $region1: #{cnn_cifar_forward.3} parent=0
    #allocation2 [shape = 'u8[1048576]{0}', space=vmem, size = 0x100000, scoped, tag = 'input window, operand 0']
    loop: start=0, step=1, limit=4
    $region2: #{cnn_cifar_forward.3} parent=1 // loop_pre_header
      _
    $region3: #{cnn_cifar_forward.3} parent=1 // loop_header
      %s9 = sphi 0, %s13
      %p10 = scmp.ge.s32.totalorder %s9, 4
      %s19 = sphi 0, %s21
      %s22 = sphi 0, %s19
      %s23 = sphi 0, %s22
      %s39 = sphi 0, %s23
      %s43 = sphi 0, %s43
      %s45 = sphi 0, %s43
      %s46 = sphi 0, %s45
      %s60 = sphi 0, %s46
      %s64 = sphi 0, %s64
      %s66 = sphi 0, %s64
      %s67 = sphi 0, %s66
      %s81 = sphi 0, %s67
      %s87 = sphi 0, %s89
      %s90 = sphi 0, %s87
      %s91 = sphi 0, %s90
      %s107 = sphi 0, %s91
    $region4: #{cnn_cifar_forward.3} parent=1 // loop_header_branch
      %12 = sbr.rel (%p10) target = $region8
    $region5: #{cnn_cifar_forward.3} parent=1 // loop_body
      %s14 = ssub.s32 %s9, 1
      %s15 = ssub.s32 %s9, 2
      %s16 = sadd.s32 %s9, 1
      %s17 = ssub.s32 %s9, %s16
      %p18 = scmp.eq.s32.totalorder %s17, 0
      %s20 = sadd.s32 %s19, 1
      %s21 = scalar_select %p18, %s19, %s20
      %p24 = pneg %p18
      %p25 = scmp.eq.s32.totalorder %s9, 1
      %p26 = por %p24, %p25
      %p27 = scmp.ne.s32.totalorder %s19, %s22
      %p28 = scmp.eq.s32.totalorder %s9, 0
      %p29 = por %p27, %p28
      %p30 = scmp.ne.s32.totalorder %s19, %s22
      %p31 = scmp.eq.s32.totalorder %s14, 1
      %p32 = por %p30, %p31
      %p33 = scmp.ne.s32.totalorder %s22, %s23
      %p34 = scmp.eq.s32.totalorder %s14, 0
      %p35 = por %p33, %p34
      %p36 = scmp.ne.s32.totalorder %s22, %s23
      %p37 = scmp.eq.s32.totalorder %s15, 1
      %p38 = por %p36, %p37
      %p40 = scmp.ne.s32.totalorder %s23, %s39
      %p41 = scmp.eq.s32.totalorder %s15, 0
      %p42 = por %p40, %p41
      %s44 = sadd.s32 %s43, 1
      %p47 = scmp.eq.s32.totalorder %s9, 1
      %p48 = scmp.ne.s32.totalorder %s43, %s45
      %p49 = scmp.eq.s32.totalorder %s9, 0
      %p50 = por %p48, %p49
      %p51 = scmp.ne.s32.totalorder %s43, %s45
      %p52 = scmp.eq.s32.totalorder %s14, 1
      %p53 = por %p51, %p52
      %p54 = scmp.ne.s32.totalorder %s45, %s46
      %p55 = scmp.eq.s32.totalorder %s14, 0
      %p56 = por %p54, %p55
      %p57 = scmp.ne.s32.totalorder %s45, %s46
      %p58 = scmp.eq.s32.totalorder %s15, 1
      %p59 = por %p57, %p58
      %p61 = scmp.ne.s32.totalorder %s46, %s60
      %p62 = scmp.eq.s32.totalorder %s15, 0
      %p63 = por %p61, %p62
      %s65 = sadd.s32 %s64, 1
      %p68 = scmp.eq.s32.totalorder %s9, 1
      %p69 = scmp.ne.s32.totalorder %s64, %s66
      %p70 = scmp.eq.s32.totalorder %s9, 0
      %p71 = por %p69, %p70
      %p72 = scmp.ne.s32.totalorder %s64, %s66
      %p73 = scmp.eq.s32.totalorder %s14, 1
      %p74 = por %p72, %p73
      %p75 = scmp.ne.s32.totalorder %s66, %s67
      %p76 = scmp.eq.s32.totalorder %s14, 0
      %p77 = por %p75, %p76
      %p78 = scmp.ne.s32.totalorder %s66, %s67
      %p79 = scmp.eq.s32.totalorder %s15, 1
      %p80 = por %p78, %p79
      %p82 = scmp.ne.s32.totalorder %s67, %s81
      %p83 = scmp.eq.s32.totalorder %s15, 0
      %p84 = por %p82, %p83
      %s85 = ssub.s32 %s9, %s16
      %p86 = scmp.eq.s32.totalorder %s85, 0
      %s88 = sadd.s32 %s87, 1
      %s89 = scalar_select %p86, %s87, %s88
      %p92 = pneg %p86
      %p93 = scmp.eq.s32.totalorder %s9, 1
      %p94 = por %p92, %p93
      %p95 = scmp.ne.s32.totalorder %s87, %s90
      %p96 = scmp.eq.s32.totalorder %s9, 0
      %p97 = por %p95, %p96
      %p98 = scmp.ne.s32.totalorder %s87, %s90
      %p99 = scmp.eq.s32.totalorder %s14, 1
      %p100 = por %p98, %p99
      %p101 = scmp.ne.s32.totalorder %s90, %s91
      %p102 = scmp.eq.s32.totalorder %s14, 0
      %p103 = por %p101, %p102
      %p104 = scmp.ne.s32.totalorder %s90, %s91
      %p105 = scmp.eq.s32.totalorder %s15, 1
      %p106 = por %p104, %p105
      %p108 = scmp.ne.s32.totalorder %s91, %s107
      %p109 = scmp.eq.s32.totalorder %s15, 0
      %p110 = por %p108, %p109
      %p111 = scmp.le.s32.totalorder 1, %s9
      %p112 = scmp.lt.s32.totalorder %s9, 3
      %p113 = pnand %p111, %p112
      %p114 = pneg %p113
      // Predicated region
      $region9: #{cnn_cifar_forward.3} parent=5 // pred_check
        _
      $region10: #{cnn_cifar_forward.3} parent=5 // pred_check_branch
        %116 = sbr.rel (%p113) target = $region12
      $region11: #{cnn_cifar_forward.3} parent=5 // pred_region
        %s117 = ssub.s32 %s9, 1
        // Predicated region
        $region13: #{cnn_cifar_forward.3} parent=11 // pred_check
          %p118 = pneg %p56
        $region14: #{cnn_cifar_forward.3} parent=11 // pred_check_branch
          %120 = sbr.rel (%p118) target = $region16
        $region15: #{cnn_cifar_forward.3} parent=11 // pred_region
          _
        $region16: #{cnn_cifar_forward.3} parent=11 // pred_fallthru
          _
        // Predicated region
        $region17: #{cnn_cifar_forward.3} parent=11 // pred_check
          %p121 = pneg %p77
        $region18: #{cnn_cifar_forward.3} parent=11 // pred_check_branch
          %123 = sbr.rel (%p121) target = $region20
        $region19: #{cnn_cifar_forward.3} parent=11 // pred_region
          _
        $region20: #{cnn_cifar_forward.3} parent=11 // pred_fallthru
          _
      $region12: #{cnn_cifar_forward.3} parent=5 // pred_fallthru
        _
      %p124 = scmp.lt.s32.totalorder %s9, 2
      // Predicated region
      $region21: #{cnn_cifar_forward.3} parent=5 // pred_check
        %p125 = pneg %p124
      $region22: #{cnn_cifar_forward.3} parent=5 // pred_check_branch
        %127 = sbr.rel (%p125) target = $region24
      $region23: #{cnn_cifar_forward.3} parent=5 // pred_region
        // Predicated region
        $region25: #{cnn_cifar_forward.3} parent=23 // pred_check
          %p128 = pneg %p29
        $region26: #{cnn_cifar_forward.3} parent=23 // pred_check_branch
          %130 = sbr.rel (%p128) target = $region28
        $region27: #{cnn_cifar_forward.3} parent=23 // pred_region
          %s131 = sand.u32 %s19, 1
          %s132 = sand.u32 %s19, 1
          %s133 = smul.addr %s132, 1024
          %s134 = scalar_lea.vmem [#allocation2], %s133
          %s135 = smul.u32 32, %s9
          %s136 = smul.addr %s135, 8
          %s137 = scalar_lea.vmem %s0, %s136
          // Predicated region
          $region29: #{cnn_cifar_forward.3} parent=27 // pred_check
            _
          $region30: #{cnn_cifar_forward.3} parent=27 // pred_check_branch
            %139 = sbr.rel (0) target = $region32
          $region31: #{cnn_cifar_forward.3} parent=27 // pred_region
            // Predicated region
            $region33: #{cnn_cifar_forward.3} parent=31 // pred_check
              _
            $region34: #{cnn_cifar_forward.3} parent=31 // pred_check_branch
              %141 = sbr.rel (0) target = $region36
            $region35: #{cnn_cifar_forward.3} parent=31 // pred_region
              // Predicated region
              $region48: #{cnn_cifar_forward.3} parent=35 // pred_check
                _
              $region49: #{cnn_cifar_forward.3} parent=35 // pred_check_branch
                %411 = sbr.rel (0) target = $region51
              $region50: #{cnn_cifar_forward.3} parent=35 // pred_region
                loop: start=0, step=1, limit=1
                $region52: #{cnn_cifar_forward.3} parent=50 // loop_pre_header
                  _
                $region53: #{cnn_cifar_forward.3} parent=50 // loop_header
                  %s413 = sphi 0, %s417
                  %p414 = scmp.ge.s32.totalorder %s413, 1
                  %s418 = sphi %s137, %s137
                  %s419 = sphi %s134, %s134
                $region54: #{cnn_cifar_forward.3} parent=50 // loop_header_branch
                  %416 = sbr.rel (%p414) target = $region58
                $region55: #{cnn_cifar_forward.3} parent=50 // loop_body
                  %v420 = vld [vmem:[%s418] sm:$0xff]
                  %421 = vst [vmem:[%s419] sm:$0xff] %v420
                  %v422 = vld [vmem:[%s418 + $0x8] sm:$0xff]
                  %423 = vst [vmem:[%s419 + $0x8] sm:$0xff] %v422
                  %v424 = vld [vmem:[%s418 + $0x10] sm:$0xff]
                  %425 = vst [vmem:[%s419 + $0x10] sm:$0xff] %v424
                  %v426 = vld [vmem:[%s418 + $0x18] sm:$0xff]
                  %427 = vst [vmem:[%s419 + $0x18] sm:$0xff] %v426
                  %v428 = vld [vmem:[%s418 + $0x20] sm:$0xff]
                  %429 = vst [vmem:[%s419 + $0x20] sm:$0xff] %v428
                  %v430 = vld [vmem:[%s418 + $0x28] sm:$0xff]
                  %431 = vst [vmem:[%s419 + $0x28] sm:$0xff] %v430
                  %v432 = vld [vmem:[%s418 + $0x30] sm:$0xff]
                  %433 = vst [vmem:[%s419 + $0x30] sm:$0xff] %v432
                  %v434 = vld [vmem:[%s418 + $0x38] sm:$0xff]
                  %435 = vst [vmem:[%s419 + $0x38] sm:$0xff] %v434
                  %v436 = vld [vmem:[%s418 + $0x40] sm:$0xff]
                  %437 = vst [vmem:[%s419 + $0x40] sm:$0xff] %v436
                  %v438 = vld [vmem:[%s418 + $0x48] sm:$0xff]
                  %439 = vst [vmem:[%s419 + $0x48] sm:$0xff] %v438
                  %v440 = vld [vmem:[%s418 + $0x50] sm:$0xff]
                  %441 = vst [vmem:[%s419 + $0x50] sm:$0xff] %v440
                  %v442 = vld [vmem:[%s418 + $0x58] sm:$0xff]
                  %443 = vst [vmem:[%s419 + $0x58] sm:$0xff] %v442
                  %v444 = vld [vmem:[%s418 + $0x60] sm:$0xff]
                  %445 = vst [vmem:[%s419 + $0x60] sm:$0xff] %v444
                  %v446 = vld [vmem:[%s418 + $0x68] sm:$0xff]
                  %447 = vst [vmem:[%s419 + $0x68] sm:$0xff] %v446
                  %v448 = vld [vmem:[%s418 + $0x70] sm:$0xff]
                  %449 = vst [vmem:[%s419 + $0x70] sm:$0xff] %v448
                  %v450 = vld [vmem:[%s418 + $0x78] sm:$0xff]
                  %451 = vst [vmem:[%s419 + $0x78] sm:$0xff] %v450
                  %v452 = vld [vmem:[%s418 + $0x80] sm:$0xff]
                  %453 = vst [vmem:[%s419 + $0x80] sm:$0xff] %v452
                  %v454 = vld [vmem:[%s418 + $0x88] sm:$0xff]
                  %455 = vst [vmem:[%s419 + $0x88] sm:$0xff] %v454
                  %v456 = vld [vmem:[%s418 + $0x90] sm:$0xff]
                  %457 = vst [vmem:[%s419 + $0x90] sm:$0xff] %v456
                  %v458 = vld [vmem:[%s418 + $0x98] sm:$0xff]
                  %459 = vst [vmem:[%s419 + $0x98] sm:$0xff] %v458
                  %v460 = vld [vmem:[%s418 + $0xa0] sm:$0xff]
                  %461 = vst [vmem:[%s419 + $0xa0] sm:$0xff] %v460
                  %v462 = vld [vmem:[%s418 + $0xa8] sm:$0xff]
                  %463 = vst [vmem:[%s419 + $0xa8] sm:$0xff] %v462
                  %v464 = vld [vmem:[%s418 + $0xb0] sm:$0xff]
                  %465 = vst [vmem:[%s419 + $0xb0] sm:$0xff] %v464
                  %v466 = vld [vmem:[%s418 + $0xb8] sm:$0xff]
                  %467 = vst [vmem:[%s419 + $0xb8] sm:$0xff] %v466
                  %v468 = vld [vmem:[%s418 + $0xc0] sm:$0xff]
                  %469 = vst [vmem:[%s419 + $0xc0] sm:$0xff] %v468
                  %v470 = vld [vmem:[%s418 + $0xc8] sm:$0xff]
                  %471 = vst [vmem:[%s419 + $0xc8] sm:$0xff] %v470
                  %v472 = vld [vmem:[%s418 + $0xd0] sm:$0xff]
                  %473 = vst [vmem:[%s419 + $0xd0] sm:$0xff] %v472
                  %v474 = vld [vmem:[%s418 + $0xd8] sm:$0xff]
                  %475 = vst [vmem:[%s419 + $0xd8] sm:$0xff] %v474
                  %v476 = vld [vmem:[%s418 + $0xe0] sm:$0xff]
                  %477 = vst [vmem:[%s419 + $0xe0] sm:$0xff] %v476
                  %v478 = vld [vmem:[%s418 + $0xe8] sm:$0xff]
                  %479 = vst [vmem:[%s419 + $0xe8] sm:$0xff] %v478
                  %v480 = vld [vmem:[%s418 + $0xf0] sm:$0xff]
                  %481 = vst [vmem:[%s419 + $0xf0] sm:$0xff] %v480
                  %v482 = vld [vmem:[%s418 + $0xf8] sm:$0xff]
                  %483 = vst [vmem:[%s419 + $0xf8] sm:$0xff] %v482
                  %v484 = vld [vmem:[%s418 + $0x200] sm:$0xff]
                  %485 = vst [vmem:[%s419 + $0x100] sm:$0xff] %v484
                  %v486 = vld [vmem:[%s418 + $0x208] sm:$0xff]
                  %487 = vst [vmem:[%s419 + $0x108] sm:$0xff] %v486
                  %v488 = vld [vmem:[%s418 + $0x210] sm:$0xff]
                  %489 = vst [vmem:[%s419 + $0x110] sm:$0xff] %v488
                  %v490 = vld [vmem:[%s418 + $0x218] sm:$0xff]
                  %491 = vst [vmem:[%s419 + $0x118] sm:$0xff] %v490
                  %v492 = vld [vmem:[%s418 + $0x220] sm:$0xff]
                  %493 = vst [vmem:[%s419 + $0x120] sm:$0xff] %v492
                  %v494 = vld [vmem:[%s418 + $0x228] sm:$0xff]
                  %495 = vst [vmem:[%s419 + $0x128] sm:$0xff] %v494
                  %v496 = vld [vmem:[%s418 + $0x230] sm:$0xff]
                  %497 = vst [vmem:[%s419 + $0x130] sm:$0xff] %v496
                  %v498 = vld [vmem:[%s418 + $0x238] sm:$0xff]
                  %499 = vst [vmem:[%s419 + $0x138] sm:$0xff] %v498
                  %v500 = vld [vmem:[%s418 + $0x240] sm:$0xff]
                  %501 = vst [vmem:[%s419 + $0x140] sm:$0xff] %v500
                  %v502 = vld [vmem:[%s418 + $0x248] sm:$0xff]
                  %503 = vst [vmem:[%s419 + $0x148] sm:$0xff] %v502
                  %v504 = vld [vmem:[%s418 + $0x250] sm:$0xff]
                  %505 = vst [vmem:[%s419 + $0x150] sm:$0xff] %v504
                  %v506 = vld [vmem:[%s418 + $0x258] sm:$0xff]
                  %507 = vst [vmem:[%s419 + $0x158] sm:$0xff] %v506
                  %v508 = vld [vmem:[%s418 + $0x260] sm:$0xff]
                  %509 = vst [vmem:[%s419 + $0x160] sm:$0xff] %v508
                  %v510 = vld [vmem:[%s418 + $0x268] sm:$0xff]
                  %511 = vst [vmem:[%s419 + $0x168] sm:$0xff] %v510
                  %v512 = vld [vmem:[%s418 + $0x270] sm:$0xff]
                  %513 = vst [vmem:[%s419 + $0x170] sm:$0xff] %v512
                  %v514 = vld [vmem:[%s418 + $0x278] sm:$0xff]
                  %515 = vst [vmem:[%s419 + $0x178] sm:$0xff] %v514
                  %v516 = vld [vmem:[%s418 + $0x280] sm:$0xff]
                  %517 = vst [vmem:[%s419 + $0x180] sm:$0xff] %v516
                  %v518 = vld [vmem:[%s418 + $0x288] sm:$0xff]
                  %519 = vst [vmem:[%s419 + $0x188] sm:$0xff] %v518
                  %v520 = vld [vmem:[%s418 + $0x290] sm:$0xff]
                  %521 = vst [vmem:[%s419 + $0x190] sm:$0xff] %v520
                  %v522 = vld [vmem:[%s418 + $0x298] sm:$0xff]
                  %523 = vst [vmem:[%s419 + $0x198] sm:$0xff] %v522
                  %v524 = vld [vmem:[%s418 + $0x2a0] sm:$0xff]
                  %525 = vst [vmem:[%s419 + $0x1a0] sm:$0xff] %v524
                  %v526 = vld [vmem:[%s418 + $0x2a8] sm:$0xff]
                  %527 = vst [vmem:[%s419 + $0x1a8] sm:$0xff] %v526
                  %v528 = vld [vmem:[%s418 + $0x2b0] sm:$0xff]
                  %529 = vst [vmem:[%s419 + $0x1b0] sm:$0xff] %v528
                  %v530 = vld [vmem:[%s418 + $0x2b8] sm:$0xff]
                  %531 = vst [vmem:[%s419 + $0x1b8] sm:$0xff] %v530
                  %v532 = vld [vmem:[%s418 + $0x2c0] sm:$0xff]
                  %533 = vst [vmem:[%s419 + $0x1c0] sm:$0xff] %v532
                  %v534 = vld [vmem:[%s418 + $0x2c8] sm:$0xff]
                  %535 = vst [vmem:[%s419 + $0x1c8] sm:$0xff] %v534
                  %v536 = vld [vmem:[%s418 + $0x2d0] sm:$0xff]
                  %537 = vst [vmem:[%s419 + $0x1d0] sm:$0xff] %v536
                  %v538 = vld [vmem:[%s418 + $0x2d8] sm:$0xff]
                  %539 = vst [vmem:[%s419 + $0x1d8] sm:$0xff] %v538
                  %v540 = vld [vmem:[%s418 + $0x2e0] sm:$0xff]
                  %541 = vst [vmem:[%s419 + $0x1e0] sm:$0xff] %v540
                  %v542 = vld [vmem:[%s418 + $0x2e8] sm:$0xff]
                  %543 = vst [vmem:[%s419 + $0x1e8] sm:$0xff] %v542
                  %v544 = vld [vmem:[%s418 + $0x2f0] sm:$0xff]
                  %545 = vst [vmem:[%s419 + $0x1f0] sm:$0xff] %v544
                  %v546 = vld [vmem:[%s418 + $0x2f8] sm:$0xff]
                  %547 = vst [vmem:[%s419 + $0x1f8] sm:$0xff] %v546
                  %v548 = vld [vmem:[%s418 + $0x400] sm:$0xff]
                  %549 = vst [vmem:[%s419 + $0x200] sm:$0xff] %v548
                  %v550 = vld [vmem:[%s418 + $0x408] sm:$0xff]
                  %551 = vst [vmem:[%s419 + $0x208] sm:$0xff] %v550
                  %v552 = vld [vmem:[%s418 + $0x410] sm:$0xff]
                  %553 = vst [vmem:[%s419 + $0x210] sm:$0xff] %v552
                  %v554 = vld [vmem:[%s418 + $0x418] sm:$0xff]
                  %555 = vst [vmem:[%s419 + $0x218] sm:$0xff] %v554
                  %v556 = vld [vmem:[%s418 + $0x420] sm:$0xff]
                  %557 = vst [vmem:[%s419 + $0x220] sm:$0xff] %v556
                  %v558 = vld [vmem:[%s418 + $0x428] sm:$0xff]
                  %559 = vst [vmem:[%s419 + $0x228] sm:$0xff] %v558
                  %v560 = vld [vmem:[%s418 + $0x430] sm:$0xff]
                  %561 = vst [vmem:[%s419 + $0x230] sm:$0xff] %v560
                  %v562 = vld [vmem:[%s418 + $0x438] sm:$0xff]
                  %563 = vst [vmem:[%s419 + $0x238] sm:$0xff] %v562
                  %v564 = vld [vmem:[%s418 + $0x440] sm:$0xff]
                  %565 = vst [vmem:[%s419 + $0x240] sm:$0xff] %v564
                  %v566 = vld [vmem:[%s418 + $0x448] sm:$0xff]
                  %567 = vst [vmem:[%s419 + $0x248] sm:$0xff] %v566
                  %v568 = vld [vmem:[%s418 + $0x450] sm:$0xff]
                  %569 = vst [vmem:[%s419 + $0x250] sm:$0xff] %v568
                  %v570 = vld [vmem:[%s418 + $0x458] sm:$0xff]
                  %571 = vst [vmem:[%s419 + $0x258] sm:$0xff] %v570
                  %v572 = vld [vmem:[%s418 + $0x460] sm:$0xff]
                  %573 = vst [vmem:[%s419 + $0x260] sm:$0xff] %v572
                  %v574 = vld [vmem:[%s418 + $0x468] sm:$0xff]
                  %575 = vst [vmem:[%s419 + $0x268] sm:$0xff] %v574
                  %v576 = vld [vmem:[%s418 + $0x470] sm:$0xff]
                  %577 = vst [vmem:[%s419 + $0x270] sm:$0xff] %v576
                  %v578 = vld [vmem:[%s418 + $0x478] sm:$0xff]
                  %579 = vst [vmem:[%s419 + $0x278] sm:$0xff] %v578
                  %v580 = vld [vmem:[%s418 + $0x480] sm:$0xff]
                  %581 = vst [vmem:[%s419 + $0x280] sm:$0xff] %v580
                  %v582 = vld [vmem:[%s418 + $0x488] sm:$0xff]
                  %583 = vst [vmem:[%s419 + $0x288] sm:$0xff] %v582
                  %v584 = vld [vmem:[%s418 + $0x490] sm:$0xff]
                  %585 = vst [vmem:[%s419 + $0x290] sm:$0xff] %v584
                  %v586 = vld [vmem:[%s418 + $0x498] sm:$0xff]
                  %587 = vst [vmem:[%s419 + $0x298] sm:$0xff] %v586
                  %v588 = vld [vmem:[%s418 + $0x4a0] sm:$0xff]
                  %589 = vst [vmem:[%s419 + $0x2a0] sm:$0xff] %v588
                  %v590 = vld [vmem:[%s418 + $0x4a8] sm:$0xff]
                  %591 = vst [vmem:[%s419 + $0x2a8] sm:$0xff] %v590
                  %v592 = vld [vmem:[%s418 + $0x4b0] sm:$0xff]
                  %593 = vst [vmem:[%s419 + $0x2b0] sm:$0xff] %v592
                  %v594 = vld [vmem:[%s418 + $0x4b8] sm:$0xff]
                  %595 = vst [vmem:[%s419 + $0x2b8] sm:$0xff] %v594
                  %v596 = vld [vmem:[%s418 + $0x4c0] sm:$0xff]
                  %597 = vst [vmem:[%s419 + $0x2c0] sm:$0xff] %v596
                  %v598 = vld [vmem:[%s418 + $0x4c8] sm:$0xff]
                  %599 = vst [vmem:[%s419 + $0x2c8] sm:$0xff] %v598
                  %v600 = vld [vmem:[%s418 + $0x4d0] sm:$0xff]
                  %601 = vst [vmem:[%s419 + $0x2d0] sm:$0xff] %v600
                  %v602 = vld [vmem:[%s418 + $0x4d8] sm:$0xff]
                  %603 = vst [vmem:[%s419 + $0x2d8] sm:$0xff] %v602
                  %v604 = vld [vmem:[%s418 + $0x4e0] sm:$0xff]
                  %605 = vst [vmem:[%s419 + $0x2e0] sm:$0xff] %v604
                  %v606 = vld [vmem:[%s418 + $0x4e8] sm:$0xff]
                  %607 = vst [vmem:[%s419 + $0x2e8] sm:$0xff] %v606
                  %v608 = vld [vmem:[%s418 + $0x4f0] sm:$0xff]
                  %609 = vst [vmem:[%s419 + $0x2f0] sm:$0xff] %v608
                  %v610 = vld [vmem:[%s418 + $0x4f8] sm:$0xff]
                  %611 = vst [vmem:[%s419 + $0x2f8] sm:$0xff] %v610
                  %v612 = vld [vmem:[%s418 + $0x600] sm:$0xff]
                  %613 = vst [vmem:[%s419 + $0x300] sm:$0xff] %v612
                  %v614 = vld [vmem:[%s418 + $0x608] sm:$0xff]
                  %615 = vst [vmem:[%s419 + $0x308] sm:$0xff] %v614
                  %v616 = vld [vmem:[%s418 + $0x610] sm:$0xff]
                  %617 = vst [vmem:[%s419 + $0x310] sm:$0xff] %v616
                  %v618 = vld [vmem:[%s418 + $0x618] sm:$0xff]
                  %619 = vst [vmem:[%s419 + $0x318] sm:$0xff] %v618
                  %v620 = vld [vmem:[%s418 + $0x620] sm:$0xff]
                  %621 = vst [vmem:[%s419 + $0x320] sm:$0xff] %v620
                  %v622 = vld [vmem:[%s418 + $0x628] sm:$0xff]
                  %623 = vst [vmem:[%s419 + $0x328] sm:$0xff] %v622
                  %v624 = vld [vmem:[%s418 + $0x630] sm:$0xff]
                  %625 = vst [vmem:[%s419 + $0x330] sm:$0xff] %v624
                  %v626 = vld [vmem:[%s418 + $0x638] sm:$0xff]
                  %627 = vst [vmem:[%s419 + $0x338] sm:$0xff] %v626
                  %v628 = vld [vmem:[%s418 + $0x640] sm:$0xff]
                  %629 = vst [vmem:[%s419 + $0x340] sm:$0xff] %v628
                  %v630 = vld [vmem:[%s418 + $0x648] sm:$0xff]
                  %631 = vst [vmem:[%s419 + $0x348] sm:$0xff] %v630
                  %v632 = vld [vmem:[%s418 + $0x650] sm:$0xff]
                  %633 = vst [vmem:[%s419 + $0x350] sm:$0xff] %v632
                  %v634 = vld [vmem:[%s418 + $0x658] sm:$0xff]
                  %635 = vst [vmem:[%s419 + $0x358] sm:$0xff] %v634
                  %v636 = vld [vmem:[%s418 + $0x660] sm:$0xff]
                  %637 = vst [vmem:[%s419 + $0x360] sm:$0xff] %v636
                  %v638 = vld [vmem:[%s418 + $0x668] sm:$0xff]
                  %639 = vst [vmem:[%s419 + $0x368] sm:$0xff] %v638
                  %v640 = vld [vmem:[%s418 + $0x670] sm:$0xff]
                  %641 = vst [vmem:[%s419 + $0x370] sm:$0xff] %v640
                  %v642 = vld [vmem:[%s418 + $0x678] sm:$0xff]
                  %643 = vst [vmem:[%s419 + $0x378] sm:$0xff] %v642
                  %v644 = vld [vmem:[%s418 + $0x680] sm:$0xff]
                  %645 = vst [vmem:[%s419 + $0x380] sm:$0xff] %v644
                  %v646 = vld [vmem:[%s418 + $0x688] sm:$0xff]
                  %647 = vst [vmem:[%s419 + $0x388] sm:$0xff] %v646
                  %v648 = vld [vmem:[%s418 + $0x690] sm:$0xff]
                  %649 = vst [vmem:[%s419 + $0x390] sm:$0xff] %v648
                  %v650 = vld [vmem:[%s418 + $0x698] sm:$0xff]
                  %651 = vst [vmem:[%s419 + $0x398] sm:$0xff] %v650
                  %v652 = vld [vmem:[%s418 + $0x6a0] sm:$0xff]
                  %653 = vst [vmem:[%s419 + $0x3a0] sm:$0xff] %v652
                  %v654 = vld [vmem:[%s418 + $0x6a8] sm:$0xff]
                  %655 = vst [vmem:[%s419 + $0x3a8] sm:$0xff] %v654
                  %v656 = vld [vmem:[%s418 + $0x6b0] sm:$0xff]
                  %657 = vst [vmem:[%s419 + $0x3b0] sm:$0xff] %v656
                  %v658 = vld [vmem:[%s418 + $0x6b8] sm:$0xff]
                  %659 = vst [vmem:[%s419 + $0x3b8] sm:$0xff] %v658
                  %v660 = vld [vmem:[%s418 + $0x6c0] sm:$0xff]
                  %661 = vst [vmem:[%s419 + $0x3c0] sm:$0xff] %v660
                  %v662 = vld [vmem:[%s418 + $0x6c8] sm:$0xff]
                  %663 = vst [vmem:[%s419 + $0x3c8] sm:$0xff] %v662
                  %v664 = vld [vmem:[%s418 + $0x6d0] sm:$0xff]
                  %665 = vst [vmem:[%s419 + $0x3d0] sm:$0xff] %v664
                  %v666 = vld [vmem:[%s418 + $0x6d8] sm:$0xff]
                  %667 = vst [vmem:[%s419 + $0x3d8] sm:$0xff] %v666
                  %v668 = vld [vmem:[%s418 + $0x6e0] sm:$0xff]
                  %669 = vst [vmem:[%s419 + $0x3e0] sm:$0xff] %v668
                  %v670 = vld [vmem:[%s418 + $0x6e8] sm:$0xff]
                  %671 = vst [vmem:[%s419 + $0x3e8] sm:$0xff] %v670
                  %v672 = vld [vmem:[%s418 + $0x6f0] sm:$0xff]
                  %673 = vst [vmem:[%s419 + $0x3f0] sm:$0xff] %v672
                  %v674 = vld [vmem:[%s418 + $0x6f8] sm:$0xff]
                  %675 = vst [vmem:[%s419 + $0x3f8] sm:$0xff] %v674
                $region56: #{cnn_cifar_forward.3} parent=50 // loop_footer
                  %s417 = sadd.s32 1, %s413
                $region57: #{cnn_cifar_forward.3} parent=50 // loop_footer_branch
                  %412 = sbr.rel target = $region53
                $region58: #{cnn_cifar_forward.3} parent=50 // loop_exit
                  _
              $region51: #{cnn_cifar_forward.3} parent=35 // pred_fallthru
                _
              // Predicated region
              $region59: #{cnn_cifar_forward.3} parent=35 // pred_check
                _
              $region60: #{cnn_cifar_forward.3} parent=35 // pred_check_branch
                %677 = sbr.rel target = $region62
              $region61: #{cnn_cifar_forward.3} parent=35 // pred_region
                _
              $region62: #{cnn_cifar_forward.3} parent=35 // pred_fallthru
                _
            $region36: #{cnn_cifar_forward.3} parent=31 // pred_fallthru
              _
            // Predicated region
            $region37: #{cnn_cifar_forward.3} parent=31 // pred_check
              _
            $region38: #{cnn_cifar_forward.3} parent=31 // pred_check_branch
              %143 = sbr.rel target = $region40
            $region39: #{cnn_cifar_forward.3} parent=31 // pred_region
              %s145 = ssub.s32 256, 1
              loop: start=0, step=1, limit=1
              $region41: #{cnn_cifar_forward.3} parent=39 // loop_pre_header
                _
              $region42: #{cnn_cifar_forward.3} parent=39 // loop_header
                %s147 = sphi 0, %s151
                %p148 = scmp.ge.s32.totalorder %s147, 1
                %s152 = sphi %s137, %s137
                %s153 = sphi %s134, %s134
              $region43: #{cnn_cifar_forward.3} parent=39 // loop_header_branch
                %150 = sbr.rel (%p148) target = $region47
              $region44: #{cnn_cifar_forward.3} parent=39 // loop_body
                %v154 = vld [vmem:[%s152] sm:%s145]
                %155 = vst [vmem:[%s153] sm:%s145] %v154
                %v156 = vld [vmem:[%s152 + $0x8] sm:%s145]
                %157 = vst [vmem:[%s153 + $0x8] sm:%s145] %v156
                %v158 = vld [vmem:[%s152 + $0x10] sm:%s145]
                %159 = vst [vmem:[%s153 + $0x10] sm:%s145] %v158
                %v160 = vld [vmem:[%s152 + $0x18] sm:%s145]
                %161 = vst [vmem:[%s153 + $0x18] sm:%s145] %v160
                %v162 = vld [vmem:[%s152 + $0x20] sm:%s145]
                %163 = vst [vmem:[%s153 + $0x20] sm:%s145] %v162
                %v164 = vld [vmem:[%s152 + $0x28] sm:%s145]
                %165 = vst [vmem:[%s153 + $0x28] sm:%s145] %v164
                %v166 = vld [vmem:[%s152 + $0x30] sm:%s145]
                %167 = vst [vmem:[%s153 + $0x30] sm:%s145] %v166
                %v168 = vld [vmem:[%s152 + $0x38] sm:%s145]
                %169 = vst [vmem:[%s153 + $0x38] sm:%s145] %v168
                %v170 = vld [vmem:[%s152 + $0x40] sm:%s145]
                %171 = vst [vmem:[%s153 + $0x40] sm:%s145] %v170
                %v172 = vld [vmem:[%s152 + $0x48] sm:%s145]
                %173 = vst [vmem:[%s153 + $0x48] sm:%s145] %v172
                %v174 = vld [vmem:[%s152 + $0x50] sm:%s145]
                %175 = vst [vmem:[%s153 + $0x50] sm:%s145] %v174
                %v176 = vld [vmem:[%s152 + $0x58] sm:%s145]
                %177 = vst [vmem:[%s153 + $0x58] sm:%s145] %v176
                %v178 = vld [vmem:[%s152 + $0x60] sm:%s145]
                %179 = vst [vmem:[%s153 + $0x60] sm:%s145] %v178
                %v180 = vld [vmem:[%s152 + $0x68] sm:%s145]
                %181 = vst [vmem:[%s153 + $0x68] sm:%s145] %v180
                %v182 = vld [vmem:[%s152 + $0x70] sm:%s145]
                %183 = vst [vmem:[%s153 + $0x70] sm:%s145] %v182
                %v184 = vld [vmem:[%s152 + $0x78] sm:%s145]
                %185 = vst [vmem:[%s153 + $0x78] sm:%s145] %v184
                %v186 = vld [vmem:[%s152 + $0x80] sm:%s145]
                %187 = vst [vmem:[%s153 + $0x80] sm:%s145] %v186
                %v188 = vld [vmem:[%s152 + $0x88] sm:%s145]
                %189 = vst [vmem:[%s153 + $0x88] sm:%s145] %v188
                %v190 = vld [vmem:[%s152 + $0x90] sm:%s145]
                %191 = vst [vmem:[%s153 + $0x90] sm:%s145] %v190
                %v192 = vld [vmem:[%s152 + $0x98] sm:%s145]
                %193 = vst [vmem:[%s153 + $0x98] sm:%s145] %v192
                %v194 = vld [vmem:[%s152 + $0xa0] sm:%s145]
                %195 = vst [vmem:[%s153 + $0xa0] sm:%s145] %v194
                %v196 = vld [vmem:[%s152 + $0xa8] sm:%s145]
                %197 = vst [vmem:[%s153 + $0xa8] sm:%s145] %v196
                %v198 = vld [vmem:[%s152 + $0xb0] sm:%s145]
                %199 = vst [vmem:[%s153 + $0xb0] sm:%s145] %v198
                %v200 = vld [vmem:[%s152 + $0xb8] sm:%s145]
                %201 = vst [vmem:[%s153 + $0xb8] sm:%s145] %v200
                %v202 = vld [vmem:[%s152 + $0xc0] sm:%s145]
                %203 = vst [vmem:[%s153 + $0xc0] sm:%s145] %v202
                %v204 = vld [vmem:[%s152 + $0xc8] sm:%s145]
                %205 = vst [vmem:[%s153 + $0xc8] sm:%s145] %v204
                %v206 = vld [vmem:[%s152 + $0xd0] sm:%s145]
                %207 = vst [vmem:[%s153 + $0xd0] sm:%s145] %v206
                %v208 = vld [vmem:[%s152 + $0xd8] sm:%s145]
                %209 = vst [vmem:[%s153 + $0xd8] sm:%s145] %v208
                %v210 = vld [vmem:[%s152 + $0xe0] sm:%s145]
                %211 = vst [vmem:[%s153 + $0xe0] sm:%s145] %v210
                %v212 = vld [vmem:[%s152 + $0xe8] sm:%s145]
                %213 = vst [vmem:[%s153 + $0xe8] sm:%s145] %v212
                %v214 = vld [vmem:[%s152 + $0xf0] sm:%s145]
                %215 = vst [vmem:[%s153 + $0xf0] sm:%s145] %v214
                %v216 = vld [vmem:[%s152 + $0xf8] sm:%s145]
                %217 = vst [vmem:[%s153 + $0xf8] sm:%s145] %v216
                %v218 = vld [vmem:[%s152 + $0x200] sm:%s145]
                %219 = vst [vmem:[%s153 + $0x100] sm:%s145] %v218
                %v220 = vld [vmem:[%s152 + $0x208] sm:%s145]
                %221 = vst [vmem:[%s153 + $0x108] sm:%s145] %v220
                %v222 = vld [vmem:[%s152 + $0x210] sm:%s145]
                %223 = vst [vmem:[%s153 + $0x110] sm:%s145] %v222
                %v224 = vld [vmem:[%s152 + $0x218] sm:%s145]
                %225 = vst [vmem:[%s153 + $0x118] sm:%s145] %v224
                %v226 = vld [vmem:[%s152 + $0x220] sm:%s145]
                %227 = vst [vmem:[%s153 + $0x120] sm:%s145] %v226
                %v228 = vld [vmem:[%s152 + $0x228] sm:%s145]
                %229 = vst [vmem:[%s153 + $0x128] sm:%s145] %v228
                %v230 = vld [vmem:[%s152 + $0x230] sm:%s145]
                %231 = vst [vmem:[%s153 + $0x130] sm:%s145] %v230
                %v232 = vld [vmem:[%s152 + $0x238] sm:%s145]
                %233 = vst [vmem:[%s153 + $0x138] sm:%s145] %v232
                %v234 = vld [vmem:[%s152 + $0x240] sm:%s145]
                %235 = vst [vmem:[%s153 + $0x140] sm:%s145] %v234
                %v236 = vld [vmem:[%s152 + $0x248] sm:%s145]
                %237 = vst [vmem:[%s153 + $0x148] sm:%s145] %v236
                %v238 = vld [vmem:[%s152 + $0x250] sm:%s145]
                %239 = vst [vmem:[%s153 + $0x150] sm:%s145] %v238
                %v240 = vld [vmem:[%s152 + $0x258] sm:%s145]
                %241 = vst [vmem:[%s153 + $0x158] sm:%s145] %v240
                %v242 = vld [vmem:[%s152 + $0x260] sm:%s145]
                %243 = vst [vmem:[%s153 + $0x160] sm:%s145] %v242
                %v244 = vld [vmem:[%s152 + $0x268] sm:%s145]
                %245 = vst [vmem:[%s153 + $0x168] sm:%s145] %v244
                %v246 = vld [vmem:[%s152 + $0x270] sm:%s145]
                %247 = vst [vmem:[%s153 + $0x170] sm:%s145] %v246
                %v248 = vld [vmem:[%s152 + $0x278] sm:%s145]
                %249 = vst [vmem:[%s153 + $0x178] sm:%s145] %v248
                %v250 = vld [vmem:[%s152 + $0x280] sm:%s145]
                %251 = vst [vmem:[%s153 + $0x180] sm:%s145] %v250
                %v252 = vld [vmem:[%s152 + $0x288] sm:%s145]
                %253 = vst [vmem:[%s153 + $0x188] sm:%s145] %v252
                %v254 = vld [vmem:[%s152 + $0x290] sm:%s145]
                %255 = vst [vmem:[%s153 + $0x190] sm:%s145] %v254
                %v256 = vld [vmem:[%s152 + $0x298] sm:%s145]
                %257 = vst [vmem:[%s153 + $0x198] sm:%s145] %v256
                %v258 = vld [vmem:[%s152 + $0x2a0] sm:%s145]
                %259 = vst [vmem:[%s153 + $0x1a0] sm:%s145] %v258
                %v260 = vld [vmem:[%s152 + $0x2a8] sm:%s145]
                %261 = vst [vmem:[%s153 + $0x1a8] sm:%s145] %v260
                %v262 = vld [vmem:[%s152 + $0x2b0] sm:%s145]
                %263 = vst [vmem:[%s153 + $0x1b0] sm:%s145] %v262
                %v264 = vld [vmem:[%s152 + $0x2b8] sm:%s145]
                %265 = vst [vmem:[%s153 + $0x1b8] sm:%s145] %v264
                %v266 = vld [vmem:[%s152 + $0x2c0] sm:%s145]
                %267 = vst [vmem:[%s153 + $0x1c0] sm:%s145] %v266
                %v268 = vld [vmem:[%s152 + $0x2c8] sm:%s145]
                %269 = vst [vmem:[%s153 + $0x1c8] sm:%s145] %v268
                %v270 = vld [vmem:[%s152 + $0x2d0] sm:%s145]
                %271 = vst [vmem:[%s153 + $0x1d0] sm:%s145] %v270
                %v272 = vld [vmem:[%s152 + $0x2d8] sm:%s145]
                %273 = vst [vmem:[%s153 + $0x1d8] sm:%s145] %v272
                %v274 = vld [vmem:[%s152 + $0x2e0] sm:%s145]
                %275 = vst [vmem:[%s153 + $0x1e0] sm:%s145] %v274
                %v276 = vld [vmem:[%s152 + $0x2e8] sm:%s145]
                %277 = vst [vmem:[%s153 + $0x1e8] sm:%s145] %v276
                %v278 = vld [vmem:[%s152 + $0x2f0] sm:%s145]
                %279 = vst [vmem:[%s153 + $0x1f0] sm:%s145] %v278
                %v280 = vld [vmem:[%s152 + $0x2f8] sm:%s145]
                %281 = vst [vmem:[%s153 + $0x1f8] sm:%s145] %v280
                %v282 = vld [vmem:[%s152 + $0x400] sm:%s145]
                %283 = vst [vmem:[%s153 + $0x200] sm:%s145] %v282
                %v284 = vld [vmem:[%s152 + $0x408] sm:%s145]
                %285 = vst [vmem:[%s153 + $0x208] sm:%s145] %v284
                %v286 = vld [vmem:[%s152 + $0x410] sm:%s145]
                %287 = vst [vmem:[%s153 + $0x210] sm:%s145] %v286
                %v288 = vld [vmem:[%s152 + $0x418] sm:%s145]
                %289 = vst [vmem:[%s153 + $0x218] sm:%s145] %v288
                %v290 = vld [vmem:[%s152 + $0x420] sm:%s145]
                %291 = vst [vmem:[%s153 + $0x220] sm:%s145] %v290
                %v292 = vld [vmem:[%s152 + $0x428] sm:%s145]
                %293 = vst [vmem:[%s153 + $0x228] sm:%s145] %v292
                %v294 = vld [vmem:[%s152 + $0x430] sm:%s145]
                %295 = vst [vmem:[%s153 + $0x230] sm:%s145] %v294
                %v296 = vld [vmem:[%s152 + $0x438] sm:%s145]
                %297 = vst [vmem:[%s153 + $0x238] sm:%s145] %v296
                %v298 = vld [vmem:[%s152 + $0x440] sm:%s145]
                %299 = vst [vmem:[%s153 + $0x240] sm:%s145] %v298
                %v300 = vld [vmem:[%s152 + $0x448] sm:%s145]
                %301 = vst [vmem:[%s153 + $0x248] sm:%s145] %v300
                %v302 = vld [vmem:[%s152 + $0x450] sm:%s145]
                %303 = vst [vmem:[%s153 + $0x250] sm:%s145] %v302
                %v304 = vld [vmem:[%s152 + $0x458] sm:%s145]
                %305 = vst [vmem:[%s153 + $0x258] sm:%s145] %v304
                %v306 = vld [vmem:[%s152 + $0x460] sm:%s145]
                %307 = vst [vmem:[%s153 + $0x260] sm:%s145] %v306
                %v308 = vld [vmem:[%s152 + $0x468] sm:%s145]
                %309 = vst [vmem:[%s153 + $0x268] sm:%s145] %v308
                %v310 = vld [vmem:[%s152 + $0x470] sm:%s145]
                %311 = vst [vmem:[%s153 + $0x270] sm:%s145] %v310
                %v312 = vld [vmem:[%s152 + $0x478] sm:%s145]
                %313 = vst [vmem:[%s153 + $0x278] sm:%s145] %v312
                %v314 = vld [vmem:[%s152 + $0x480] sm:%s145]
                %315 = vst [vmem:[%s153 + $0x280] sm:%s145] %v314
                %v316 = vld [vmem:[%s152 + $0x488] sm:%s145]
                %317 = vst [vmem:[%s153 + $0x288] sm:%s145] %v316
                %v318 = vld [vmem:[%s152 + $0x490] sm:%s145]
                %319 = vst [vmem:[%s153 + $0x290] sm:%s145] %v318
                %v320 = vld [vmem:[%s152 + $0x498] sm:%s145]
                %321 = vst [vmem:[%s153 + $0x298] sm:%s145] %v320
                %v322 = vld [vmem:[%s152 + $0x4a0] sm:%s145]
                %323 = vst [vmem:[%s153 + $0x2a0] sm:%s145] %v322
                %v324 = vld [vmem:[%s152 + $0x4a8] sm:%s145]
                %325 = vst [vmem:[%s153 + $0x2a8] sm:%s145] %v324
                %v326 = vld [vmem:[%s152 + $0x4b0] sm:%s145]
                %327 = vst [vmem:[%s153 + $0x2b0] sm:%s145] %v326
                %v328 = vld [vmem:[%s152 + $0x4b8] sm:%s145]
                %329 = vst [vmem:[%s153 + $0x2b8] sm:%s145] %v328
                %v330 = vld [vmem:[%s152 + $0x4c0] sm:%s145]
                %331 = vst [vmem:[%s153 + $0x2c0] sm:%s145] %v330
                %v332 = vld [vmem:[%s152 + $0x4c8] sm:%s145]
                %333 = vst [vmem:[%s153 + $0x2c8] sm:%s145] %v332
                %v334 = vld [vmem:[%s152 + $0x4d0] sm:%s145]
                %335 = vst [vmem:[%s153 + $0x2d0] sm:%s145] %v334
                %v336 = vld [vmem:[%s152 + $0x4d8] sm:%s145]
                %337 = vst [vmem:[%s153 + $0x2d8] sm:%s145] %v336
                %v338 = vld [vmem:[%s152 + $0x4e0] sm:%s145]
                %339 = vst [vmem:[%s153 + $0x2e0] sm:%s145] %v338
                %v340 = vld [vmem:[%s152 + $0x4e8] sm:%s145]
                %341 = vst [vmem:[%s153 + $0x2e8] sm:%s145] %v340
                %v342 = vld [vmem:[%s152 + $0x4f0] sm:%s145]
                %343 = vst [vmem:[%s153 + $0x2f0] sm:%s145] %v342
                %v344 = vld [vmem:[%s152 + $0x4f8] sm:%s145]
                %345 = vst [vmem:[%s153 + $0x2f8] sm:%s145] %v344
                %v346 = vld [vmem:[%s152 + $0x600] sm:%s145]
                %347 = vst [vmem:[%s153 + $0x300] sm:%s145] %v346
                %v348 = vld [vmem:[%s152 + $0x608] sm:%s145]
                %349 = vst [vmem:[%s153 + $0x308] sm:%s145] %v348
                %v350 = vld [vmem:[%s152 + $0x610] sm:%s145]
                %351 = vst [vmem:[%s153 + $0x310] sm:%s145] %v350
                %v352 = vld [vmem:[%s152 + $0x618] sm:%s145]
                %353 = vst [vmem:[%s153 + $0x318] sm:%s145] %v352
                %v354 = vld [vmem:[%s152 + $0x620] sm:%s145]
                %355 = vst [vmem:[%s153 + $0x320] sm:%s145] %v354
                %v356 = vld [vmem:[%s152 + $0x628] sm:%s145]
                %357 = vst [vmem:[%s153 + $0x328] sm:%s145] %v356
                %v358 = vld [vmem:[%s152 + $0x630] sm:%s145]
                %359 = vst [vmem:[%s153 + $0x330] sm:%s145] %v358
                %v360 = vld [vmem:[%s152 + $0x638] sm:%s145]
                %361 = vst [vmem:[%s153 + $0x338] sm:%s145] %v360
                %v362 = vld [vmem:[%s152 + $0x640] sm:%s145]
                %363 = vst [vmem:[%s153 + $0x340] sm:%s145] %v362
                %v364 = vld [vmem:[%s152 + $0x648] sm:%s145]
                %365 = vst [vmem:[%s153 + $0x348] sm:%s145] %v364
                %v366 = vld [vmem:[%s152 + $0x650] sm:%s145]
                %367 = vst [vmem:[%s153 + $0x350] sm:%s145] %v366
                %v368 = vld [vmem:[%s152 + $0x658] sm:%s145]
                %369 = vst [vmem:[%s153 + $0x358] sm:%s145] %v368
                %v370 = vld [vmem:[%s152 + $0x660] sm:%s145]
                %371 = vst [vmem:[%s153 + $0x360] sm:%s145] %v370
                %v372 = vld [vmem:[%s152 + $0x668] sm:%s145]
                %373 = vst [vmem:[%s153 + $0x368] sm:%s145] %v372
                %v374 = vld [vmem:[%s152 + $0x670] sm:%s145]
                %375 = vst [vmem:[%s153 + $0x370] sm:%s145] %v374
                %v376 = vld [vmem:[%s152 + $0x678] sm:%s145]
                %377 = vst [vmem:[%s153 + $0x378] sm:%s145] %v376
                %v378 = vld [vmem:[%s152 + $0x680] sm:%s145]
                %379 = vst [vmem:[%s153 + $0x380] sm:%s145] %v378
                %v380 = vld [vmem:[%s152 + $0x688] sm:%s145]
                %381 = vst [vmem:[%s153 + $0x388] sm:%s145] %v380
                %v382 = vld [vmem:[%s152 + $0x690] sm:%s145]
                %383 = vst [vmem:[%s153 + $0x390] sm:%s145] %v382
                %v384 = vld [vmem:[%s152 + $0x698] sm:%s145]
                %385 = vst [vmem:[%s153 + $0x398] sm:%s145] %v384
                %v386 = vld [vmem:[%s152 + $0x6a0] sm:%s145]
                %387 = vst [vmem:[%s153 + $0x3a0] sm:%s145] %v386
                %v388 = vld [vmem:[%s152 + $0x6a8] sm:%s145]
                %389 = vst [vmem:[%s153 + $0x3a8] sm:%s145] %v388
                %v390 = vld [vmem:[%s152 + $0x6b0] sm:%s145]
                %391 = vst [vmem:[%s153 + $0x3b0] sm:%s145] %v390
                %v392 = vld [vmem:[%s152 + $0x6b8] sm:%s145]
                %393 = vst [vmem:[%s153 + $0x3b8] sm:%s145] %v392
                %v394 = vld [vmem:[%s152 + $0x6c0] sm:%s145]
                %395 = vst [vmem:[%s153 + $0x3c0] sm:%s145] %v394
                %v396 = vld [vmem:[%s152 + $0x6c8] sm:%s145]
                %397 = vst [vmem:[%s153 + $0x3c8] sm:%s145] %v396
                %v398 = vld [vmem:[%s152 + $0x6d0] sm:%s145]
                %399 = vst [vmem:[%s153 + $0x3d0] sm:%s145] %v398
                %v400 = vld [vmem:[%s152 + $0x6d8] sm:%s145]
                %401 = vst [vmem:[%s153 + $0x3d8] sm:%s145] %v400
                %v402 = vld [vmem:[%s152 + $0x6e0] sm:%s145]
                %403 = vst [vmem:[%s153 + $0x3e0] sm:%s145] %v402
                %v404 = vld [vmem:[%s152 + $0x6e8] sm:%s145]
                %405 = vst [vmem:[%s153 + $0x3e8] sm:%s145] %v404
                %v406 = vld [vmem:[%s152 + $0x6f0] sm:%s145]
                %407 = vst [vmem:[%s153 + $0x3f0] sm:%s145] %v406
                %v408 = vld [vmem:[%s152 + $0x6f8] sm:%s145]
                %409 = vst [vmem:[%s153 + $0x3f8] sm:%s145] %v408
              $region45: #{cnn_cifar_forward.3} parent=39 // loop_footer
                %s151 = sadd.s32 1, %s147
              $region46: #{cnn_cifar_forward.3} parent=39 // loop_footer_branch
                %146 = sbr.rel target = $region42
              $region47: #{cnn_cifar_forward.3} parent=39 // loop_exit
                _
            $region40: #{cnn_cifar_forward.3} parent=31 // pred_fallthru
              _
          $region32: #{cnn_cifar_forward.3} parent=27 // pred_fallthru
            _
          %678 = vnop
        $region28: #{cnn_cifar_forward.3} parent=23 // pred_fallthru
          _
      $region24: #{cnn_cifar_forward.3} parent=5 // pred_fallthru
        _
      %p679 = scmp.le.s32.totalorder 1, %s9
      %p680 = scmp.lt.s32.totalorder %s9, 3
      %p681 = pnand %p679, %p680
      %p682 = pneg %p681
      // Predicated region
      $region63: #{cnn_cifar_forward.3} parent=5 // pred_check
        _
      $region64: #{cnn_cifar_forward.3} parent=5 // pred_check_branch
        %684 = sbr.rel (%p681) target = $region66
      $region65: #{cnn_cifar_forward.3} parent=5 // pred_region
        %s685 = ssub.s32 %s9, 1
        %s686 = sand.u32 %s22, 1
        %s687 = sand.u32 %s22, 1
        %s688 = smul.addr %s687, 1024
        %s689 = scalar_lea.vmem [#allocation2], %s688
        // Predicated region
        $region67: #{cnn_cifar_forward.3} parent=65 // pred_check
          %p690 = pneg %p35
        $region68: #{cnn_cifar_forward.3} parent=65 // pred_check_branch
          %692 = sbr.rel (%p690) target = $region70
        $region69: #{cnn_cifar_forward.3} parent=65 // pred_region
          _
        $region70: #{cnn_cifar_forward.3} parent=65 // pred_fallthru
          _
        %s693 = sand.u32 %s22, 1
        %s694 = sand.u32 %s22, 1
        %s695 = smul.addr %s694, 1024
        %s696 = scalar_lea.vmem [#allocation2], %s695
        %p697 = pneg %p35
        %p698 = pneg %p32
        %p699 = pneg %p56
        %p700 = pneg %p53
        %p701 = pneg %p77
        %p702 = pneg %p74
        %p703 = pneg %p103
        %p704 = pneg %p100
        %s705 = smul.u32 32, %s14
        %p706 = scmp.lt.s32.totalorder %s705, 63
        %s707 = scalar_select %p706, %s705, 63
        %s708 = smul.addr %s707, 8
        %s709 = scalar_lea.vmem %s3, %s708
        %s710 = smul.u32 32, %s14
        %s711 = smul.u32 32, %s14
        %p712 = scmp.lt.s32.totalorder %s711, 63
        %s713 = scalar_select %p712, %s711, 63
        %s714 = smul.addr %s713, 8
        %s715 = scalar_lea.vmem %s3, %s714
        %s716 = smul.u32 32, %s14
        %v717 = vld [vmem:[%s1] sm:$0xff]
        %v718 = vld [vmem:[%s1 + $0x8] sm:$0xff]
        %v719 = vld [vmem:[%s1 + $0x10] sm:$0xff]
        %v720 = vld [vmem:[%s1 + $0x18] sm:$0xff]
        %v721 = vld [vmem:[%s1 + $0x20] sm:$0xff]
        %v722 = vld [vmem:[%s1 + $0x28] sm:$0xff]
        %v723 = vld [vmem:[%s1 + $0x30] sm:$0xff]
        %v724 = vld [vmem:[%s1 + $0x38] sm:$0xff]
        %v725 = vld [vmem:[%s1 + $0x40] sm:$0xff]
        %v726 = vld [vmem:[%s1 + $0x48] sm:$0x7]
        %v727 = vld [vmem:[%s689] sm:$0xff]
        %v728 = vld [vmem:[%s689 + $0x8] sm:$0xff]
        %v729 = vld [vmem:[%s689 + $0x10] sm:$0xff]
        %v730 = vld [vmem:[%s689 + $0x18] sm:$0xff]
        %v731 = vld [vmem:[%s689 + $0x20] sm:$0xff]
        %v732 = vld [vmem:[%s689 + $0x28] sm:$0xff]
        %v733 = vld [vmem:[%s689 + $0x30] sm:$0xff]
        %v734 = vld [vmem:[%s689 + $0x38] sm:$0xff]
        %v735 = vld [vmem:[%s689 + $0x40] sm:$0xff]
        %v736 = vld [vmem:[%s689 + $0x48] sm:$0xff]
        %v737 = vld [vmem:[%s689 + $0x50] sm:$0xff]
        %v738 = vld [vmem:[%s689 + $0x58] sm:$0xff]
        %v739 = vld [vmem:[%s689 + $0x60] sm:$0xff]
        %v740 = vld [vmem:[%s689 + $0x68] sm:$0xff]
        %v741 = vld [vmem:[%s689 + $0x70] sm:$0xff]
        %v742 = vld [vmem:[%s689 + $0x78] sm:$0xff]
        %v743 = vld [vmem:[%s689 + $0x80] sm:$0xff]
        %v744 = vld [vmem:[%s689 + $0x88] sm:$0xff]
        %v745 = vld [vmem:[%s689 + $0x90] sm:$0xff]
        %v746 = vld [vmem:[%s689 + $0x98] sm:$0xff]
        %v747 = vld [vmem:[%s689 + $0xa0] sm:$0xff]
        %v748 = vld [vmem:[%s689 + $0xa8] sm:$0xff]
        %v749 = vld [vmem:[%s689 + $0xb0] sm:$0xff]
        %v750 = vld [vmem:[%s689 + $0xb8] sm:$0xff]
        %v751 = vld [vmem:[%s689 + $0xc0] sm:$0xff]
        %v752 = vld [vmem:[%s689 + $0xc8] sm:$0xff]
        %v753 = vld [vmem:[%s689 + $0xd0] sm:$0xff]
        %v754 = vld [vmem:[%s689 + $0xd8] sm:$0xff]
        %v755 = vld [vmem:[%s689 + $0xe0] sm:$0xff]
        %v756 = vld [vmem:[%s689 + $0xe8] sm:$0xff]
        %v757 = vld [vmem:[%s689 + $0xf0] sm:$0xff]
        %v758 = vld [vmem:[%s689 + $0xf8] sm:$0xff]
        %vm759 = vcmask 613376
        %v761 = vsel %vm759, %v727, 0
        %v764 = vsel %vm759, %v728, 0
        %v767 = vsel %vm759, %v729, 0
        %v770 = vsel %vm759, %v730, 0
        %v773 = vsel %vm759, %v731, 0
        %v776 = vsel %vm759, %v732, 0
        %v779 = vsel %vm759, %v733, 0
        %v782 = vsel %vm759, %v734, 0
        %v785 = vsel %vm759, %v735, 0
        %v788 = vsel %vm759, %v736, 0
        %v791 = vsel %vm759, %v737, 0
        %v794 = vsel %vm759, %v738, 0
        %v797 = vsel %vm759, %v739, 0
        %v800 = vsel %vm759, %v740, 0
        %v803 = vsel %vm759, %v741, 0
        %v806 = vsel %vm759, %v742, 0
        %v809 = vsel %vm759, %v743, 0
        %v812 = vsel %vm759, %v744, 0
        %v815 = vsel %vm759, %v745, 0
        %v818 = vsel %vm759, %v746, 0
        %v821 = vsel %vm759, %v747, 0
        %v824 = vsel %vm759, %v748, 0
        %v827 = vsel %vm759, %v749, 0
        %v830 = vsel %vm759, %v750, 0
        %v833 = vsel %vm759, %v751, 0
        %v836 = vsel %vm759, %v752, 0
        %v839 = vsel %vm759, %v753, 0
        %v842 = vsel %vm759, %v754, 0
        %v845 = vsel %vm759, %v755, 0
        %v848 = vsel %vm759, %v756, 0
        %v851 = vsel %vm759, %v757, 0
        %v854 = vsel %vm759, %v758, 0
        %vm856 = vcmask 1042432
        %v858 = vsel %vm856, %v726, 0
        %860 = vmatpush.msra.mxu0 0.0
        %861 = vmatpush.msra.mxu0 0.0
        %862 = vmatpush.msra.mxu0 0.0
        %863 = vmatpush.msra.mxu0 0.0
        %864 = vmatpush.msra.mxu0 0.0
        %865 = vmatpush.msra.mxu0 0.0
        %866 = vmatpush.msra.mxu0 %v858
        %867 = vmatpush.msra.mxu0 %v725
        %868 = vmatpush.msra.mxu0 %v724
        %869 = vmatpush.msra.mxu0 %v723
        %870 = vmatpush.msra.mxu0 %v722
        %871 = vmatpush.msra.mxu0 %v721
        %872 = vmatpush.msra.mxu0 %v720
        %873 = vmatpush.msra.mxu0 %v719
        %874 = vmatpush.msra.mxu0 %v718
        %875 = vmatpush.msra.mxu0 %v717
        %876 = vmatmul.f32.gmra.mxu0 %v761
        %v877 = vpop.f32.mrf.mxu0
        %v878 = vadd.f32 0.0, %v877
        %879 = vmatmul.f32.gmra.mxu0 %v764
        %v880 = vpop.f32.mrf.mxu0
        %v881 = vadd.f32 0.0, %v880
        %882 = vmatmul.f32.gmra.mxu0 %v767
        %v883 = vpop.f32.mrf.mxu0
        %v884 = vadd.f32 0.0, %v883
        %885 = vmatmul.f32.gmra.mxu0 %v770
        %v886 = vpop.f32.mrf.mxu0
        %v887 = vadd.f32 0.0, %v886
        %888 = vmatmul.f32.gmra.mxu0 %v773
        %v889 = vpop.f32.mrf.mxu0
        %v890 = vadd.f32 0.0, %v889
        %891 = vmatmul.f32.gmra.mxu0 %v776
        %v892 = vpop.f32.mrf.mxu0
        %v893 = vadd.f32 0.0, %v892
        %894 = vmatmul.f32.gmra.mxu0 %v779
        %v895 = vpop.f32.mrf.mxu0
        %v896 = vadd.f32 0.0, %v895
        %897 = vmatmul.f32.gmra.mxu0 %v782
        %v898 = vpop.f32.mrf.mxu0
        %v899 = vadd.f32 0.0, %v898
        %900 = vmatmul.f32.gmra.mxu0 %v785
        %v901 = vpop.f32.mrf.mxu0
        %v902 = vadd.f32 0.0, %v901
        %903 = vmatmul.f32.gmra.mxu0 %v788
        %v904 = vpop.f32.mrf.mxu0
        %v905 = vadd.f32 0.0, %v904
        %906 = vmatmul.f32.gmra.mxu0 %v791
        %v907 = vpop.f32.mrf.mxu0
        %v908 = vadd.f32 0.0, %v907
        %909 = vmatmul.f32.gmra.mxu0 %v794
        %v910 = vpop.f32.mrf.mxu0
        %v911 = vadd.f32 0.0, %v910
        %912 = vmatmul.f32.gmra.mxu0 %v797
        %v913 = vpop.f32.mrf.mxu0
        %v914 = vadd.f32 0.0, %v913
        %915 = vmatmul.f32.gmra.mxu0 %v800
        %v916 = vpop.f32.mrf.mxu0
        %v917 = vadd.f32 0.0, %v916
        %918 = vmatmul.f32.gmra.mxu0 %v803
        %v919 = vpop.f32.mrf.mxu0
        %v920 = vadd.f32 0.0, %v919
        %921 = vmatmul.f32.gmra.mxu0 %v806
        %v922 = vpop.f32.mrf.mxu0
        %v923 = vadd.f32 0.0, %v922
        %924 = vmatmul.f32.gmra.mxu0 %v809
        %v925 = vpop.f32.mrf.mxu0
        %v926 = vadd.f32 0.0, %v925
        %927 = vmatmul.f32.gmra.mxu0 %v812
        %v928 = vpop.f32.mrf.mxu0
        %v929 = vadd.f32 0.0, %v928
        %930 = vmatmul.f32.gmra.mxu0 %v815
        %v931 = vpop.f32.mrf.mxu0
        %v932 = vadd.f32 0.0, %v931
        %933 = vmatmul.f32.gmra.mxu0 %v818
        %v934 = vpop.f32.mrf.mxu0
        %v935 = vadd.f32 0.0, %v934
        %936 = vmatmul.f32.gmra.mxu0 %v821
        %v937 = vpop.f32.mrf.mxu0
        %v938 = vadd.f32 0.0, %v937
        %939 = vmatmul.f32.gmra.mxu0 %v824
        %v940 = vpop.f32.mrf.mxu0
        %v941 = vadd.f32 0.0, %v940
        %942 = vmatmul.f32.gmra.mxu0 %v827
        %v943 = vpop.f32.mrf.mxu0
        %v944 = vadd.f32 0.0, %v943
        %945 = vmatmul.f32.gmra.mxu0 %v830
        %v946 = vpop.f32.mrf.mxu0
        %v947 = vadd.f32 0.0, %v946
        %948 = vmatmul.f32.gmra.mxu0 %v833
        %v949 = vpop.f32.mrf.mxu0
        %v950 = vadd.f32 0.0, %v949
        %951 = vmatmul.f32.gmra.mxu0 %v836
        %v952 = vpop.f32.mrf.mxu0
        %v953 = vadd.f32 0.0, %v952
        %954 = vmatmul.f32.gmra.mxu0 %v839
        %v955 = vpop.f32.mrf.mxu0
        %v956 = vadd.f32 0.0, %v955
        %957 = vmatmul.f32.gmra.mxu0 %v842
        %v958 = vpop.f32.mrf.mxu0
        %v959 = vadd.f32 0.0, %v958
        %960 = vmatmul.f32.gmra.mxu0 %v845
        %v961 = vpop.f32.mrf.mxu0
        %v962 = vadd.f32 0.0, %v961
        %963 = vmatmul.f32.gmra.mxu0 %v848
        %v964 = vpop.f32.mrf.mxu0
        %v965 = vadd.f32 0.0, %v964
        %966 = vmatmul.f32.gmra.mxu0 %v851
        %v967 = vpop.f32.mrf.mxu0
        %v968 = vadd.f32 0.0, %v967
        %969 = vmatmul.f32.gmra.mxu0 %v854
        %v970 = vpop.f32.mrf.mxu0
        %v971 = vadd.f32 0.0, %v970
        %972 = vdwg.mxu0
        %s973 = scalar_lea.vmem %s689, 256 [#allocation2]
        %v974 = vld [vmem:[%s973] sm:$0xff]
        %v975 = vld [vmem:[%s973 + $0x8] sm:$0xff]
        %v976 = vld [vmem:[%s973 + $0x10] sm:$0xff]
        %v977 = vld [vmem:[%s973 + $0x18] sm:$0xff]
        %v978 = vld [vmem:[%s973 + $0x20] sm:$0xff]
        %v979 = vld [vmem:[%s973 + $0x28] sm:$0xff]
        %v980 = vld [vmem:[%s973 + $0x30] sm:$0xff]
        %v981 = vld [vmem:[%s973 + $0x38] sm:$0xff]
        %v982 = vld [vmem:[%s973 + $0x40] sm:$0xff]
        %v983 = vld [vmem:[%s973 + $0x48] sm:$0xff]
        %v984 = vld [vmem:[%s973 + $0x50] sm:$0xff]
        %v985 = vld [vmem:[%s973 + $0x58] sm:$0xff]
        %v986 = vld [vmem:[%s973 + $0x60] sm:$0xff]
        %v987 = vld [vmem:[%s973 + $0x68] sm:$0xff]
        %v988 = vld [vmem:[%s973 + $0x70] sm:$0xff]
        %v989 = vld [vmem:[%s973 + $0x78] sm:$0xff]
        %v990 = vld [vmem:[%s973 + $0x80] sm:$0xff]
        %v991 = vld [vmem:[%s973 + $0x88] sm:$0xff]
        %v992 = vld [vmem:[%s973 + $0x90] sm:$0xff]
        %v993 = vld [vmem:[%s973 + $0x98] sm:$0xff]
        %v994 = vld [vmem:[%s973 + $0xa0] sm:$0xff]
        %v995 = vld [vmem:[%s973 + $0xa8] sm:$0xff]
        %v996 = vld [vmem:[%s973 + $0xb0] sm:$0xff]
        %v997 = vld [vmem:[%s973 + $0xb8] sm:$0xff]
        %v998 = vld [vmem:[%s973 + $0xc0] sm:$0xff]
        %v999 = vld [vmem:[%s973 + $0xc8] sm:$0xff]
        %v1000 = vld [vmem:[%s973 + $0xd0] sm:$0xff]
        %v1001 = vld [vmem:[%s973 + $0xd8] sm:$0xff]
        %v1002 = vld [vmem:[%s973 + $0xe0] sm:$0xff]
        %v1003 = vld [vmem:[%s973 + $0xe8] sm:$0xff]
        %v1004 = vld [vmem:[%s973 + $0xf0] sm:$0xff]
        %v1005 = vld [vmem:[%s973 + $0xf8] sm:$0xff]
        %v1007 = vsel %vm759, %v974, 0
        %v1010 = vsel %vm759, %v975, 0
        %v1013 = vsel %vm759, %v976, 0
        %v1016 = vsel %vm759, %v977, 0
        %v1019 = vsel %vm759, %v978, 0
        %v1022 = vsel %vm759, %v979, 0
        %v1025 = vsel %vm759, %v980, 0
        %v1028 = vsel %vm759, %v981, 0
        %v1031 = vsel %vm759, %v982, 0
        %v1034 = vsel %vm759, %v983, 0
        %v1037 = vsel %vm759, %v984, 0
        %v1040 = vsel %vm759, %v985, 0
        %v1043 = vsel %vm759, %v986, 0
        %v1046 = vsel %vm759, %v987, 0
        %v1049 = vsel %vm759, %v988, 0
        %v1052 = vsel %vm759, %v989, 0
        %v1055 = vsel %vm759, %v990, 0
        %v1058 = vsel %vm759, %v991, 0
        %v1061 = vsel %vm759, %v992, 0
        %v1064 = vsel %vm759, %v993, 0
        %v1067 = vsel %vm759, %v994, 0
        %v1070 = vsel %vm759, %v995, 0
        %v1073 = vsel %vm759, %v996, 0
        %v1076 = vsel %vm759, %v997, 0
        %v1079 = vsel %vm759, %v998, 0
        %v1082 = vsel %vm759, %v999, 0
        %v1085 = vsel %vm759, %v1000, 0
        %v1088 = vsel %vm759, %v1001, 0
        %v1091 = vsel %vm759, %v1002, 0
        %v1094 = vsel %vm759, %v1003, 0
        %v1097 = vsel %vm759, %v1004, 0
        %v1100 = vsel %vm759, %v1005, 0
        %1102 = vmatpush.msra.mxu0 0.0
        %1103 = vmatpush.msra.mxu0 0.0
        %1104 = vmatpush.msra.mxu0 0.0
        %1105 = vmatpush.msra.mxu0 0.0
        %1106 = vmatpush.msra.mxu0 0.0
        %1107 = vmatpush.msra.mxu0 0.0
        %1108 = vmatpush.msra.mxu0 %v858
        %1109 = vmatpush.msra.mxu0 %v725
        %1110 = vmatpush.msra.mxu0 %v724
        %1111 = vmatpush.msra.mxu0 %v723
        %1112 = vmatpush.msra.mxu0 %v722
        %1113 = vmatpush.msra.mxu0 %v721
        %1114 = vmatpush.msra.mxu0 %v720
        %1115 = vmatpush.msra.mxu0 %v719
        %1116 = vmatpush.msra.mxu0 %v718
        %1117 = vmatpush.msra.mxu0 %v717
        %1118 = vmatmul.f32.gmra.mxu0 %v1007
        %v1119 = vpop.f32.mrf.mxu0
        %v1120 = vadd.f32 0.0, %v1119
        %1121 = vmatmul.f32.gmra.mxu0 %v1010
        %v1122 = vpop.f32.mrf.mxu0
        %v1123 = vadd.f32 0.0, %v1122
        %1124 = vmatmul.f32.gmra.mxu0 %v1013
        %v1125 = vpop.f32.mrf.mxu0
        %v1126 = vadd.f32 0.0, %v1125
        %1127 = vmatmul.f32.gmra.mxu0 %v1016
        %v1128 = vpop.f32.mrf.mxu0
        %v1129 = vadd.f32 0.0, %v1128
        %1130 = vmatmul.f32.gmra.mxu0 %v1019
        %v1131 = vpop.f32.mrf.mxu0
        %v1132 = vadd.f32 0.0, %v1131
        %1133 = vmatmul.f32.gmra.mxu0 %v1022
        %v1134 = vpop.f32.mrf.mxu0
        %v1135 = vadd.f32 0.0, %v1134
        %1136 = vmatmul.f32.gmra.mxu0 %v1025
        %v1137 = vpop.f32.mrf.mxu0
        %v1138 = vadd.f32 0.0, %v1137
        %1139 = vmatmul.f32.gmra.mxu0 %v1028
        %v1140 = vpop.f32.mrf.mxu0
        %v1141 = vadd.f32 0.0, %v1140
        %1142 = vmatmul.f32.gmra.mxu0 %v1031
        %v1143 = vpop.f32.mrf.mxu0
        %v1144 = vadd.f32 0.0, %v1143
        %1145 = vmatmul.f32.gmra.mxu0 %v1034
        %v1146 = vpop.f32.mrf.mxu0
        %v1147 = vadd.f32 0.0, %v1146
        %1148 = vmatmul.f32.gmra.mxu0 %v1037
        %v1149 = vpop.f32.mrf.mxu0
        %v1150 = vadd.f32 0.0, %v1149
        %1151 = vmatmul.f32.gmra.mxu0 %v1040
        %v1152 = vpop.f32.mrf.mxu0
        %v1153 = vadd.f32 0.0, %v1152
        %1154 = vmatmul.f32.gmra.mxu0 %v1043
        %v1155 = vpop.f32.mrf.mxu0
        %v1156 = vadd.f32 0.0, %v1155
        %1157 = vmatmul.f32.gmra.mxu0 %v1046
        %v1158 = vpop.f32.mrf.mxu0
        %v1159 = vadd.f32 0.0, %v1158
        %1160 = vmatmul.f32.gmra.mxu0 %v1049
        %v1161 = vpop.f32.mrf.mxu0
        %v1162 = vadd.f32 0.0, %v1161
        %1163 = vmatmul.f32.gmra.mxu0 %v1052
        %v1164 = vpop.f32.mrf.mxu0
        %v1165 = vadd.f32 0.0, %v1164
        %1166 = vmatmul.f32.gmra.mxu0 %v1055
        %v1167 = vpop.f32.mrf.mxu0
        %v1168 = vadd.f32 0.0, %v1167
        %1169 = vmatmul.f32.gmra.mxu0 %v1058
        %v1170 = vpop.f32.mrf.mxu0
        %v1171 = vadd.f32 0.0, %v1170
        %1172 = vmatmul.f32.gmra.mxu0 %v1061
        %v1173 = vpop.f32.mrf.mxu0
        %v1174 = vadd.f32 0.0, %v1173
        %1175 = vmatmul.f32.gmra.mxu0 %v1064
        %v1176 = vpop.f32.mrf.mxu0
        %v1177 = vadd.f32 0.0, %v1176
        %1178 = vmatmul.f32.gmra.mxu0 %v1067
        %v1179 = vpop.f32.mrf.mxu0
        %v1180 = vadd.f32 0.0, %v1179
        %1181 = vmatmul.f32.gmra.mxu0 %v1070
        %v1182 = vpop.f32.mrf.mxu0
        %v1183 = vadd.f32 0.0, %v1182
        %1184 = vmatmul.f32.gmra.mxu0 %v1073
        %v1185 = vpop.f32.mrf.mxu0
        %v1186 = vadd.f32 0.0, %v1185
        %1187 = vmatmul.f32.gmra.mxu0 %v1076
        %v1188 = vpop.f32.mrf.mxu0
        %v1189 = vadd.f32 0.0, %v1188
        %1190 = vmatmul.f32.gmra.mxu0 %v1079
        %v1191 = vpop.f32.mrf.mxu0
        %v1192 = vadd.f32 0.0, %v1191
        %1193 = vmatmul.f32.gmra.mxu0 %v1082
        %v1194 = vpop.f32.mrf.mxu0
        %v1195 = vadd.f32 0.0, %v1194
        %1196 = vmatmul.f32.gmra.mxu0 %v1085
        %v1197 = vpop.f32.mrf.mxu0
        %v1198 = vadd.f32 0.0, %v1197
        %1199 = vmatmul.f32.gmra.mxu0 %v1088
        %v1200 = vpop.f32.mrf.mxu0
        %v1201 = vadd.f32 0.0, %v1200
        %1202 = vmatmul.f32.gmra.mxu0 %v1091
        %v1203 = vpop.f32.mrf.mxu0
        %v1204 = vadd.f32 0.0, %v1203
        %1205 = vmatmul.f32.gmra.mxu0 %v1094
        %v1206 = vpop.f32.mrf.mxu0
        %v1207 = vadd.f32 0.0, %v1206
        %1208 = vmatmul.f32.gmra.mxu0 %v1097
        %v1209 = vpop.f32.mrf.mxu0
        %v1210 = vadd.f32 0.0, %v1209
        %1211 = vmatmul.f32.gmra.mxu0 %v1100
        %v1212 = vpop.f32.mrf.mxu0
        %v1213 = vadd.f32 0.0, %v1212
        %1214 = vdwg.mxu0
        %v1215 = vmax.f32 %v878, %v1120
        %v1216 = vmax.f32 %v881, %v1123
        %v1217 = vmax.f32 %v884, %v1126
        %v1218 = vmax.f32 %v887, %v1129
        %v1219 = vmax.f32 %v890, %v1132
        %v1220 = vmax.f32 %v893, %v1135
        %v1221 = vmax.f32 %v896, %v1138
        %v1222 = vmax.f32 %v899, %v1141
        %v1223 = vmax.f32 %v902, %v1144
        %v1224 = vmax.f32 %v905, %v1147
        %v1225 = vmax.f32 %v908, %v1150
        %v1226 = vmax.f32 %v911, %v1153
        %v1227 = vmax.f32 %v914, %v1156
        %v1228 = vmax.f32 %v917, %v1159
        %v1229 = vmax.f32 %v920, %v1162
        %v1230 = vmax.f32 %v923, %v1165
        %v1231 = vmax.f32 %v926, %v1168
        %v1232 = vmax.f32 %v929, %v1171
        %v1233 = vmax.f32 %v932, %v1174
        %v1234 = vmax.f32 %v935, %v1177
        %v1235 = vmax.f32 %v938, %v1180
        %v1236 = vmax.f32 %v941, %v1183
        %v1237 = vmax.f32 %v944, %v1186
        %v1238 = vmax.f32 %v947, %v1189
        %v1239 = vmax.f32 %v950, %v1192
        %v1240 = vmax.f32 %v953, %v1195
        %v1241 = vmax.f32 %v956, %v1198
        %v1242 = vmax.f32 %v959, %v1201
        %v1243 = vmax.f32 %v962, %v1204
        %v1244 = vmax.f32 %v965, %v1207
        %v1245 = vmax.f32 %v968, %v1210
        %v1246 = vmax.f32 %v971, %v1213
        %s1247 = scalar_lea.vmem %s689, 512 [#allocation2]
        %v1248 = vld [vmem:[%s1247] sm:$0xff]
        %v1249 = vld [vmem:[%s1247 + $0x8] sm:$0xff]
        %v1250 = vld [vmem:[%s1247 + $0x10] sm:$0xff]
        %v1251 = vld [vmem:[%s1247 + $0x18] sm:$0xff]
        %v1252 = vld [vmem:[%s1247 + $0x20] sm:$0xff]
        %v1253 = vld [vmem:[%s1247 + $0x28] sm:$0xff]
        %v1254 = vld [vmem:[%s1247 + $0x30] sm:$0xff]
        %v1255 = vld [vmem:[%s1247 + $0x38] sm:$0xff]
        %v1256 = vld [vmem:[%s1247 + $0x40] sm:$0xff]
        %v1257 = vld [vmem:[%s1247 + $0x48] sm:$0xff]
        %v1258 = vld [vmem:[%s1247 + $0x50] sm:$0xff]
        %v1259 = vld [vmem:[%s1247 + $0x58] sm:$0xff]
        %v1260 = vld [vmem:[%s1247 + $0x60] sm:$0xff]
        %v1261 = vld [vmem:[%s1247 + $0x68] sm:$0xff]
        %v1262 = vld [vmem:[%s1247 + $0x70] sm:$0xff]
        %v1263 = vld [vmem:[%s1247 + $0x78] sm:$0xff]
        %v1264 = vld [vmem:[%s1247 + $0x80] sm:$0xff]
        %v1265 = vld [vmem:[%s1247 + $0x88] sm:$0xff]
        %v1266 = vld [vmem:[%s1247 + $0x90] sm:$0xff]
        %v1267 = vld [vmem:[%s1247 + $0x98] sm:$0xff]
        %v1268 = vld [vmem:[%s1247 + $0xa0] sm:$0xff]
        %v1269 = vld [vmem:[%s1247 + $0xa8] sm:$0xff]
        %v1270 = vld [vmem:[%s1247 + $0xb0] sm:$0xff]
        %v1271 = vld [vmem:[%s1247 + $0xb8] sm:$0xff]
        %v1272 = vld [vmem:[%s1247 + $0xc0] sm:$0xff]
        %v1273 = vld [vmem:[%s1247 + $0xc8] sm:$0xff]
        %v1274 = vld [vmem:[%s1247 + $0xd0] sm:$0xff]
        %v1275 = vld [vmem:[%s1247 + $0xd8] sm:$0xff]
        %v1276 = vld [vmem:[%s1247 + $0xe0] sm:$0xff]
        %v1277 = vld [vmem:[%s1247 + $0xe8] sm:$0xff]
        %v1278 = vld [vmem:[%s1247 + $0xf0] sm:$0xff]
        %v1279 = vld [vmem:[%s1247 + $0xf8] sm:$0xff]
        %v1281 = vsel %vm759, %v1248, 0
        %v1284 = vsel %vm759, %v1249, 0
        %v1287 = vsel %vm759, %v1250, 0
        %v1290 = vsel %vm759, %v1251, 0
        %v1293 = vsel %vm759, %v1252, 0
        %v1296 = vsel %vm759, %v1253, 0
        %v1299 = vsel %vm759, %v1254, 0
        %v1302 = vsel %vm759, %v1255, 0
        %v1305 = vsel %vm759, %v1256, 0
        %v1308 = vsel %vm759, %v1257, 0
        %v1311 = vsel %vm759, %v1258, 0
        %v1314 = vsel %vm759, %v1259, 0
        %v1317 = vsel %vm759, %v1260, 0
        %v1320 = vsel %vm759, %v1261, 0
        %v1323 = vsel %vm759, %v1262, 0
        %v1326 = vsel %vm759, %v1263, 0
        %v1329 = vsel %vm759, %v1264, 0
        %v1332 = vsel %vm759, %v1265, 0
        %v1335 = vsel %vm759, %v1266, 0
        %v1338 = vsel %vm759, %v1267, 0
        %v1341 = vsel %vm759, %v1268, 0
        %v1344 = vsel %vm759, %v1269, 0
        %v1347 = vsel %vm759, %v1270, 0
        %v1350 = vsel %vm759, %v1271, 0
        %v1353 = vsel %vm759, %v1272, 0
        %v1356 = vsel %vm759, %v1273, 0
        %v1359 = vsel %vm759, %v1274, 0
        %v1362 = vsel %vm759, %v1275, 0
        %v1365 = vsel %vm759, %v1276, 0
        %v1368 = vsel %vm759, %v1277, 0
        %v1371 = vsel %vm759, %v1278, 0
        %v1374 = vsel %vm759, %v1279, 0
        %1376 = vmatpush.msra.mxu0 0.0
        %1377 = vmatpush.msra.mxu0 0.0
        %1378 = vmatpush.msra.mxu0 0.0
        %1379 = vmatpush.msra.mxu0 0.0
        %1380 = vmatpush.msra.mxu0 0.0
        %1381 = vmatpush.msra.mxu0 0.0
        %1382 = vmatpush.msra.mxu0 %v858
        %1383 = vmatpush.msra.mxu0 %v725
        %1384 = vmatpush.msra.mxu0 %v724
        %1385 = vmatpush.msra.mxu0 %v723
        %1386 = vmatpush.msra.mxu0 %v722
        %1387 = vmatpush.msra.mxu0 %v721
        %1388 = vmatpush.msra.mxu0 %v720
        %1389 = vmatpush.msra.mxu0 %v719
        %1390 = vmatpush.msra.mxu0 %v718
        %1391 = vmatpush.msra.mxu0 %v717
        %1392 = vmatmul.f32.gmra.mxu0 %v1281
        %v1393 = vpop.f32.mrf.mxu0
        %v1394 = vadd.f32 0.0, %v1393
        %1395 = vmatmul.f32.gmra.mxu0 %v1284
        %v1396 = vpop.f32.mrf.mxu0
        %v1397 = vadd.f32 0.0, %v1396
        %1398 = vmatmul.f32.gmra.mxu0 %v1287
        %v1399 = vpop.f32.mrf.mxu0
        %v1400 = vadd.f32 0.0, %v1399
        %1401 = vmatmul.f32.gmra.mxu0 %v1290
        %v1402 = vpop.f32.mrf.mxu0
        %v1403 = vadd.f32 0.0, %v1402
        %1404 = vmatmul.f32.gmra.mxu0 %v1293
        %v1405 = vpop.f32.mrf.mxu0
        %v1406 = vadd.f32 0.0, %v1405
        %1407 = vmatmul.f32.gmra.mxu0 %v1296
        %v1408 = vpop.f32.mrf.mxu0
        %v1409 = vadd.f32 0.0, %v1408
        %1410 = vmatmul.f32.gmra.mxu0 %v1299
        %v1411 = vpop.f32.mrf.mxu0
        %v1412 = vadd.f32 0.0, %v1411
        %1413 = vmatmul.f32.gmra.mxu0 %v1302
        %v1414 = vpop.f32.mrf.mxu0
        %v1415 = vadd.f32 0.0, %v1414
        %1416 = vmatmul.f32.gmra.mxu0 %v1305
        %v1417 = vpop.f32.mrf.mxu0
        %v1418 = vadd.f32 0.0, %v1417
        %1419 = vmatmul.f32.gmra.mxu0 %v1308
        %v1420 = vpop.f32.mrf.mxu0
        %v1421 = vadd.f32 0.0, %v1420
        %1422 = vmatmul.f32.gmra.mxu0 %v1311
        %v1423 = vpop.f32.mrf.mxu0
        %v1424 = vadd.f32 0.0, %v1423
        %1425 = vmatmul.f32.gmra.mxu0 %v1314
        %v1426 = vpop.f32.mrf.mxu0
        %v1427 = vadd.f32 0.0, %v1426
        %1428 = vmatmul.f32.gmra.mxu0 %v1317
        %v1429 = vpop.f32.mrf.mxu0
        %v1430 = vadd.f32 0.0, %v1429
        %1431 = vmatmul.f32.gmra.mxu0 %v1320
        %v1432 = vpop.f32.mrf.mxu0
        %v1433 = vadd.f32 0.0, %v1432
        %1434 = vmatmul.f32.gmra.mxu0 %v1323
        %v1435 = vpop.f32.mrf.mxu0
        %v1436 = vadd.f32 0.0, %v1435
        %1437 = vmatmul.f32.gmra.mxu0 %v1326
        %v1438 = vpop.f32.mrf.mxu0
        %v1439 = vadd.f32 0.0, %v1438
        %1440 = vmatmul.f32.gmra.mxu0 %v1329
        %v1441 = vpop.f32.mrf.mxu0
        %v1442 = vadd.f32 0.0, %v1441
        %1443 = vmatmul.f32.gmra.mxu0 %v1332
        %v1444 = vpop.f32.mrf.mxu0
        %v1445 = vadd.f32 0.0, %v1444
        %1446 = vmatmul.f32.gmra.mxu0 %v1335
        %v1447 = vpop.f32.mrf.mxu0
        %v1448 = vadd.f32 0.0, %v1447
        %1449 = vmatmul.f32.gmra.mxu0 %v1338
        %v1450 = vpop.f32.mrf.mxu0
        %v1451 = vadd.f32 0.0, %v1450
        %1452 = vmatmul.f32.gmra.mxu0 %v1341
        %v1453 = vpop.f32.mrf.mxu0
        %v1454 = vadd.f32 0.0, %v1453
        %1455 = vmatmul.f32.gmra.mxu0 %v1344
        %v1456 = vpop.f32.mrf.mxu0
        %v1457 = vadd.f32 0.0, %v1456
        %1458 = vmatmul.f32.gmra.mxu0 %v1347
        %v1459 = vpop.f32.mrf.mxu0
        %v1460 = vadd.f32 0.0, %v1459
        %1461 = vmatmul.f32.gmra.mxu0 %v1350
        %v1462 = vpop.f32.mrf.mxu0
        %v1463 = vadd.f32 0.0, %v1462
        %1464 = vmatmul.f32.gmra.mxu0 %v1353
        %v1465 = vpop.f32.mrf.mxu0
        %v1466 = vadd.f32 0.0, %v1465
        %1467 = vmatmul.f32.gmra.mxu0 %v1356
        %v1468 = vpop.f32.mrf.mxu0
        %v1469 = vadd.f32 0.0, %v1468
        %1470 = vmatmul.f32.gmra.mxu0 %v1359
        %v1471 = vpop.f32.mrf.mxu0
        %v1472 = vadd.f32 0.0, %v1471
        %1473 = vmatmul.f32.gmra.mxu0 %v1362
        %v1474 = vpop.f32.mrf.mxu0
        %v1475 = vadd.f32 0.0, %v1474
        %1476 = vmatmul.f32.gmra.mxu0 %v1365
        %v1477 = vpop.f32.mrf.mxu0
        %v1478 = vadd.f32 0.0, %v1477
        %1479 = vmatmul.f32.gmra.mxu0 %v1368
        %v1480 = vpop.f32.mrf.mxu0
        %v1481 = vadd.f32 0.0, %v1480
        %1482 = vmatmul.f32.gmra.mxu0 %v1371
        %v1483 = vpop.f32.mrf.mxu0
        %v1484 = vadd.f32 0.0, %v1483
        %1485 = vmatmul.f32.gmra.mxu0 %v1374
        %v1486 = vpop.f32.mrf.mxu0
        %v1487 = vadd.f32 0.0, %v1486
        %1488 = vdwg.mxu0
        %v1489 = vmax.f32 %v1215, %v1394
        %v1490 = vmax.f32 %v1216, %v1397
        %v1491 = vmax.f32 %v1217, %v1400
        %v1492 = vmax.f32 %v1218, %v1403
        %v1493 = vmax.f32 %v1219, %v1406
        %v1494 = vmax.f32 %v1220, %v1409
        %v1495 = vmax.f32 %v1221, %v1412
        %v1496 = vmax.f32 %v1222, %v1415
        %v1497 = vmax.f32 %v1223, %v1418
        %v1498 = vmax.f32 %v1224, %v1421
        %v1499 = vmax.f32 %v1225, %v1424
        %v1500 = vmax.f32 %v1226, %v1427
        %v1501 = vmax.f32 %v1227, %v1430
        %v1502 = vmax.f32 %v1228, %v1433
        %v1503 = vmax.f32 %v1229, %v1436
        %v1504 = vmax.f32 %v1230, %v1439
        %v1505 = vmax.f32 %v1231, %v1442
        %v1506 = vmax.f32 %v1232, %v1445
        %v1507 = vmax.f32 %v1233, %v1448
        %v1508 = vmax.f32 %v1234, %v1451
        %v1509 = vmax.f32 %v1235, %v1454
        %v1510 = vmax.f32 %v1236, %v1457
        %v1511 = vmax.f32 %v1237, %v1460
        %v1512 = vmax.f32 %v1238, %v1463
        %v1513 = vmax.f32 %v1239, %v1466
        %v1514 = vmax.f32 %v1240, %v1469
        %v1515 = vmax.f32 %v1241, %v1472
        %v1516 = vmax.f32 %v1242, %v1475
        %v1517 = vmax.f32 %v1243, %v1478
        %v1518 = vmax.f32 %v1244, %v1481
        %v1519 = vmax.f32 %v1245, %v1484
        %v1520 = vmax.f32 %v1246, %v1487
        %s1521 = scalar_lea.vmem %s689, 768 [#allocation2]
        %v1522 = vld [vmem:[%s1521] sm:$0xff]
        %v1523 = vld [vmem:[%s1521 + $0x8] sm:$0xff]
        %v1524 = vld [vmem:[%s1521 + $0x10] sm:$0xff]
        %v1525 = vld [vmem:[%s1521 + $0x18] sm:$0xff]
        %v1526 = vld [vmem:[%s1521 + $0x20] sm:$0xff]
        %v1527 = vld [vmem:[%s1521 + $0x28] sm:$0xff]
        %v1528 = vld [vmem:[%s1521 + $0x30] sm:$0xff]
        %v1529 = vld [vmem:[%s1521 + $0x38] sm:$0xff]
        %v1530 = vld [vmem:[%s1521 + $0x40] sm:$0xff]
        %v1531 = vld [vmem:[%s1521 + $0x48] sm:$0xff]
        %v1532 = vld [vmem:[%s1521 + $0x50] sm:$0xff]
        %v1533 = vld [vmem:[%s1521 + $0x58] sm:$0xff]
        %v1534 = vld [vmem:[%s1521 + $0x60] sm:$0xff]
        %v1535 = vld [vmem:[%s1521 + $0x68] sm:$0xff]
        %v1536 = vld [vmem:[%s1521 + $0x70] sm:$0xff]
        %v1537 = vld [vmem:[%s1521 + $0x78] sm:$0xff]
        %v1538 = vld [vmem:[%s1521 + $0x80] sm:$0xff]
        %v1539 = vld [vmem:[%s1521 + $0x88] sm:$0xff]
        %v1540 = vld [vmem:[%s1521 + $0x90] sm:$0xff]
        %v1541 = vld [vmem:[%s1521 + $0x98] sm:$0xff]
        %v1542 = vld [vmem:[%s1521 + $0xa0] sm:$0xff]
        %v1543 = vld [vmem:[%s1521 + $0xa8] sm:$0xff]
        %v1544 = vld [vmem:[%s1521 + $0xb0] sm:$0xff]
        %v1545 = vld [vmem:[%s1521 + $0xb8] sm:$0xff]
        %v1546 = vld [vmem:[%s1521 + $0xc0] sm:$0xff]
        %v1547 = vld [vmem:[%s1521 + $0xc8] sm:$0xff]
        %v1548 = vld [vmem:[%s1521 + $0xd0] sm:$0xff]
        %v1549 = vld [vmem:[%s1521 + $0xd8] sm:$0xff]
        %v1550 = vld [vmem:[%s1521 + $0xe0] sm:$0xff]
        %v1551 = vld [vmem:[%s1521 + $0xe8] sm:$0xff]
        %v1552 = vld [vmem:[%s1521 + $0xf0] sm:$0xff]
        %v1553 = vld [vmem:[%s1521 + $0xf8] sm:$0xff]
        %v1555 = vsel %vm759, %v1522, 0
        %v1558 = vsel %vm759, %v1523, 0
        %v1561 = vsel %vm759, %v1524, 0
        %v1564 = vsel %vm759, %v1525, 0
        %v1567 = vsel %vm759, %v1526, 0
        %v1570 = vsel %vm759, %v1527, 0
        %v1573 = vsel %vm759, %v1528, 0
        %v1576 = vsel %vm759, %v1529, 0
        %v1579 = vsel %vm759, %v1530, 0
        %v1582 = vsel %vm759, %v1531, 0
        %v1585 = vsel %vm759, %v1532, 0
        %v1588 = vsel %vm759, %v1533, 0
        %v1591 = vsel %vm759, %v1534, 0
        %v1594 = vsel %vm759, %v1535, 0
        %v1597 = vsel %vm759, %v1536, 0
        %v1600 = vsel %vm759, %v1537, 0
        %v1603 = vsel %vm759, %v1538, 0
        %v1606 = vsel %vm759, %v1539, 0
        %v1609 = vsel %vm759, %v1540, 0
        %v1612 = vsel %vm759, %v1541, 0
        %v1615 = vsel %vm759, %v1542, 0
        %v1618 = vsel %vm759, %v1543, 0
        %v1621 = vsel %vm759, %v1544, 0
        %v1624 = vsel %vm759, %v1545, 0
        %v1627 = vsel %vm759, %v1546, 0
        %v1630 = vsel %vm759, %v1547, 0
        %v1633 = vsel %vm759, %v1548, 0
        %v1636 = vsel %vm759, %v1549, 0
        %v1639 = vsel %vm759, %v1550, 0
        %v1642 = vsel %vm759, %v1551, 0
        %v1645 = vsel %vm759, %v1552, 0
        %v1648 = vsel %vm759, %v1553, 0
        %1650 = vmatpush.msra.mxu0 0.0
        %1651 = vmatpush.msra.mxu0 0.0
        %1652 = vmatpush.msra.mxu0 0.0
        %1653 = vmatpush.msra.mxu0 0.0
        %1654 = vmatpush.msra.mxu0 0.0
        %1655 = vmatpush.msra.mxu0 0.0
        %1656 = vmatpush.msra.mxu0 %v858
        %1657 = vmatpush.msra.mxu0 %v725
        %1658 = vmatpush.msra.mxu0 %v724
        %1659 = vmatpush.msra.mxu0 %v723
        %1660 = vmatpush.msra.mxu0 %v722
        %1661 = vmatpush.msra.mxu0 %v721
        %1662 = vmatpush.msra.mxu0 %v720
        %1663 = vmatpush.msra.mxu0 %v719
        %1664 = vmatpush.msra.mxu0 %v718
        %1665 = vmatpush.msra.mxu0 %v717
        %1666 = vmatmul.f32.gmra.mxu0 %v1555
        %v1667 = vpop.f32.mrf.mxu0
        %v1668 = vadd.f32 0.0, %v1667
        %1669 = vmatmul.f32.gmra.mxu0 %v1558
        %v1670 = vpop.f32.mrf.mxu0
        %v1671 = vadd.f32 0.0, %v1670
        %1672 = vmatmul.f32.gmra.mxu0 %v1561
        %v1673 = vpop.f32.mrf.mxu0
        %v1674 = vadd.f32 0.0, %v1673
        %1675 = vmatmul.f32.gmra.mxu0 %v1564
        %v1676 = vpop.f32.mrf.mxu0
        %v1677 = vadd.f32 0.0, %v1676
        %1678 = vmatmul.f32.gmra.mxu0 %v1567
        %v1679 = vpop.f32.mrf.mxu0
        %v1680 = vadd.f32 0.0, %v1679
        %1681 = vmatmul.f32.gmra.mxu0 %v1570
        %v1682 = vpop.f32.mrf.mxu0
        %v1683 = vadd.f32 0.0, %v1682
        %1684 = vmatmul.f32.gmra.mxu0 %v1573
        %v1685 = vpop.f32.mrf.mxu0
        %v1686 = vadd.f32 0.0, %v1685
        %1687 = vmatmul.f32.gmra.mxu0 %v1576
        %v1688 = vpop.f32.mrf.mxu0
        %v1689 = vadd.f32 0.0, %v1688
        %1690 = vmatmul.f32.gmra.mxu0 %v1579
        %v1691 = vpop.f32.mrf.mxu0
        %v1692 = vadd.f32 0.0, %v1691
        %1693 = vmatmul.f32.gmra.mxu0 %v1582
        %v1694 = vpop.f32.mrf.mxu0
        %v1695 = vadd.f32 0.0, %v1694
        %1696 = vmatmul.f32.gmra.mxu0 %v1585
        %v1697 = vpop.f32.mrf.mxu0
        %v1698 = vadd.f32 0.0, %v1697
        %1699 = vmatmul.f32.gmra.mxu0 %v1588
        %v1700 = vpop.f32.mrf.mxu0
        %v1701 = vadd.f32 0.0, %v1700
        %1702 = vmatmul.f32.gmra.mxu0 %v1591
        %v1703 = vpop.f32.mrf.mxu0
        %v1704 = vadd.f32 0.0, %v1703
        %1705 = vmatmul.f32.gmra.mxu0 %v1594
        %v1706 = vpop.f32.mrf.mxu0
        %v1707 = vadd.f32 0.0, %v1706
        %1708 = vmatmul.f32.gmra.mxu0 %v1597
        %v1709 = vpop.f32.mrf.mxu0
        %v1710 = vadd.f32 0.0, %v1709
        %1711 = vmatmul.f32.gmra.mxu0 %v1600
        %v1712 = vpop.f32.mrf.mxu0
        %v1713 = vadd.f32 0.0, %v1712
        %1714 = vmatmul.f32.gmra.mxu0 %v1603
        %v1715 = vpop.f32.mrf.mxu0
        %v1716 = vadd.f32 0.0, %v1715
        %1717 = vmatmul.f32.gmra.mxu0 %v1606
        %v1718 = vpop.f32.mrf.mxu0
        %v1719 = vadd.f32 0.0, %v1718
        %1720 = vmatmul.f32.gmra.mxu0 %v1609
        %v1721 = vpop.f32.mrf.mxu0
        %v1722 = vadd.f32 0.0, %v1721
        %1723 = vmatmul.f32.gmra.mxu0 %v1612
        %v1724 = vpop.f32.mrf.mxu0
        %v1725 = vadd.f32 0.0, %v1724
        %1726 = vmatmul.f32.gmra.mxu0 %v1615
        %v1727 = vpop.f32.mrf.mxu0
        %v1728 = vadd.f32 0.0, %v1727
        %1729 = vmatmul.f32.gmra.mxu0 %v1618
        %v1730 = vpop.f32.mrf.mxu0
        %v1731 = vadd.f32 0.0, %v1730
        %1732 = vmatmul.f32.gmra.mxu0 %v1621
        %v1733 = vpop.f32.mrf.mxu0
        %v1734 = vadd.f32 0.0, %v1733
        %1735 = vmatmul.f32.gmra.mxu0 %v1624
        %v1736 = vpop.f32.mrf.mxu0
        %v1737 = vadd.f32 0.0, %v1736
        %1738 = vmatmul.f32.gmra.mxu0 %v1627
        %v1739 = vpop.f32.mrf.mxu0
        %v1740 = vadd.f32 0.0, %v1739
        %1741 = vmatmul.f32.gmra.mxu0 %v1630
        %v1742 = vpop.f32.mrf.mxu0
        %v1743 = vadd.f32 0.0, %v1742
        %1744 = vmatmul.f32.gmra.mxu0 %v1633
        %v1745 = vpop.f32.mrf.mxu0
        %v1746 = vadd.f32 0.0, %v1745
        %1747 = vmatmul.f32.gmra.mxu0 %v1636
        %v1748 = vpop.f32.mrf.mxu0
        %v1749 = vadd.f32 0.0, %v1748
        %1750 = vmatmul.f32.gmra.mxu0 %v1639
        %v1751 = vpop.f32.mrf.mxu0
        %v1752 = vadd.f32 0.0, %v1751
        %1753 = vmatmul.f32.gmra.mxu0 %v1642
        %v1754 = vpop.f32.mrf.mxu0
        %v1755 = vadd.f32 0.0, %v1754
        %1756 = vmatmul.f32.gmra.mxu0 %v1645
        %v1757 = vpop.f32.mrf.mxu0
        %v1758 = vadd.f32 0.0, %v1757
        %1759 = vmatmul.f32.gmra.mxu0 %v1648
        %v1760 = vpop.f32.mrf.mxu0
        %v1761 = vadd.f32 0.0, %v1760
        %1762 = vdwg.mxu0
        %v1763 = vmax.f32 %v1489, %v1668
        %v1764 = vmax.f32 %v1490, %v1671
        %v1765 = vmax.f32 %v1491, %v1674
        %v1766 = vmax.f32 %v1492, %v1677
        %v1767 = vmax.f32 %v1493, %v1680
        %v1768 = vmax.f32 %v1494, %v1683
        %v1769 = vmax.f32 %v1495, %v1686
        %v1770 = vmax.f32 %v1496, %v1689
        %v1771 = vmax.f32 %v1497, %v1692
        %v1772 = vmax.f32 %v1498, %v1695
        %v1773 = vmax.f32 %v1499, %v1698
        %v1774 = vmax.f32 %v1500, %v1701
        %v1775 = vmax.f32 %v1501, %v1704
        %v1776 = vmax.f32 %v1502, %v1707
        %v1777 = vmax.f32 %v1503, %v1710
        %v1778 = vmax.f32 %v1504, %v1713
        %v1779 = vmax.f32 %v1505, %v1716
        %v1780 = vmax.f32 %v1506, %v1719
        %v1781 = vmax.f32 %v1507, %v1722
        %v1782 = vmax.f32 %v1508, %v1725
        %v1783 = vmax.f32 %v1509, %v1728
        %v1784 = vmax.f32 %v1510, %v1731
        %v1785 = vmax.f32 %v1511, %v1734
        %v1786 = vmax.f32 %v1512, %v1737
        %v1787 = vmax.f32 %v1513, %v1740
        %v1788 = vmax.f32 %v1514, %v1743
        %v1789 = vmax.f32 %v1515, %v1746
        %v1790 = vmax.f32 %v1516, %v1749
        %v1791 = vmax.f32 %v1517, %v1752
        %v1792 = vmax.f32 %v1518, %v1755
        %v1793 = vmax.f32 %v1519, %v1758
        %v1794 = vmax.f32 %v1520, %v1761
        %v1795 = vld [vmem:[%s2] sm:$0x1]
        %v1797 = vperm.slane %v1795, 0
        %v1799 = vadd.f32 %v1763, %v1797
        %v1800 = vadd.f32 %v1764, %v1797
        %v1801 = vadd.f32 %v1765, %v1797
        %v1802 = vadd.f32 %v1766, %v1797
        %v1803 = vadd.f32 %v1767, %v1797
        %v1804 = vadd.f32 %v1768, %v1797
        %v1805 = vadd.f32 %v1769, %v1797
        %v1806 = vadd.f32 %v1770, %v1797
        %v1807 = vadd.f32 %v1771, %v1797
        %v1808 = vadd.f32 %v1772, %v1797
        %v1809 = vadd.f32 %v1773, %v1797
        %v1810 = vadd.f32 %v1774, %v1797
        %v1811 = vadd.f32 %v1775, %v1797
        %v1812 = vadd.f32 %v1776, %v1797
        %v1813 = vadd.f32 %v1777, %v1797
        %v1814 = vadd.f32 %v1778, %v1797
        %v1815 = vadd.f32 %v1779, %v1797
        %v1816 = vadd.f32 %v1780, %v1797
        %v1817 = vadd.f32 %v1781, %v1797
        %v1818 = vadd.f32 %v1782, %v1797
        %v1819 = vadd.f32 %v1783, %v1797
        %v1820 = vadd.f32 %v1784, %v1797
        %v1821 = vadd.f32 %v1785, %v1797
        %v1822 = vadd.f32 %v1786, %v1797
        %v1823 = vadd.f32 %v1787, %v1797
        %v1824 = vadd.f32 %v1788, %v1797
        %v1825 = vadd.f32 %v1789, %v1797
        %v1826 = vadd.f32 %v1790, %v1797
        %v1827 = vadd.f32 %v1791, %v1797
        %v1828 = vadd.f32 %v1792, %v1797
        %v1829 = vadd.f32 %v1793, %v1797
        %v1830 = vadd.f32 %v1794, %v1797
        %v1831 = vmax.f32 %v1799, 0.0
        %v1832 = vmax.f32 %v1800, 0.0
        %v1833 = vmax.f32 %v1801, 0.0
        %v1834 = vmax.f32 %v1802, 0.0
        %v1835 = vmax.f32 %v1803, 0.0
        %v1836 = vmax.f32 %v1804, 0.0
        %v1837 = vmax.f32 %v1805, 0.0
        %v1838 = vmax.f32 %v1806, 0.0
        %v1839 = vmax.f32 %v1807, 0.0
        %v1840 = vmax.f32 %v1808, 0.0
        %v1841 = vmax.f32 %v1809, 0.0
        %v1842 = vmax.f32 %v1810, 0.0
        %v1843 = vmax.f32 %v1811, 0.0
        %v1844 = vmax.f32 %v1812, 0.0
        %v1845 = vmax.f32 %v1813, 0.0
        %v1846 = vmax.f32 %v1814, 0.0
        %v1847 = vmax.f32 %v1815, 0.0
        %v1848 = vmax.f32 %v1816, 0.0
        %v1849 = vmax.f32 %v1817, 0.0
        %v1850 = vmax.f32 %v1818, 0.0
        %v1851 = vmax.f32 %v1819, 0.0
        %v1852 = vmax.f32 %v1820, 0.0
        %v1853 = vmax.f32 %v1821, 0.0
        %v1854 = vmax.f32 %v1822, 0.0
        %v1855 = vmax.f32 %v1823, 0.0
        %v1856 = vmax.f32 %v1824, 0.0
        %v1857 = vmax.f32 %v1825, 0.0
        %v1858 = vmax.f32 %v1826, 0.0
        %v1859 = vmax.f32 %v1827, 0.0
        %v1860 = vmax.f32 %v1828, 0.0
        %v1861 = vmax.f32 %v1829, 0.0
        %v1862 = vmax.f32 %v1830, 0.0
        %vm1863 = vcmask 130048
        %1864 = vst.msk [vmem:[%s715] sm:$0xff] %vm1863, %v1831
        %1865 = vst.msk [vmem:[%s715 + $0x8] sm:$0xff] %vm1863, %v1832
        %1866 = vst.msk [vmem:[%s715 + $0x10] sm:$0xff] %vm1863, %v1833
        %1867 = vst.msk [vmem:[%s715 + $0x18] sm:$0xff] %vm1863, %v1834
        %1868 = vst.msk [vmem:[%s715 + $0x20] sm:$0xff] %vm1863, %v1835
        %1869 = vst.msk [vmem:[%s715 + $0x28] sm:$0xff] %vm1863, %v1836
        %1870 = vst.msk [vmem:[%s715 + $0x30] sm:$0xff] %vm1863, %v1837
        %1871 = vst.msk [vmem:[%s715 + $0x38] sm:$0xff] %vm1863, %v1838
        %1872 = vst.msk [vmem:[%s715 + $0x40] sm:$0xff] %vm1863, %v1839
        %1873 = vst.msk [vmem:[%s715 + $0x48] sm:$0xff] %vm1863, %v1840
        %1874 = vst.msk [vmem:[%s715 + $0x50] sm:$0xff] %vm1863, %v1841
        %1875 = vst.msk [vmem:[%s715 + $0x58] sm:$0xff] %vm1863, %v1842
        %1876 = vst.msk [vmem:[%s715 + $0x60] sm:$0xff] %vm1863, %v1843
        %1877 = vst.msk [vmem:[%s715 + $0x68] sm:$0xff] %vm1863, %v1844
        %1878 = vst.msk [vmem:[%s715 + $0x70] sm:$0xff] %vm1863, %v1845
        %1879 = vst.msk [vmem:[%s715 + $0x78] sm:$0xff] %vm1863, %v1846
        %1880 = vst.msk [vmem:[%s715 + $0x80] sm:$0xff] %vm1863, %v1847
        %1881 = vst.msk [vmem:[%s715 + $0x88] sm:$0xff] %vm1863, %v1848
        %1882 = vst.msk [vmem:[%s715 + $0x90] sm:$0xff] %vm1863, %v1849
        %1883 = vst.msk [vmem:[%s715 + $0x98] sm:$0xff] %vm1863, %v1850
        %1884 = vst.msk [vmem:[%s715 + $0xa0] sm:$0xff] %vm1863, %v1851
        %1885 = vst.msk [vmem:[%s715 + $0xa8] sm:$0xff] %vm1863, %v1852
        %1886 = vst.msk [vmem:[%s715 + $0xb0] sm:$0xff] %vm1863, %v1853
        %1887 = vst.msk [vmem:[%s715 + $0xb8] sm:$0xff] %vm1863, %v1854
        %1888 = vst.msk [vmem:[%s715 + $0xc0] sm:$0xff] %vm1863, %v1855
        %1889 = vst.msk [vmem:[%s715 + $0xc8] sm:$0xff] %vm1863, %v1856
        %1890 = vst.msk [vmem:[%s715 + $0xd0] sm:$0xff] %vm1863, %v1857
        %1891 = vst.msk [vmem:[%s715 + $0xd8] sm:$0xff] %vm1863, %v1858
        %1892 = vst.msk [vmem:[%s715 + $0xe0] sm:$0xff] %vm1863, %v1859
        %1893 = vst.msk [vmem:[%s715 + $0xe8] sm:$0xff] %vm1863, %v1860
        %1894 = vst.msk [vmem:[%s715 + $0xf0] sm:$0xff] %vm1863, %v1861
        %1895 = vst.msk [vmem:[%s715 + $0xf8] sm:$0xff] %vm1863, %v1862
        %s1896 = smul.u32 32, %s14
        %p1897 = scmp.lt.s32.totalorder %s1896, 63
        %s1898 = scalar_select %p1897, %s1896, 63
        %s1899 = smul.addr %s1898, 8
        %s1900 = scalar_lea.vmem %s3, %s1899
        // Predicated region
        $region71: #{cnn_cifar_forward.3} parent=65 // pred_check
          %p1901 = pneg %p100
        $region72: #{cnn_cifar_forward.3} parent=65 // pred_check_branch
          %1903 = sbr.rel (%p1901) target = $region74
        $region73: #{cnn_cifar_forward.3} parent=65 // pred_region
          %s1904 = smul.u32 32, %s14
        $region74: #{cnn_cifar_forward.3} parent=65 // pred_fallthru
          _
      $region66: #{cnn_cifar_forward.3} parent=5 // pred_fallthru
        _
      %p1905 = scmp.le.s32.totalorder 2, %s9
      // Predicated region
      $region75: #{cnn_cifar_forward.3} parent=5 // pred_check
        %p1906 = pneg %p1905
      $region76: #{cnn_cifar_forward.3} parent=5 // pred_check_branch
        %1908 = sbr.rel (%p1906) target = $region78
      $region77: #{cnn_cifar_forward.3} parent=5 // pred_region
        %s1909 = ssub.s32 %s9, 2
        // Predicated region
        $region79: #{cnn_cifar_forward.3} parent=77 // pred_check
          %p1910 = pneg %p106
        $region80: #{cnn_cifar_forward.3} parent=77 // pred_check_branch
          %1912 = sbr.rel (%p1910) target = $region82
        $region81: #{cnn_cifar_forward.3} parent=77 // pred_region
          %s1913 = smul.u32 32, %s15
          %p1914 = scmp.lt.s32.totalorder %s1913, 63
          %s1915 = scalar_select %p1914, %s1913, 63
          %s1916 = smul.addr %s1915, 8
          %s1917 = scalar_lea.vmem %s3, %s1916
        $region82: #{cnn_cifar_forward.3} parent=77 // pred_fallthru
          _
      $region78: #{cnn_cifar_forward.3} parent=5 // pred_fallthru
        _
    $region6: #{cnn_cifar_forward.3} parent=1 // loop_footer
      %s13 = sadd.s32 1, %s9
    $region7: #{cnn_cifar_forward.3} parent=1 // loop_footer_branch
      %8 = sbr.rel target = $region3
    $region8: #{cnn_cifar_forward.3} parent=1 // loop_exit
      _

// kernel: cnn_cifar_forward.4
$region0: #{cnn_cifar_forward.4}
  #allocation0 [shape = 'u32[]', space=smem, size = 0x4, offset = 0x4, fixed_abs, tag = 'smem constant byte address 0x4 - core index']
  #allocation1 [shape = 'u32[72,128]{1,0:T(1,128)}', space=vmem, size = 0x9000, scoped, tag = 'internal scratch']
  %s0 = inlined_call_operand.vmem [shape: f32[4,128,400], index: 0, kind: input, shape index: {}]
  %s1 = inlined_call_operand.vmem [shape: f32[400,32], index: 1, kind: input, shape index: {}]
  %s2 = inlined_call_operand.vmem [shape: f32[1,32], index: 2, kind: input, shape index: {}]
  %s3 = inlined_call_operand.vmem [shape: f32[128,32], index: 3, kind: output, shape index: {}]
  %s4 = sld [smem:[#allocation0]]
  $region22: #{cnn_cifar_forward.4} parent=0
    _
  %s6 = ssub.s32 1, %s4
  %s7 = scalar_select 0, %s6, %s4
  // Predicated region
  $region2: #{cnn_cifar_forward.4} parent=0 // pred_check
    _
  $region3: #{cnn_cifar_forward.4} parent=0 // pred_check_branch
    %9 = sbr.rel (0) target = $region5
  $region4: #{cnn_cifar_forward.4} parent=0 // pred_region
    _
  $region5: #{cnn_cifar_forward.4} parent=0 // pred_fallthru
    _
  // Predicated region
  $region6: #{cnn_cifar_forward.4} parent=0 // pred_check
    _
  $region7: #{cnn_cifar_forward.4} parent=0 // pred_check_branch
    %11 = sbr.rel (0) target = $region9
  $region8: #{cnn_cifar_forward.4} parent=0 // pred_region
    _
  $region9: #{cnn_cifar_forward.4} parent=0 // pred_fallthru
    _
  // Predicated region
  $region10: #{cnn_cifar_forward.4} parent=0 // pred_check
    _
  $region11: #{cnn_cifar_forward.4} parent=0 // pred_check_branch
    %13 = sbr.rel (0) target = $region13
  $region12: #{cnn_cifar_forward.4} parent=0 // pred_region
    _
  $region13: #{cnn_cifar_forward.4} parent=0 // pred_fallthru
    _
  %v14 = vld [vmem:[%s1] sm:$0xff]
  %v15 = vld [vmem:[%s1 + $0x8] sm:$0xff]
  %v16 = vld [vmem:[%s1 + $0x10] sm:$0xff]
  %v17 = vld [vmem:[%s1 + $0x18] sm:$0xff]
  %v18 = vld [vmem:[%s1 + $0x20] sm:$0xff]
  %v19 = vld [vmem:[%s1 + $0x28] sm:$0xff]
  %v20 = vld [vmem:[%s1 + $0x30] sm:$0xff]
  %v21 = vld [vmem:[%s1 + $0x38] sm:$0xff]
  %v22 = vld [vmem:[%s1 + $0x40] sm:$0xff]
  %v23 = vld [vmem:[%s1 + $0x48] sm:$0xff]
  %v24 = vld [vmem:[%s1 + $0x50] sm:$0xff]
  %v25 = vld [vmem:[%s1 + $0x58] sm:$0xff]
  %v26 = vld [vmem:[%s1 + $0x60] sm:$0xff]
  %v27 = vld [vmem:[%s1 + $0x68] sm:$0xff]
  %v28 = vld [vmem:[%s1 + $0x70] sm:$0xff]
  %v29 = vld [vmem:[%s1 + $0x78] sm:$0xff]
  %v30 = vld [vmem:[%s1 + $0x80] sm:$0xff]
  %v31 = vld [vmem:[%s1 + $0x88] sm:$0xff]
  %v32 = vld [vmem:[%s1 + $0x90] sm:$0xff]
  %v33 = vld [vmem:[%s1 + $0x98] sm:$0xff]
  %v34 = vld [vmem:[%s1 + $0xa0] sm:$0xff]
  %v35 = vld [vmem:[%s1 + $0xa8] sm:$0xff]
  %v36 = vld [vmem:[%s1 + $0xb0] sm:$0xff]
  %v37 = vld [vmem:[%s1 + $0xb8] sm:$0xff]
  %v38 = vld [vmem:[%s1 + $0xc0] sm:$0xff]
  %v39 = vld [vmem:[%s1 + $0xc8] sm:$0xff]
  %v40 = vld [vmem:[%s1 + $0xd0] sm:$0xff]
  %v41 = vld [vmem:[%s1 + $0xd8] sm:$0xff]
  %v42 = vld [vmem:[%s1 + $0xe0] sm:$0xff]
  %v43 = vld [vmem:[%s1 + $0xe8] sm:$0xff]
  %v44 = vld [vmem:[%s1 + $0xf0] sm:$0xff]
  %v45 = vld [vmem:[%s1 + $0xf8] sm:$0xff]
  %v46 = vld [vmem:[%s1 + $0x100] sm:$0xff]
  %v47 = vld [vmem:[%s1 + $0x108] sm:$0xff]
  %v48 = vld [vmem:[%s1 + $0x110] sm:$0xff]
  %v49 = vld [vmem:[%s1 + $0x118] sm:$0xff]
  %v50 = vld [vmem:[%s1 + $0x120] sm:$0xff]
  %v51 = vld [vmem:[%s1 + $0x128] sm:$0xff]
  %v52 = vld [vmem:[%s1 + $0x130] sm:$0xff]
  %v53 = vld [vmem:[%s1 + $0x138] sm:$0xff]
  %v54 = vld [vmem:[%s1 + $0x140] sm:$0xff]
  %v55 = vld [vmem:[%s1 + $0x148] sm:$0xff]
  %v56 = vld [vmem:[%s1 + $0x150] sm:$0xff]
  %v57 = vld [vmem:[%s1 + $0x158] sm:$0xff]
  %v58 = vld [vmem:[%s1 + $0x160] sm:$0xff]
  %v59 = vld [vmem:[%s1 + $0x168] sm:$0xff]
  %v60 = vld [vmem:[%s1 + $0x170] sm:$0xff]
  %v61 = vld [vmem:[%s1 + $0x178] sm:$0xff]
  %v62 = vld [vmem:[%s1 + $0x180] sm:$0xff]
  %v63 = vld [vmem:[%s1 + $0x188] sm:$0xff]
  %v64 = vld [vmem:[%s0] sm:$0xff]
  %v65 = vld [vmem:[%s0 + $0x8] sm:$0xff]
  %v66 = vld [vmem:[%s0 + $0x10] sm:$0xff]
  %v67 = vld [vmem:[%s0 + $0x18] sm:$0xff]
  %v68 = vld [vmem:[%s0 + $0x20] sm:$0xff]
  %v69 = vld [vmem:[%s0 + $0x28] sm:$0xff]
  %v70 = vld [vmem:[%s0 + $0x30] sm:$0xff]
  %v71 = vld [vmem:[%s0 + $0x38] sm:$0xff]
  %v72 = vld [vmem:[%s0 + $0x40] sm:$0xff]
  %v73 = vld [vmem:[%s0 + $0x48] sm:$0xff]
  %v74 = vld [vmem:[%s0 + $0x50] sm:$0xff]
  %v75 = vld [vmem:[%s0 + $0x58] sm:$0xff]
  %v76 = vld [vmem:[%s0 + $0x60] sm:$0xff]
  %v77 = vld [vmem:[%s0 + $0x68] sm:$0xff]
  %v78 = vld [vmem:[%s0 + $0x70] sm:$0xff]
  %v79 = vld [vmem:[%s0 + $0x78] sm:$0xff]
  %v80 = vld [vmem:[%s0 + $0x80] sm:$0xff]
  %v81 = vld [vmem:[%s0 + $0x88] sm:$0xff]
  %v82 = vld [vmem:[%s0 + $0x90] sm:$0xff]
  %v83 = vld [vmem:[%s0 + $0x98] sm:$0xff]
  %v84 = vld [vmem:[%s0 + $0xa0] sm:$0xff]
  %v85 = vld [vmem:[%s0 + $0xa8] sm:$0xff]
  %v86 = vld [vmem:[%s0 + $0xb0] sm:$0xff]
  %v87 = vld [vmem:[%s0 + $0xb8] sm:$0xff]
  %v88 = vld [vmem:[%s0 + $0xc0] sm:$0xff]
  %v89 = vld [vmem:[%s0 + $0xc8] sm:$0xff]
  %v90 = vld [vmem:[%s0 + $0xd0] sm:$0xff]
  %v91 = vld [vmem:[%s0 + $0xd8] sm:$0xff]
  %v92 = vld [vmem:[%s0 + $0xe0] sm:$0xff]
  %v93 = vld [vmem:[%s0 + $0xe8] sm:$0xff]
  %v94 = vld [vmem:[%s0 + $0xf0] sm:$0xff]
  %v95 = vld [vmem:[%s0 + $0xf8] sm:$0xff]
  %v96 = vld [vmem:[%s0 + $0x100] sm:$0xff]
  %v97 = vld [vmem:[%s0 + $0x108] sm:$0xff]
  %v98 = vld [vmem:[%s0 + $0x110] sm:$0xff]
  %v99 = vld [vmem:[%s0 + $0x118] sm:$0xff]
  %v100 = vld [vmem:[%s0 + $0x120] sm:$0xff]
  %v101 = vld [vmem:[%s0 + $0x128] sm:$0xff]
  %v102 = vld [vmem:[%s0 + $0x130] sm:$0xff]
  %v103 = vld [vmem:[%s0 + $0x138] sm:$0xff]
  %v104 = vld [vmem:[%s0 + $0x140] sm:$0xff]
  %v105 = vld [vmem:[%s0 + $0x148] sm:$0xff]
  %v106 = vld [vmem:[%s0 + $0x150] sm:$0xff]
  %v107 = vld [vmem:[%s0 + $0x158] sm:$0xff]
  %v108 = vld [vmem:[%s0 + $0x160] sm:$0xff]
  %v109 = vld [vmem:[%s0 + $0x168] sm:$0xff]
  %v110 = vld [vmem:[%s0 + $0x170] sm:$0xff]
  %v111 = vld [vmem:[%s0 + $0x178] sm:$0xff]
  %v112 = vld [vmem:[%s0 + $0x180] sm:$0xff]
  %v113 = vld [vmem:[%s0 + $0x188] sm:$0xff]
  %v114 = vld [vmem:[%s0 + $0x190] sm:$0xff]
  %v115 = vld [vmem:[%s0 + $0x198] sm:$0xff]
  %v116 = vld [vmem:[%s0 + $0x1a0] sm:$0xff]
  %v117 = vld [vmem:[%s0 + $0x1a8] sm:$0xff]
  %v118 = vld [vmem:[%s0 + $0x1b0] sm:$0xff]
  %v119 = vld [vmem:[%s0 + $0x1b8] sm:$0xff]
  %v120 = vld [vmem:[%s0 + $0x1c0] sm:$0xff]
  %v121 = vld [vmem:[%s0 + $0x1c8] sm:$0xff]
  %v122 = vld [vmem:[%s0 + $0x1d0] sm:$0xff]
  %v123 = vld [vmem:[%s0 + $0x1d8] sm:$0xff]
  %v124 = vld [vmem:[%s0 + $0x1e0] sm:$0xff]
  %v125 = vld [vmem:[%s0 + $0x1e8] sm:$0xff]
  %v126 = vld [vmem:[%s0 + $0x1f0] sm:$0xff]
  %v127 = vld [vmem:[%s0 + $0x1f8] sm:$0xff]
  %vm128 = vcmask 130048
  %v130 = vsel %vm128, %v67, 0
  %v133 = vsel %vm128, %v71, 0
  %v136 = vsel %vm128, %v75, 0
  %v139 = vsel %vm128, %v79, 0
  %v142 = vsel %vm128, %v83, 0
  %v145 = vsel %vm128, %v87, 0
  %v148 = vsel %vm128, %v91, 0
  %v151 = vsel %vm128, %v95, 0
  %v154 = vsel %vm128, %v99, 0
  %v157 = vsel %vm128, %v103, 0
  %v160 = vsel %vm128, %v107, 0
  %v163 = vsel %vm128, %v111, 0
  %v166 = vsel %vm128, %v115, 0
  %v169 = vsel %vm128, %v119, 0
  %v172 = vsel %vm128, %v123, 0
  %v175 = vsel %vm128, %v127, 0
  %177 = vmatpush.msra.mxu0 %v29
  %178 = vmatpush.msra.mxu0 %v28
  %179 = vmatpush.msra.mxu0 %v27
  %180 = vmatpush.msra.mxu0 %v26
  %181 = vmatpush.msra.mxu0 %v25
  %182 = vmatpush.msra.mxu0 %v24
  %183 = vmatpush.msra.mxu0 %v23
  %184 = vmatpush.msra.mxu0 %v22
  %185 = vmatpush.msra.mxu0 %v21
  %186 = vmatpush.msra.mxu0 %v20
  %187 = vmatpush.msra.mxu0 %v19
  %188 = vmatpush.msra.mxu0 %v18
  %189 = vmatpush.msra.mxu0 %v17
  %190 = vmatpush.msra.mxu0 %v16
  %191 = vmatpush.msra.mxu0 %v15
  %192 = vmatpush.msra.mxu0 %v14
  %193 = vmatmul.f32.gmra.mxu0 %v64
  %v194 = vpop.f32.mrf.mxu0
  %v195 = vadd.f32 0.0, %v194
  %196 = vmatmul.f32.gmra.mxu0 %v68
  %v197 = vpop.f32.mrf.mxu0
  %v198 = vadd.f32 0.0, %v197
  %199 = vmatmul.f32.gmra.mxu0 %v72
  %v200 = vpop.f32.mrf.mxu0
  %v201 = vadd.f32 0.0, %v200
  %202 = vmatmul.f32.gmra.mxu0 %v76
  %v203 = vpop.f32.mrf.mxu0
  %v204 = vadd.f32 0.0, %v203
  %205 = vmatmul.f32.gmra.mxu0 %v80
  %v206 = vpop.f32.mrf.mxu0
  %v207 = vadd.f32 0.0, %v206
  %208 = vmatmul.f32.gmra.mxu0 %v84
  %v209 = vpop.f32.mrf.mxu0
  %v210 = vadd.f32 0.0, %v209
  %211 = vmatmul.f32.gmra.mxu0 %v88
  %v212 = vpop.f32.mrf.mxu0
  %v213 = vadd.f32 0.0, %v212
  %214 = vmatmul.f32.gmra.mxu0 %v92
  %v215 = vpop.f32.mrf.mxu0
  %v216 = vadd.f32 0.0, %v215
  %217 = vmatmul.f32.gmra.mxu0 %v96
  %v218 = vpop.f32.mrf.mxu0
  %v219 = vadd.f32 0.0, %v218
  %220 = vmatmul.f32.gmra.mxu0 %v100
  %v221 = vpop.f32.mrf.mxu0
  %v222 = vadd.f32 0.0, %v221
  %223 = vmatmul.f32.gmra.mxu0 %v104
  %v224 = vpop.f32.mrf.mxu0
  %v225 = vadd.f32 0.0, %v224
  %226 = vmatmul.f32.gmra.mxu0 %v108
  %v227 = vpop.f32.mrf.mxu0
  %v228 = vadd.f32 0.0, %v227
  %229 = vmatmul.f32.gmra.mxu0 %v112
  %v230 = vpop.f32.mrf.mxu0
  %v231 = vadd.f32 0.0, %v230
  %232 = vmatmul.f32.gmra.mxu0 %v116
  %v233 = vpop.f32.mrf.mxu0
  %v234 = vadd.f32 0.0, %v233
  %235 = vmatmul.f32.gmra.mxu0 %v120
  %v236 = vpop.f32.mrf.mxu0
  %v237 = vadd.f32 0.0, %v236
  %238 = vmatmul.f32.gmra.mxu0 %v124
  %v239 = vpop.f32.mrf.mxu0
  %v240 = vadd.f32 0.0, %v239
  %241 = vdwg.mxu0
  %242 = vmatpush.msra.mxu0 %v45
  %243 = vmatpush.msra.mxu0 %v44
  %244 = vmatpush.msra.mxu0 %v43
  %245 = vmatpush.msra.mxu0 %v42
  %246 = vmatpush.msra.mxu0 %v41
  %247 = vmatpush.msra.mxu0 %v40
  %248 = vmatpush.msra.mxu0 %v39
  %249 = vmatpush.msra.mxu0 %v38
  %250 = vmatpush.msra.mxu0 %v37
  %251 = vmatpush.msra.mxu0 %v36
  %252 = vmatpush.msra.mxu0 %v35
  %253 = vmatpush.msra.mxu0 %v34
  %254 = vmatpush.msra.mxu0 %v33
  %255 = vmatpush.msra.mxu0 %v32
  %256 = vmatpush.msra.mxu0 %v31
  %257 = vmatpush.msra.mxu0 %v30
  %258 = vmatmul.f32.gmra.mxu0 %v65
  %v259 = vpop.f32.mrf.mxu0
  %v260 = vadd.f32 %v195, %v259
  %261 = vmatmul.f32.gmra.mxu0 %v69
  %v262 = vpop.f32.mrf.mxu0
  %v263 = vadd.f32 %v198, %v262
  %264 = vmatmul.f32.gmra.mxu0 %v73
  %v265 = vpop.f32.mrf.mxu0
  %v266 = vadd.f32 %v201, %v265
  %267 = vmatmul.f32.gmra.mxu0 %v77
  %v268 = vpop.f32.mrf.mxu0
  %v269 = vadd.f32 %v204, %v268
  %270 = vmatmul.f32.gmra.mxu0 %v81
  %v271 = vpop.f32.mrf.mxu0
  %v272 = vadd.f32 %v207, %v271
  %273 = vmatmul.f32.gmra.mxu0 %v85
  %v274 = vpop.f32.mrf.mxu0
  %v275 = vadd.f32 %v210, %v274
  %276 = vmatmul.f32.gmra.mxu0 %v89
  %v277 = vpop.f32.mrf.mxu0
  %v278 = vadd.f32 %v213, %v277
  %279 = vmatmul.f32.gmra.mxu0 %v93
  %v280 = vpop.f32.mrf.mxu0
  %v281 = vadd.f32 %v216, %v280
  %282 = vmatmul.f32.gmra.mxu0 %v97
  %v283 = vpop.f32.mrf.mxu0
  %v284 = vadd.f32 %v219, %v283
  %285 = vmatmul.f32.gmra.mxu0 %v101
  %v286 = vpop.f32.mrf.mxu0
  %v287 = vadd.f32 %v222, %v286
  %288 = vmatmul.f32.gmra.mxu0 %v105
  %v289 = vpop.f32.mrf.mxu0
  %v290 = vadd.f32 %v225, %v289
  %291 = vmatmul.f32.gmra.mxu0 %v109
  %v292 = vpop.f32.mrf.mxu0
  %v293 = vadd.f32 %v228, %v292
  %294 = vmatmul.f32.gmra.mxu0 %v113
  %v295 = vpop.f32.mrf.mxu0
  %v296 = vadd.f32 %v231, %v295
  %297 = vmatmul.f32.gmra.mxu0 %v117
  %v298 = vpop.f32.mrf.mxu0
  %v299 = vadd.f32 %v234, %v298
  %300 = vmatmul.f32.gmra.mxu0 %v121
  %v301 = vpop.f32.mrf.mxu0
  %v302 = vadd.f32 %v237, %v301
  %303 = vmatmul.f32.gmra.mxu0 %v125
  %v304 = vpop.f32.mrf.mxu0
  %v305 = vadd.f32 %v240, %v304
  %306 = vdwg.mxu0
  %307 = vmatpush.msra.mxu0 %v61
  %308 = vmatpush.msra.mxu0 %v60
  %309 = vmatpush.msra.mxu0 %v59
  %310 = vmatpush.msra.mxu0 %v58
  %311 = vmatpush.msra.mxu0 %v57
  %312 = vmatpush.msra.mxu0 %v56
  %313 = vmatpush.msra.mxu0 %v55
  %314 = vmatpush.msra.mxu0 %v54
  %315 = vmatpush.msra.mxu0 %v53
  %316 = vmatpush.msra.mxu0 %v52
  %317 = vmatpush.msra.mxu0 %v51
  %318 = vmatpush.msra.mxu0 %v50
  %319 = vmatpush.msra.mxu0 %v49
  %320 = vmatpush.msra.mxu0 %v48
  %321 = vmatpush.msra.mxu0 %v47
  %322 = vmatpush.msra.mxu0 %v46
  %323 = vmatmul.f32.gmra.mxu0 %v66
  %v324 = vpop.f32.mrf.mxu0
  %v325 = vadd.f32 %v260, %v324
  %326 = vmatmul.f32.gmra.mxu0 %v70
  %v327 = vpop.f32.mrf.mxu0
  %v328 = vadd.f32 %v263, %v327
  %329 = vmatmul.f32.gmra.mxu0 %v74
  %v330 = vpop.f32.mrf.mxu0
  %v331 = vadd.f32 %v266, %v330
  %332 = vmatmul.f32.gmra.mxu0 %v78
  %v333 = vpop.f32.mrf.mxu0
  %v334 = vadd.f32 %v269, %v333
  %335 = vmatmul.f32.gmra.mxu0 %v82
  %v336 = vpop.f32.mrf.mxu0
  %v337 = vadd.f32 %v272, %v336
  %338 = vmatmul.f32.gmra.mxu0 %v86
  %v339 = vpop.f32.mrf.mxu0
  %v340 = vadd.f32 %v275, %v339
  %341 = vmatmul.f32.gmra.mxu0 %v90
  %v342 = vpop.f32.mrf.mxu0
  %v343 = vadd.f32 %v278, %v342
  %344 = vmatmul.f32.gmra.mxu0 %v94
  %v345 = vpop.f32.mrf.mxu0
  %v346 = vadd.f32 %v281, %v345
  %347 = vmatmul.f32.gmra.mxu0 %v98
  %v348 = vpop.f32.mrf.mxu0
  %v349 = vadd.f32 %v284, %v348
  %350 = vmatmul.f32.gmra.mxu0 %v102
  %v351 = vpop.f32.mrf.mxu0
  %v352 = vadd.f32 %v287, %v351
  %353 = vmatmul.f32.gmra.mxu0 %v106
  %v354 = vpop.f32.mrf.mxu0
  %v355 = vadd.f32 %v290, %v354
  %356 = vmatmul.f32.gmra.mxu0 %v110
  %v357 = vpop.f32.mrf.mxu0
  %v358 = vadd.f32 %v293, %v357
  %359 = vmatmul.f32.gmra.mxu0 %v114
  %v360 = vpop.f32.mrf.mxu0
  %v361 = vadd.f32 %v296, %v360
  %362 = vmatmul.f32.gmra.mxu0 %v118
  %v363 = vpop.f32.mrf.mxu0
  %v364 = vadd.f32 %v299, %v363
  %365 = vmatmul.f32.gmra.mxu0 %v122
  %v366 = vpop.f32.mrf.mxu0
  %v367 = vadd.f32 %v302, %v366
  %368 = vmatmul.f32.gmra.mxu0 %v126
  %v369 = vpop.f32.mrf.mxu0
  %v370 = vadd.f32 %v305, %v369
  %371 = vdwg.mxu0
  %372 = vmatpush.msra.mxu0 0.0
  %373 = vmatpush.msra.mxu0 0.0
  %374 = vmatpush.msra.mxu0 0.0
  %375 = vmatpush.msra.mxu0 0.0
  %376 = vmatpush.msra.mxu0 0.0
  %377 = vmatpush.msra.mxu0 0.0
  %378 = vmatpush.msra.mxu0 0.0
  %379 = vmatpush.msra.mxu0 0.0
  %380 = vmatpush.msra.mxu0 0.0
  %381 = vmatpush.msra.mxu0 0.0
  %382 = vmatpush.msra.mxu0 0.0
  %383 = vmatpush.msra.mxu0 0.0
  %384 = vmatpush.msra.mxu0 0.0
  %385 = vmatpush.msra.mxu0 0.0
  %386 = vmatpush.msra.mxu0 %v63
  %387 = vmatpush.msra.mxu0 %v62
  %388 = vmatmul.f32.gmra.mxu0 %v130
  %v389 = vpop.f32.mrf.mxu0
  %v390 = vadd.f32 %v325, %v389
  %391 = vmatmul.f32.gmra.mxu0 %v133
  %v392 = vpop.f32.mrf.mxu0
  %v393 = vadd.f32 %v328, %v392
  %394 = vmatmul.f32.gmra.mxu0 %v136
  %v395 = vpop.f32.mrf.mxu0
  %v396 = vadd.f32 %v331, %v395
  %397 = vmatmul.f32.gmra.mxu0 %v139
  %v398 = vpop.f32.mrf.mxu0
  %v399 = vadd.f32 %v334, %v398
  %400 = vmatmul.f32.gmra.mxu0 %v142
  %v401 = vpop.f32.mrf.mxu0
  %v402 = vadd.f32 %v337, %v401
  %403 = vmatmul.f32.gmra.mxu0 %v145
  %v404 = vpop.f32.mrf.mxu0
  %v405 = vadd.f32 %v340, %v404
  %406 = vmatmul.f32.gmra.mxu0 %v148
  %v407 = vpop.f32.mrf.mxu0
  %v408 = vadd.f32 %v343, %v407
  %409 = vmatmul.f32.gmra.mxu0 %v151
  %v410 = vpop.f32.mrf.mxu0
  %v411 = vadd.f32 %v346, %v410
  %412 = vmatmul.f32.gmra.mxu0 %v154
  %v413 = vpop.f32.mrf.mxu0
  %v414 = vadd.f32 %v349, %v413
  %415 = vmatmul.f32.gmra.mxu0 %v157
  %v416 = vpop.f32.mrf.mxu0
  %v417 = vadd.f32 %v352, %v416
  %418 = vmatmul.f32.gmra.mxu0 %v160
  %v419 = vpop.f32.mrf.mxu0
  %v420 = vadd.f32 %v355, %v419
  %421 = vmatmul.f32.gmra.mxu0 %v163
  %v422 = vpop.f32.mrf.mxu0
  %v423 = vadd.f32 %v358, %v422
  %424 = vmatmul.f32.gmra.mxu0 %v166
  %v425 = vpop.f32.mrf.mxu0
  %v426 = vadd.f32 %v361, %v425
  %427 = vmatmul.f32.gmra.mxu0 %v169
  %v428 = vpop.f32.mrf.mxu0
  %v429 = vadd.f32 %v364, %v428
  %430 = vmatmul.f32.gmra.mxu0 %v172
  %v431 = vpop.f32.mrf.mxu0
  %v432 = vadd.f32 %v367, %v431
  %433 = vmatmul.f32.gmra.mxu0 %v175
  %v434 = vpop.f32.mrf.mxu0
  %v435 = vadd.f32 %v370, %v434
  %436 = vdwg.mxu0
  %s437 = scalar_lea.vmem %s0, 512
  %v438 = vld [vmem:[%s437] sm:$0xff]
  %v439 = vld [vmem:[%s437 + $0x8] sm:$0xff]
  %v440 = vld [vmem:[%s437 + $0x10] sm:$0xff]
  %v441 = vld [vmem:[%s437 + $0x18] sm:$0xff]
  %v442 = vld [vmem:[%s437 + $0x20] sm:$0xff]
  %v443 = vld [vmem:[%s437 + $0x28] sm:$0xff]
  %v444 = vld [vmem:[%s437 + $0x30] sm:$0xff]
  %v445 = vld [vmem:[%s437 + $0x38] sm:$0xff]
  %v446 = vld [vmem:[%s437 + $0x40] sm:$0xff]
  %v447 = vld [vmem:[%s437 + $0x48] sm:$0xff]
  %v448 = vld [vmem:[%s437 + $0x50] sm:$0xff]
  %v449 = vld [vmem:[%s437 + $0x58] sm:$0xff]
  %v450 = vld [vmem:[%s437 + $0x60] sm:$0xff]
  %v451 = vld [vmem:[%s437 + $0x68] sm:$0xff]
  %v452 = vld [vmem:[%s437 + $0x70] sm:$0xff]
  %v453 = vld [vmem:[%s437 + $0x78] sm:$0xff]
  %v454 = vld [vmem:[%s437 + $0x80] sm:$0xff]
  %v455 = vld [vmem:[%s437 + $0x88] sm:$0xff]
  %v456 = vld [vmem:[%s437 + $0x90] sm:$0xff]
  %v457 = vld [vmem:[%s437 + $0x98] sm:$0xff]
  %v458 = vld [vmem:[%s437 + $0xa0] sm:$0xff]
  %v459 = vld [vmem:[%s437 + $0xa8] sm:$0xff]
  %v460 = vld [vmem:[%s437 + $0xb0] sm:$0xff]
  %v461 = vld [vmem:[%s437 + $0xb8] sm:$0xff]
  %v462 = vld [vmem:[%s437 + $0xc0] sm:$0xff]
  %v463 = vld [vmem:[%s437 + $0xc8] sm:$0xff]
  %v464 = vld [vmem:[%s437 + $0xd0] sm:$0xff]
  %v465 = vld [vmem:[%s437 + $0xd8] sm:$0xff]
  %v466 = vld [vmem:[%s437 + $0xe0] sm:$0xff]
  %v467 = vld [vmem:[%s437 + $0xe8] sm:$0xff]
  %v468 = vld [vmem:[%s437 + $0xf0] sm:$0xff]
  %v469 = vld [vmem:[%s437 + $0xf8] sm:$0xff]
  %v470 = vld [vmem:[%s437 + $0x100] sm:$0xff]
  %v471 = vld [vmem:[%s437 + $0x108] sm:$0xff]
  %v472 = vld [vmem:[%s437 + $0x110] sm:$0xff]
  %v473 = vld [vmem:[%s437 + $0x118] sm:$0xff]
  %v474 = vld [vmem:[%s437 + $0x120] sm:$0xff]
  %v475 = vld [vmem:[%s437 + $0x128] sm:$0xff]
  %v476 = vld [vmem:[%s437 + $0x130] sm:$0xff]
  %v477 = vld [vmem:[%s437 + $0x138] sm:$0xff]
  %v478 = vld [vmem:[%s437 + $0x140] sm:$0xff]
  %v479 = vld [vmem:[%s437 + $0x148] sm:$0xff]
  %v480 = vld [vmem:[%s437 + $0x150] sm:$0xff]
  %v481 = vld [vmem:[%s437 + $0x158] sm:$0xff]
  %v482 = vld [vmem:[%s437 + $0x160] sm:$0xff]
  %v483 = vld [vmem:[%s437 + $0x168] sm:$0xff]
  %v484 = vld [vmem:[%s437 + $0x170] sm:$0xff]
  %v485 = vld [vmem:[%s437 + $0x178] sm:$0xff]
  %v486 = vld [vmem:[%s437 + $0x180] sm:$0xff]
  %v487 = vld [vmem:[%s437 + $0x188] sm:$0xff]
  %v488 = vld [vmem:[%s437 + $0x190] sm:$0xff]
  %v489 = vld [vmem:[%s437 + $0x198] sm:$0xff]
  %v490 = vld [vmem:[%s437 + $0x1a0] sm:$0xff]
  %v491 = vld [vmem:[%s437 + $0x1a8] sm:$0xff]
  %v492 = vld [vmem:[%s437 + $0x1b0] sm:$0xff]
  %v493 = vld [vmem:[%s437 + $0x1b8] sm:$0xff]
  %v494 = vld [vmem:[%s437 + $0x1c0] sm:$0xff]
  %v495 = vld [vmem:[%s437 + $0x1c8] sm:$0xff]
  %v496 = vld [vmem:[%s437 + $0x1d0] sm:$0xff]
  %v497 = vld [vmem:[%s437 + $0x1d8] sm:$0xff]
  %v498 = vld [vmem:[%s437 + $0x1e0] sm:$0xff]
  %v499 = vld [vmem:[%s437 + $0x1e8] sm:$0xff]
  %v500 = vld [vmem:[%s437 + $0x1f0] sm:$0xff]
  %v501 = vld [vmem:[%s437 + $0x1f8] sm:$0xff]
  %v503 = vsel %vm128, %v441, 0
  %v506 = vsel %vm128, %v445, 0
  %v509 = vsel %vm128, %v449, 0
  %v512 = vsel %vm128, %v453, 0
  %v515 = vsel %vm128, %v457, 0
  %v518 = vsel %vm128, %v461, 0
  %v521 = vsel %vm128, %v465, 0
  %v524 = vsel %vm128, %v469, 0
  %v527 = vsel %vm128, %v473, 0
  %v530 = vsel %vm128, %v477, 0
  %v533 = vsel %vm128, %v481, 0
  %v536 = vsel %vm128, %v485, 0
  %v539 = vsel %vm128, %v489, 0
  %v542 = vsel %vm128, %v493, 0
  %v545 = vsel %vm128, %v497, 0
  %v548 = vsel %vm128, %v501, 0
  %550 = vmatpush.msra.mxu0 %v29
  %551 = vmatpush.msra.mxu0 %v28
  %552 = vmatpush.msra.mxu0 %v27
  %553 = vmatpush.msra.mxu0 %v26
  %554 = vmatpush.msra.mxu0 %v25
  %555 = vmatpush.msra.mxu0 %v24
  %556 = vmatpush.msra.mxu0 %v23
  %557 = vmatpush.msra.mxu0 %v22
  %558 = vmatpush.msra.mxu0 %v21
  %559 = vmatpush.msra.mxu0 %v20
  %560 = vmatpush.msra.mxu0 %v19
  %561 = vmatpush.msra.mxu0 %v18
  %562 = vmatpush.msra.mxu0 %v17
  %563 = vmatpush.msra.mxu0 %v16
  %564 = vmatpush.msra.mxu0 %v15
  %565 = vmatpush.msra.mxu0 %v14
  %566 = vmatmul.f32.gmra.mxu0 %v438
  %v567 = vpop.f32.mrf.mxu0
  %v568 = vadd.f32 0.0, %v567
  %569 = vmatmul.f32.gmra.mxu0 %v442
  %v570 = vpop.f32.mrf.mxu0
  %v571 = vadd.f32 0.0, %v570
  %572 = vmatmul.f32.gmra.mxu0 %v446
  %v573 = vpop.f32.mrf.mxu0
  %v574 = vadd.f32 0.0, %v573
  %575 = vmatmul.f32.gmra.mxu0 %v450
  %v576 = vpop.f32.mrf.mxu0
  %v577 = vadd.f32 0.0, %v576
  %578 = vmatmul.f32.gmra.mxu0 %v454
  %v579 = vpop.f32.mrf.mxu0
  %v580 = vadd.f32 0.0, %v579
  %581 = vmatmul.f32.gmra.mxu0 %v458
  %v582 = vpop.f32.mrf.mxu0
  %v583 = vadd.f32 0.0, %v582
  %584 = vmatmul.f32.gmra.mxu0 %v462
  %v585 = vpop.f32.mrf.mxu0
  %v586 = vadd.f32 0.0, %v585
  %587 = vmatmul.f32.gmra.mxu0 %v466
  %v588 = vpop.f32.mrf.mxu0
  %v589 = vadd.f32 0.0, %v588
  %590 = vmatmul.f32.gmra.mxu0 %v470
  %v591 = vpop.f32.mrf.mxu0
  %v592 = vadd.f32 0.0, %v591
  %593 = vmatmul.f32.gmra.mxu0 %v474
  %v594 = vpop.f32.mrf.mxu0
  %v595 = vadd.f32 0.0, %v594
  %596 = vmatmul.f32.gmra.mxu0 %v478
  %v597 = vpop.f32.mrf.mxu0
  %v598 = vadd.f32 0.0, %v597
  %599 = vmatmul.f32.gmra.mxu0 %v482
  %v600 = vpop.f32.mrf.mxu0
  %v601 = vadd.f32 0.0, %v600
  %602 = vmatmul.f32.gmra.mxu0 %v486
  %v603 = vpop.f32.mrf.mxu0
  %v604 = vadd.f32 0.0, %v603
  %605 = vmatmul.f32.gmra.mxu0 %v490
  %v606 = vpop.f32.mrf.mxu0
  %v607 = vadd.f32 0.0, %v606
  %608 = vmatmul.f32.gmra.mxu0 %v494
  %v609 = vpop.f32.mrf.mxu0
  %v610 = vadd.f32 0.0, %v609
  %611 = vmatmul.f32.gmra.mxu0 %v498
  %v612 = vpop.f32.mrf.mxu0
  %v613 = vadd.f32 0.0, %v612
  %614 = vdwg.mxu0
  %615 = vmatpush.msra.mxu0 %v45
  %616 = vmatpush.msra.mxu0 %v44
  %617 = vmatpush.msra.mxu0 %v43
  %618 = vmatpush.msra.mxu0 %v42
  %619 = vmatpush.msra.mxu0 %v41
  %620 = vmatpush.msra.mxu0 %v40
  %621 = vmatpush.msra.mxu0 %v39
  %622 = vmatpush.msra.mxu0 %v38
  %623 = vmatpush.msra.mxu0 %v37
  %624 = vmatpush.msra.mxu0 %v36
  %625 = vmatpush.msra.mxu0 %v35
  %626 = vmatpush.msra.mxu0 %v34
  %627 = vmatpush.msra.mxu0 %v33
  %628 = vmatpush.msra.mxu0 %v32
  %629 = vmatpush.msra.mxu0 %v31
  %630 = vmatpush.msra.mxu0 %v30
  %631 = vmatmul.f32.gmra.mxu0 %v439
  %v632 = vpop.f32.mrf.mxu0
  %v633 = vadd.f32 %v568, %v632
  %634 = vmatmul.f32.gmra.mxu0 %v443
  %v635 = vpop.f32.mrf.mxu0
  %v636 = vadd.f32 %v571, %v635
  %637 = vmatmul.f32.gmra.mxu0 %v447
  %v638 = vpop.f32.mrf.mxu0
  %v639 = vadd.f32 %v574, %v638
  %640 = vmatmul.f32.gmra.mxu0 %v451
  %v641 = vpop.f32.mrf.mxu0
  %v642 = vadd.f32 %v577, %v641
  %643 = vmatmul.f32.gmra.mxu0 %v455
  %v644 = vpop.f32.mrf.mxu0
  %v645 = vadd.f32 %v580, %v644
  %646 = vmatmul.f32.gmra.mxu0 %v459
  %v647 = vpop.f32.mrf.mxu0
  %v648 = vadd.f32 %v583, %v647
  %649 = vmatmul.f32.gmra.mxu0 %v463
  %v650 = vpop.f32.mrf.mxu0
  %v651 = vadd.f32 %v586, %v650
  %652 = vmatmul.f32.gmra.mxu0 %v467
  %v653 = vpop.f32.mrf.mxu0
  %v654 = vadd.f32 %v589, %v653
  %655 = vmatmul.f32.gmra.mxu0 %v471
  %v656 = vpop.f32.mrf.mxu0
  %v657 = vadd.f32 %v592, %v656
  %658 = vmatmul.f32.gmra.mxu0 %v475
  %v659 = vpop.f32.mrf.mxu0
  %v660 = vadd.f32 %v595, %v659
  %661 = vmatmul.f32.gmra.mxu0 %v479
  %v662 = vpop.f32.mrf.mxu0
  %v663 = vadd.f32 %v598, %v662
  %664 = vmatmul.f32.gmra.mxu0 %v483
  %v665 = vpop.f32.mrf.mxu0
  %v666 = vadd.f32 %v601, %v665
  %667 = vmatmul.f32.gmra.mxu0 %v487
  %v668 = vpop.f32.mrf.mxu0
  %v669 = vadd.f32 %v604, %v668
  %670 = vmatmul.f32.gmra.mxu0 %v491
  %v671 = vpop.f32.mrf.mxu0
  %v672 = vadd.f32 %v607, %v671
  %673 = vmatmul.f32.gmra.mxu0 %v495
  %v674 = vpop.f32.mrf.mxu0
  %v675 = vadd.f32 %v610, %v674
  %676 = vmatmul.f32.gmra.mxu0 %v499
  %v677 = vpop.f32.mrf.mxu0
  %v678 = vadd.f32 %v613, %v677
  %679 = vdwg.mxu0
  %680 = vmatpush.msra.mxu0 %v61
  %681 = vmatpush.msra.mxu0 %v60
  %682 = vmatpush.msra.mxu0 %v59
  %683 = vmatpush.msra.mxu0 %v58
  %684 = vmatpush.msra.mxu0 %v57
  %685 = vmatpush.msra.mxu0 %v56
  %686 = vmatpush.msra.mxu0 %v55
  %687 = vmatpush.msra.mxu0 %v54
  %688 = vmatpush.msra.mxu0 %v53
  %689 = vmatpush.msra.mxu0 %v52
  %690 = vmatpush.msra.mxu0 %v51
  %691 = vmatpush.msra.mxu0 %v50
  %692 = vmatpush.msra.mxu0 %v49
  %693 = vmatpush.msra.mxu0 %v48
  %694 = vmatpush.msra.mxu0 %v47
  %695 = vmatpush.msra.mxu0 %v46
  %696 = vmatmul.f32.gmra.mxu0 %v440
  %v697 = vpop.f32.mrf.mxu0
  %v698 = vadd.f32 %v633, %v697
  %699 = vmatmul.f32.gmra.mxu0 %v444
  %v700 = vpop.f32.mrf.mxu0
  %v701 = vadd.f32 %v636, %v700
  %702 = vmatmul.f32.gmra.mxu0 %v448
  %v703 = vpop.f32.mrf.mxu0
  %v704 = vadd.f32 %v639, %v703
  %705 = vmatmul.f32.gmra.mxu0 %v452
  %v706 = vpop.f32.mrf.mxu0
  %v707 = vadd.f32 %v642, %v706
  %708 = vmatmul.f32.gmra.mxu0 %v456
  %v709 = vpop.f32.mrf.mxu0
  %v710 = vadd.f32 %v645, %v709
  %711 = vmatmul.f32.gmra.mxu0 %v460
  %v712 = vpop.f32.mrf.mxu0
  %v713 = vadd.f32 %v648, %v712
  %714 = vmatmul.f32.gmra.mxu0 %v464
  %v715 = vpop.f32.mrf.mxu0
  %v716 = vadd.f32 %v651, %v715
  %717 = vmatmul.f32.gmra.mxu0 %v468
  %v718 = vpop.f32.mrf.mxu0
  %v719 = vadd.f32 %v654, %v718
  %720 = vmatmul.f32.gmra.mxu0 %v472
  %v721 = vpop.f32.mrf.mxu0
  %v722 = vadd.f32 %v657, %v721
  %723 = vmatmul.f32.gmra.mxu0 %v476
  %v724 = vpop.f32.mrf.mxu0
  %v725 = vadd.f32 %v660, %v724
  %726 = vmatmul.f32.gmra.mxu0 %v480
  %v727 = vpop.f32.mrf.mxu0
  %v728 = vadd.f32 %v663, %v727
  %729 = vmatmul.f32.gmra.mxu0 %v484
  %v730 = vpop.f32.mrf.mxu0
  %v731 = vadd.f32 %v666, %v730
  %732 = vmatmul.f32.gmra.mxu0 %v488
  %v733 = vpop.f32.mrf.mxu0
  %v734 = vadd.f32 %v669, %v733
  %735 = vmatmul.f32.gmra.mxu0 %v492
  %v736 = vpop.f32.mrf.mxu0
  %v737 = vadd.f32 %v672, %v736
  %738 = vmatmul.f32.gmra.mxu0 %v496
  %v739 = vpop.f32.mrf.mxu0
  %v740 = vadd.f32 %v675, %v739
  %741 = vmatmul.f32.gmra.mxu0 %v500
  %v742 = vpop.f32.mrf.mxu0
  %v743 = vadd.f32 %v678, %v742
  %744 = vdwg.mxu0
  %745 = vmatpush.msra.mxu0 0.0
  %746 = vmatpush.msra.mxu0 0.0
  %747 = vmatpush.msra.mxu0 0.0
  %748 = vmatpush.msra.mxu0 0.0
  %749 = vmatpush.msra.mxu0 0.0
  %750 = vmatpush.msra.mxu0 0.0
  %751 = vmatpush.msra.mxu0 0.0
  %752 = vmatpush.msra.mxu0 0.0
  %753 = vmatpush.msra.mxu0 0.0
  %754 = vmatpush.msra.mxu0 0.0
  %755 = vmatpush.msra.mxu0 0.0
  %756 = vmatpush.msra.mxu0 0.0
  %757 = vmatpush.msra.mxu0 0.0
  %758 = vmatpush.msra.mxu0 0.0
  %759 = vmatpush.msra.mxu0 %v63
  %760 = vmatpush.msra.mxu0 %v62
  %761 = vmatmul.f32.gmra.mxu0 %v503
  %v762 = vpop.f32.mrf.mxu0
  %v763 = vadd.f32 %v698, %v762
  %764 = vmatmul.f32.gmra.mxu0 %v506
  %v765 = vpop.f32.mrf.mxu0
  %v766 = vadd.f32 %v701, %v765
  %767 = vmatmul.f32.gmra.mxu0 %v509
  %v768 = vpop.f32.mrf.mxu0
  %v769 = vadd.f32 %v704, %v768
  %770 = vmatmul.f32.gmra.mxu0 %v512
  %v771 = vpop.f32.mrf.mxu0
  %v772 = vadd.f32 %v707, %v771
  %773 = vmatmul.f32.gmra.mxu0 %v515
  %v774 = vpop.f32.mrf.mxu0
  %v775 = vadd.f32 %v710, %v774
  %776 = vmatmul.f32.gmra.mxu0 %v518
  %v777 = vpop.f32.mrf.mxu0
  %v778 = vadd.f32 %v713, %v777
  %779 = vmatmul.f32.gmra.mxu0 %v521
  %v780 = vpop.f32.mrf.mxu0
  %v781 = vadd.f32 %v716, %v780
  %782 = vmatmul.f32.gmra.mxu0 %v524
  %v783 = vpop.f32.mrf.mxu0
  %v784 = vadd.f32 %v719, %v783
  %785 = vmatmul.f32.gmra.mxu0 %v527
  %v786 = vpop.f32.mrf.mxu0
  %v787 = vadd.f32 %v722, %v786
  %788 = vmatmul.f32.gmra.mxu0 %v530
  %v789 = vpop.f32.mrf.mxu0
  %v790 = vadd.f32 %v725, %v789
  %791 = vmatmul.f32.gmra.mxu0 %v533
  %v792 = vpop.f32.mrf.mxu0
  %v793 = vadd.f32 %v728, %v792
  %794 = vmatmul.f32.gmra.mxu0 %v536
  %v795 = vpop.f32.mrf.mxu0
  %v796 = vadd.f32 %v731, %v795
  %797 = vmatmul.f32.gmra.mxu0 %v539
  %v798 = vpop.f32.mrf.mxu0
  %v799 = vadd.f32 %v734, %v798
  %800 = vmatmul.f32.gmra.mxu0 %v542
  %v801 = vpop.f32.mrf.mxu0
  %v802 = vadd.f32 %v737, %v801
  %803 = vmatmul.f32.gmra.mxu0 %v545
  %v804 = vpop.f32.mrf.mxu0
  %v805 = vadd.f32 %v740, %v804
  %806 = vmatmul.f32.gmra.mxu0 %v548
  %v807 = vpop.f32.mrf.mxu0
  %v808 = vadd.f32 %v743, %v807
  %809 = vdwg.mxu0
  %v810 = vmax.f32 %v390, %v763
  %v811 = vmax.f32 %v393, %v766
  %v812 = vmax.f32 %v396, %v769
  %v813 = vmax.f32 %v399, %v772
  %v814 = vmax.f32 %v402, %v775
  %v815 = vmax.f32 %v405, %v778
  %v816 = vmax.f32 %v408, %v781
  %v817 = vmax.f32 %v411, %v784
  %v818 = vmax.f32 %v414, %v787
  %v819 = vmax.f32 %v417, %v790
  %v820 = vmax.f32 %v420, %v793
  %v821 = vmax.f32 %v423, %v796
  %v822 = vmax.f32 %v426, %v799
  %v823 = vmax.f32 %v429, %v802
  %v824 = vmax.f32 %v432, %v805
  %v825 = vmax.f32 %v435, %v808
  %s826 = scalar_lea.vmem %s0, 1024
  %v827 = vld [vmem:[%s826] sm:$0xff]
  %v828 = vld [vmem:[%s826 + $0x8] sm:$0xff]
  %v829 = vld [vmem:[%s826 + $0x10] sm:$0xff]
  %v830 = vld [vmem:[%s826 + $0x18] sm:$0xff]
  %v831 = vld [vmem:[%s826 + $0x20] sm:$0xff]
  %v832 = vld [vmem:[%s826 + $0x28] sm:$0xff]
  %v833 = vld [vmem:[%s826 + $0x30] sm:$0xff]
  %v834 = vld [vmem:[%s826 + $0x38] sm:$0xff]
  %v835 = vld [vmem:[%s826 + $0x40] sm:$0xff]
  %v836 = vld [vmem:[%s826 + $0x48] sm:$0xff]
  %v837 = vld [vmem:[%s826 + $0x50] sm:$0xff]
  %v838 = vld [vmem:[%s826 + $0x58] sm:$0xff]
  %v839 = vld [vmem:[%s826 + $0x60] sm:$0xff]
  %v840 = vld [vmem:[%s826 + $0x68] sm:$0xff]
  %v841 = vld [vmem:[%s826 + $0x70] sm:$0xff]
  %v842 = vld [vmem:[%s826 + $0x78] sm:$0xff]
  %v843 = vld [vmem:[%s826 + $0x80] sm:$0xff]
  %v844 = vld [vmem:[%s826 + $0x88] sm:$0xff]
  %v845 = vld [vmem:[%s826 + $0x90] sm:$0xff]
  %v846 = vld [vmem:[%s826 + $0x98] sm:$0xff]
  %v847 = vld [vmem:[%s826 + $0xa0] sm:$0xff]
  %v848 = vld [vmem:[%s826 + $0xa8] sm:$0xff]
  %v849 = vld [vmem:[%s826 + $0xb0] sm:$0xff]
  %v850 = vld [vmem:[%s826 + $0xb8] sm:$0xff]
  %v851 = vld [vmem:[%s826 + $0xc0] sm:$0xff]
  %v852 = vld [vmem:[%s826 + $0xc8] sm:$0xff]
  %v853 = vld [vmem:[%s826 + $0xd0] sm:$0xff]
  %v854 = vld [vmem:[%s826 + $0xd8] sm:$0xff]
  %v855 = vld [vmem:[%s826 + $0xe0] sm:$0xff]
  %v856 = vld [vmem:[%s826 + $0xe8] sm:$0xff]
  %v857 = vld [vmem:[%s826 + $0xf0] sm:$0xff]
  %v858 = vld [vmem:[%s826 + $0xf8] sm:$0xff]
  %v859 = vld [vmem:[%s826 + $0x100] sm:$0xff]
  %v860 = vld [vmem:[%s826 + $0x108] sm:$0xff]
  %v861 = vld [vmem:[%s826 + $0x110] sm:$0xff]
  %v862 = vld [vmem:[%s826 + $0x118] sm:$0xff]
  %v863 = vld [vmem:[%s826 + $0x120] sm:$0xff]
  %v864 = vld [vmem:[%s826 + $0x128] sm:$0xff]
  %v865 = vld [vmem:[%s826 + $0x130] sm:$0xff]
  %v866 = vld [vmem:[%s826 + $0x138] sm:$0xff]
  %v867 = vld [vmem:[%s826 + $0x140] sm:$0xff]
  %v868 = vld [vmem:[%s826 + $0x148] sm:$0xff]
  %v869 = vld [vmem:[%s826 + $0x150] sm:$0xff]
  %v870 = vld [vmem:[%s826 + $0x158] sm:$0xff]
  %v871 = vld [vmem:[%s826 + $0x160] sm:$0xff]
  %v872 = vld [vmem:[%s826 + $0x168] sm:$0xff]
  %v873 = vld [vmem:[%s826 + $0x170] sm:$0xff]
  %v874 = vld [vmem:[%s826 + $0x178] sm:$0xff]
  %v875 = vld [vmem:[%s826 + $0x180] sm:$0xff]
  %v876 = vld [vmem:[%s826 + $0x188] sm:$0xff]
  %v877 = vld [vmem:[%s826 + $0x190] sm:$0xff]
  %v878 = vld [vmem:[%s826 + $0x198] sm:$0xff]
  %v879 = vld [vmem:[%s826 + $0x1a0] sm:$0xff]
  %v880 = vld [vmem:[%s826 + $0x1a8] sm:$0xff]
  %v881 = vld [vmem:[%s826 + $0x1b0] sm:$0xff]
  %v882 = vld [vmem:[%s826 + $0x1b8] sm:$0xff]
  %v883 = vld [vmem:[%s826 + $0x1c0] sm:$0xff]
  %v884 = vld [vmem:[%s826 + $0x1c8] sm:$0xff]
  %v885 = vld [vmem:[%s826 + $0x1d0] sm:$0xff]
  %v886 = vld [vmem:[%s826 + $0x1d8] sm:$0xff]
  %v887 = vld [vmem:[%s826 + $0x1e0] sm:$0xff]
  %v888 = vld [vmem:[%s826 + $0x1e8] sm:$0xff]
  %v889 = vld [vmem:[%s826 + $0x1f0] sm:$0xff]
  %v890 = vld [vmem:[%s826 + $0x1f8] sm:$0xff]
  %v892 = vsel %vm128, %v830, 0
  %v895 = vsel %vm128, %v834, 0
  %v898 = vsel %vm128, %v838, 0
  %v901 = vsel %vm128, %v842, 0
  %v904 = vsel %vm128, %v846, 0
  %v907 = vsel %vm128, %v850, 0
  %v910 = vsel %vm128, %v854, 0
  %v913 = vsel %vm128, %v858, 0
  %v916 = vsel %vm128, %v862, 0
  %v919 = vsel %vm128, %v866, 0
  %v922 = vsel %vm128, %v870, 0
  %v925 = vsel %vm128, %v874, 0
  %v928 = vsel %vm128, %v878, 0
  %v931 = vsel %vm128, %v882, 0
  %v934 = vsel %vm128, %v886, 0
  %v937 = vsel %vm128, %v890, 0
  %939 = vmatpush.msra.mxu0 %v29
  %940 = vmatpush.msra.mxu0 %v28
  %941 = vmatpush.msra.mxu0 %v27
  %942 = vmatpush.msra.mxu0 %v26
  %943 = vmatpush.msra.mxu0 %v25
  %944 = vmatpush.msra.mxu0 %v24
  %945 = vmatpush.msra.mxu0 %v23
  %946 = vmatpush.msra.mxu0 %v22
  %947 = vmatpush.msra.mxu0 %v21
  %948 = vmatpush.msra.mxu0 %v20
  %949 = vmatpush.msra.mxu0 %v19
  %950 = vmatpush.msra.mxu0 %v18
  %951 = vmatpush.msra.mxu0 %v17
  %952 = vmatpush.msra.mxu0 %v16
  %953 = vmatpush.msra.mxu0 %v15
  %954 = vmatpush.msra.mxu0 %v14
  %955 = vmatmul.f32.gmra.mxu0 %v827
  %v956 = vpop.f32.mrf.mxu0
  %v957 = vadd.f32 0.0, %v956
  %958 = vmatmul.f32.gmra.mxu0 %v831
  %v959 = vpop.f32.mrf.mxu0
  %v960 = vadd.f32 0.0, %v959
  %961 = vmatmul.f32.gmra.mxu0 %v835
  %v962 = vpop.f32.mrf.mxu0
  %v963 = vadd.f32 0.0, %v962
  %964 = vmatmul.f32.gmra.mxu0 %v839
  %v965 = vpop.f32.mrf.mxu0
  %v966 = vadd.f32 0.0, %v965
  %967 = vmatmul.f32.gmra.mxu0 %v843
  %v968 = vpop.f32.mrf.mxu0
  %v969 = vadd.f32 0.0, %v968
  %970 = vmatmul.f32.gmra.mxu0 %v847
  %v971 = vpop.f32.mrf.mxu0
  %v972 = vadd.f32 0.0, %v971
  %973 = vmatmul.f32.gmra.mxu0 %v851
  %v974 = vpop.f32.mrf.mxu0
  %v975 = vadd.f32 0.0, %v974
  %976 = vmatmul.f32.gmra.mxu0 %v855
  %v977 = vpop.f32.mrf.mxu0
  %v978 = vadd.f32 0.0, %v977
  %979 = vmatmul.f32.gmra.mxu0 %v859
  %v980 = vpop.f32.mrf.mxu0
  %v981 = vadd.f32 0.0, %v980
  %982 = vmatmul.f32.gmra.mxu0 %v863
  %v983 = vpop.f32.mrf.mxu0
  %v984 = vadd.f32 0.0, %v983
  %985 = vmatmul.f32.gmra.mxu0 %v867
  %v986 = vpop.f32.mrf.mxu0
  %v987 = vadd.f32 0.0, %v986
  %988 = vmatmul.f32.gmra.mxu0 %v871
  %v989 = vpop.f32.mrf.mxu0
  %v990 = vadd.f32 0.0, %v989
  %991 = vmatmul.f32.gmra.mxu0 %v875
  %v992 = vpop.f32.mrf.mxu0
  %v993 = vadd.f32 0.0, %v992
  %994 = vmatmul.f32.gmra.mxu0 %v879
  %v995 = vpop.f32.mrf.mxu0
  %v996 = vadd.f32 0.0, %v995
  %997 = vmatmul.f32.gmra.mxu0 %v883
  %v998 = vpop.f32.mrf.mxu0
  %v999 = vadd.f32 0.0, %v998
  %1000 = vmatmul.f32.gmra.mxu0 %v887
  %v1001 = vpop.f32.mrf.mxu0
  %v1002 = vadd.f32 0.0, %v1001
  %1003 = vdwg.mxu0
  %1004 = vmatpush.msra.mxu0 %v45
  %1005 = vmatpush.msra.mxu0 %v44
  %1006 = vmatpush.msra.mxu0 %v43
  %1007 = vmatpush.msra.mxu0 %v42
  %1008 = vmatpush.msra.mxu0 %v41
  %1009 = vmatpush.msra.mxu0 %v40
  %1010 = vmatpush.msra.mxu0 %v39
  %1011 = vmatpush.msra.mxu0 %v38
  %1012 = vmatpush.msra.mxu0 %v37
  %1013 = vmatpush.msra.mxu0 %v36
  %1014 = vmatpush.msra.mxu0 %v35
  %1015 = vmatpush.msra.mxu0 %v34
  %1016 = vmatpush.msra.mxu0 %v33
  %1017 = vmatpush.msra.mxu0 %v32
  %1018 = vmatpush.msra.mxu0 %v31
  %1019 = vmatpush.msra.mxu0 %v30
  %1020 = vmatmul.f32.gmra.mxu0 %v828
  %v1021 = vpop.f32.mrf.mxu0
  %v1022 = vadd.f32 %v957, %v1021
  %1023 = vmatmul.f32.gmra.mxu0 %v832
  %v1024 = vpop.f32.mrf.mxu0
  %v1025 = vadd.f32 %v960, %v1024
  %1026 = vmatmul.f32.gmra.mxu0 %v836
  %v1027 = vpop.f32.mrf.mxu0
  %v1028 = vadd.f32 %v963, %v1027
  %1029 = vmatmul.f32.gmra.mxu0 %v840
  %v1030 = vpop.f32.mrf.mxu0
  %v1031 = vadd.f32 %v966, %v1030
  %1032 = vmatmul.f32.gmra.mxu0 %v844
  %v1033 = vpop.f32.mrf.mxu0
  %v1034 = vadd.f32 %v969, %v1033
  %1035 = vmatmul.f32.gmra.mxu0 %v848
  %v1036 = vpop.f32.mrf.mxu0
  %v1037 = vadd.f32 %v972, %v1036
  %1038 = vmatmul.f32.gmra.mxu0 %v852
  %v1039 = vpop.f32.mrf.mxu0
  %v1040 = vadd.f32 %v975, %v1039
  %1041 = vmatmul.f32.gmra.mxu0 %v856
  %v1042 = vpop.f32.mrf.mxu0
  %v1043 = vadd.f32 %v978, %v1042
  %1044 = vmatmul.f32.gmra.mxu0 %v860
  %v1045 = vpop.f32.mrf.mxu0
  %v1046 = vadd.f32 %v981, %v1045
  %1047 = vmatmul.f32.gmra.mxu0 %v864
  %v1048 = vpop.f32.mrf.mxu0
  %v1049 = vadd.f32 %v984, %v1048
  %1050 = vmatmul.f32.gmra.mxu0 %v868
  %v1051 = vpop.f32.mrf.mxu0
  %v1052 = vadd.f32 %v987, %v1051
  %1053 = vmatmul.f32.gmra.mxu0 %v872
  %v1054 = vpop.f32.mrf.mxu0
  %v1055 = vadd.f32 %v990, %v1054
  %1056 = vmatmul.f32.gmra.mxu0 %v876
  %v1057 = vpop.f32.mrf.mxu0
  %v1058 = vadd.f32 %v993, %v1057
  %1059 = vmatmul.f32.gmra.mxu0 %v880
  %v1060 = vpop.f32.mrf.mxu0
  %v1061 = vadd.f32 %v996, %v1060
  %1062 = vmatmul.f32.gmra.mxu0 %v884
  %v1063 = vpop.f32.mrf.mxu0
  %v1064 = vadd.f32 %v999, %v1063
  %1065 = vmatmul.f32.gmra.mxu0 %v888
  %v1066 = vpop.f32.mrf.mxu0
  %v1067 = vadd.f32 %v1002, %v1066
  %1068 = vdwg.mxu0
  %1069 = vmatpush.msra.mxu0 %v61
  %1070 = vmatpush.msra.mxu0 %v60
  %1071 = vmatpush.msra.mxu0 %v59
  %1072 = vmatpush.msra.mxu0 %v58
  %1073 = vmatpush.msra.mxu0 %v57
  %1074 = vmatpush.msra.mxu0 %v56
  %1075 = vmatpush.msra.mxu0 %v55
  %1076 = vmatpush.msra.mxu0 %v54
  %1077 = vmatpush.msra.mxu0 %v53
  %1078 = vmatpush.msra.mxu0 %v52
  %1079 = vmatpush.msra.mxu0 %v51
  %1080 = vmatpush.msra.mxu0 %v50
  %1081 = vmatpush.msra.mxu0 %v49
  %1082 = vmatpush.msra.mxu0 %v48
  %1083 = vmatpush.msra.mxu0 %v47
  %1084 = vmatpush.msra.mxu0 %v46
  %1085 = vmatmul.f32.gmra.mxu0 %v829
  %v1086 = vpop.f32.mrf.mxu0
  %v1087 = vadd.f32 %v1022, %v1086
  %1088 = vmatmul.f32.gmra.mxu0 %v833
  %v1089 = vpop.f32.mrf.mxu0
  %v1090 = vadd.f32 %v1025, %v1089
  %1091 = vmatmul.f32.gmra.mxu0 %v837
  %v1092 = vpop.f32.mrf.mxu0
  %v1093 = vadd.f32 %v1028, %v1092
  %1094 = vmatmul.f32.gmra.mxu0 %v841
  %v1095 = vpop.f32.mrf.mxu0
  %v1096 = vadd.f32 %v1031, %v1095
  %1097 = vmatmul.f32.gmra.mxu0 %v845
  %v1098 = vpop.f32.mrf.mxu0
  %v1099 = vadd.f32 %v1034, %v1098
  %1100 = vmatmul.f32.gmra.mxu0 %v849
  %v1101 = vpop.f32.mrf.mxu0
  %v1102 = vadd.f32 %v1037, %v1101
  %1103 = vmatmul.f32.gmra.mxu0 %v853
  %v1104 = vpop.f32.mrf.mxu0
  %v1105 = vadd.f32 %v1040, %v1104
  %1106 = vmatmul.f32.gmra.mxu0 %v857
  %v1107 = vpop.f32.mrf.mxu0
  %v1108 = vadd.f32 %v1043, %v1107
  %1109 = vmatmul.f32.gmra.mxu0 %v861
  %v1110 = vpop.f32.mrf.mxu0
  %v1111 = vadd.f32 %v1046, %v1110
  %1112 = vmatmul.f32.gmra.mxu0 %v865
  %v1113 = vpop.f32.mrf.mxu0
  %v1114 = vadd.f32 %v1049, %v1113
  %1115 = vmatmul.f32.gmra.mxu0 %v869
  %v1116 = vpop.f32.mrf.mxu0
  %v1117 = vadd.f32 %v1052, %v1116
  %1118 = vmatmul.f32.gmra.mxu0 %v873
  %v1119 = vpop.f32.mrf.mxu0
  %v1120 = vadd.f32 %v1055, %v1119
  %1121 = vmatmul.f32.gmra.mxu0 %v877
  %v1122 = vpop.f32.mrf.mxu0
  %v1123 = vadd.f32 %v1058, %v1122
  %1124 = vmatmul.f32.gmra.mxu0 %v881
  %v1125 = vpop.f32.mrf.mxu0
  %v1126 = vadd.f32 %v1061, %v1125
  %1127 = vmatmul.f32.gmra.mxu0 %v885
  %v1128 = vpop.f32.mrf.mxu0
  %v1129 = vadd.f32 %v1064, %v1128
  %1130 = vmatmul.f32.gmra.mxu0 %v889
  %v1131 = vpop.f32.mrf.mxu0
  %v1132 = vadd.f32 %v1067, %v1131
  %1133 = vdwg.mxu0
  %1134 = vmatpush.msra.mxu0 0.0
  %1135 = vmatpush.msra.mxu0 0.0
  %1136 = vmatpush.msra.mxu0 0.0
  %1137 = vmatpush.msra.mxu0 0.0
  %1138 = vmatpush.msra.mxu0 0.0
  %1139 = vmatpush.msra.mxu0 0.0
  %1140 = vmatpush.msra.mxu0 0.0
  %1141 = vmatpush.msra.mxu0 0.0
  %1142 = vmatpush.msra.mxu0 0.0
  %1143 = vmatpush.msra.mxu0 0.0
  %1144 = vmatpush.msra.mxu0 0.0
  %1145 = vmatpush.msra.mxu0 0.0
  %1146 = vmatpush.msra.mxu0 0.0
  %1147 = vmatpush.msra.mxu0 0.0
  %1148 = vmatpush.msra.mxu0 %v63
  %1149 = vmatpush.msra.mxu0 %v62
  %1150 = vmatmul.f32.gmra.mxu0 %v892
  %v1151 = vpop.f32.mrf.mxu0
  %v1152 = vadd.f32 %v1087, %v1151
  %1153 = vmatmul.f32.gmra.mxu0 %v895
  %v1154 = vpop.f32.mrf.mxu0
  %v1155 = vadd.f32 %v1090, %v1154
  %1156 = vmatmul.f32.gmra.mxu0 %v898
  %v1157 = vpop.f32.mrf.mxu0
  %v1158 = vadd.f32 %v1093, %v1157
  %1159 = vmatmul.f32.gmra.mxu0 %v901
  %v1160 = vpop.f32.mrf.mxu0
  %v1161 = vadd.f32 %v1096, %v1160
  %1162 = vmatmul.f32.gmra.mxu0 %v904
  %v1163 = vpop.f32.mrf.mxu0
  %v1164 = vadd.f32 %v1099, %v1163
  %1165 = vmatmul.f32.gmra.mxu0 %v907
  %v1166 = vpop.f32.mrf.mxu0
  %v1167 = vadd.f32 %v1102, %v1166
  %1168 = vmatmul.f32.gmra.mxu0 %v910
  %v1169 = vpop.f32.mrf.mxu0
  %v1170 = vadd.f32 %v1105, %v1169
  %1171 = vmatmul.f32.gmra.mxu0 %v913
  %v1172 = vpop.f32.mrf.mxu0
  %v1173 = vadd.f32 %v1108, %v1172
  %1174 = vmatmul.f32.gmra.mxu0 %v916
  %v1175 = vpop.f32.mrf.mxu0
  %v1176 = vadd.f32 %v1111, %v1175
  %1177 = vmatmul.f32.gmra.mxu0 %v919
  %v1178 = vpop.f32.mrf.mxu0
  %v1179 = vadd.f32 %v1114, %v1178
  %1180 = vmatmul.f32.gmra.mxu0 %v922
  %v1181 = vpop.f32.mrf.mxu0
  %v1182 = vadd.f32 %v1117, %v1181
  %1183 = vmatmul.f32.gmra.mxu0 %v925
  %v1184 = vpop.f32.mrf.mxu0
  %v1185 = vadd.f32 %v1120, %v1184
  %1186 = vmatmul.f32.gmra.mxu0 %v928
  %v1187 = vpop.f32.mrf.mxu0
  %v1188 = vadd.f32 %v1123, %v1187
  %1189 = vmatmul.f32.gmra.mxu0 %v931
  %v1190 = vpop.f32.mrf.mxu0
  %v1191 = vadd.f32 %v1126, %v1190
  %1192 = vmatmul.f32.gmra.mxu0 %v934
  %v1193 = vpop.f32.mrf.mxu0
  %v1194 = vadd.f32 %v1129, %v1193
  %1195 = vmatmul.f32.gmra.mxu0 %v937
  %v1196 = vpop.f32.mrf.mxu0
  %v1197 = vadd.f32 %v1132, %v1196
  %1198 = vdwg.mxu0
  %v1199 = vmax.f32 %v810, %v1152
  %v1200 = vmax.f32 %v811, %v1155
  %v1201 = vmax.f32 %v812, %v1158
  %v1202 = vmax.f32 %v813, %v1161
  %v1203 = vmax.f32 %v814, %v1164
  %v1204 = vmax.f32 %v815, %v1167
  %v1205 = vmax.f32 %v816, %v1170
  %v1206 = vmax.f32 %v817, %v1173
  %v1207 = vmax.f32 %v818, %v1176
  %v1208 = vmax.f32 %v819, %v1179
  %v1209 = vmax.f32 %v820, %v1182
  %v1210 = vmax.f32 %v821, %v1185
  %v1211 = vmax.f32 %v822, %v1188
  %v1212 = vmax.f32 %v823, %v1191
  %v1213 = vmax.f32 %v824, %v1194
  %v1214 = vmax.f32 %v825, %v1197
  %s1215 = scalar_lea.vmem %s0, 1536
  %v1216 = vld [vmem:[%s1215] sm:$0xff]
  %v1217 = vld [vmem:[%s1215 + $0x8] sm:$0xff]
  %v1218 = vld [vmem:[%s1215 + $0x10] sm:$0xff]
  %v1219 = vld [vmem:[%s1215 + $0x18] sm:$0xff]
  %v1220 = vld [vmem:[%s1215 + $0x20] sm:$0xff]
  %v1221 = vld [vmem:[%s1215 + $0x28] sm:$0xff]
  %v1222 = vld [vmem:[%s1215 + $0x30] sm:$0xff]
  %v1223 = vld [vmem:[%s1215 + $0x38] sm:$0xff]
  %v1224 = vld [vmem:[%s1215 + $0x40] sm:$0xff]
  %v1225 = vld [vmem:[%s1215 + $0x48] sm:$0xff]
  %v1226 = vld [vmem:[%s1215 + $0x50] sm:$0xff]
  %v1227 = vld [vmem:[%s1215 + $0x58] sm:$0xff]
  %v1228 = vld [vmem:[%s1215 + $0x60] sm:$0xff]
  %v1229 = vld [vmem:[%s1215 + $0x68] sm:$0xff]
  %v1230 = vld [vmem:[%s1215 + $0x70] sm:$0xff]
  %v1231 = vld [vmem:[%s1215 + $0x78] sm:$0xff]
  %v1232 = vld [vmem:[%s1215 + $0x80] sm:$0xff]
  %v1233 = vld [vmem:[%s1215 + $0x88] sm:$0xff]
  %v1234 = vld [vmem:[%s1215 + $0x90] sm:$0xff]
  %v1235 = vld [vmem:[%s1215 + $0x98] sm:$0xff]
  %v1236 = vld [vmem:[%s1215 + $0xa0] sm:$0xff]
  %v1237 = vld [vmem:[%s1215 + $0xa8] sm:$0xff]
  %v1238 = vld [vmem:[%s1215 + $0xb0] sm:$0xff]
  %v1239 = vld [vmem:[%s1215 + $0xb8] sm:$0xff]
  %v1240 = vld [vmem:[%s1215 + $0xc0] sm:$0xff]
  %v1241 = vld [vmem:[%s1215 + $0xc8] sm:$0xff]
  %v1242 = vld [vmem:[%s1215 + $0xd0] sm:$0xff]
  %v1243 = vld [vmem:[%s1215 + $0xd8] sm:$0xff]
  %v1244 = vld [vmem:[%s1215 + $0xe0] sm:$0xff]
  %v1245 = vld [vmem:[%s1215 + $0xe8] sm:$0xff]
  %v1246 = vld [vmem:[%s1215 + $0xf0] sm:$0xff]
  %v1247 = vld [vmem:[%s1215 + $0xf8] sm:$0xff]
  %v1248 = vld [vmem:[%s1215 + $0x100] sm:$0xff]
  %v1249 = vld [vmem:[%s1215 + $0x108] sm:$0xff]
  %v1250 = vld [vmem:[%s1215 + $0x110] sm:$0xff]
  %v1251 = vld [vmem:[%s1215 + $0x118] sm:$0xff]
  %v1252 = vld [vmem:[%s1215 + $0x120] sm:$0xff]
  %v1253 = vld [vmem:[%s1215 + $0x128] sm:$0xff]
  %v1254 = vld [vmem:[%s1215 + $0x130] sm:$0xff]
  %v1255 = vld [vmem:[%s1215 + $0x138] sm:$0xff]
  %v1256 = vld [vmem:[%s1215 + $0x140] sm:$0xff]
  %v1257 = vld [vmem:[%s1215 + $0x148] sm:$0xff]
  %v1258 = vld [vmem:[%s1215 + $0x150] sm:$0xff]
  %v1259 = vld [vmem:[%s1215 + $0x158] sm:$0xff]
  %v1260 = vld [vmem:[%s1215 + $0x160] sm:$0xff]
  %v1261 = vld [vmem:[%s1215 + $0x168] sm:$0xff]
  %v1262 = vld [vmem:[%s1215 + $0x170] sm:$0xff]
  %v1263 = vld [vmem:[%s1215 + $0x178] sm:$0xff]
  %v1264 = vld [vmem:[%s1215 + $0x180] sm:$0xff]
  %v1265 = vld [vmem:[%s1215 + $0x188] sm:$0xff]
  %v1266 = vld [vmem:[%s1215 + $0x190] sm:$0xff]
  %v1267 = vld [vmem:[%s1215 + $0x198] sm:$0xff]
  %v1268 = vld [vmem:[%s1215 + $0x1a0] sm:$0xff]
  %v1269 = vld [vmem:[%s1215 + $0x1a8] sm:$0xff]
  %v1270 = vld [vmem:[%s1215 + $0x1b0] sm:$0xff]
  %v1271 = vld [vmem:[%s1215 + $0x1b8] sm:$0xff]
  %v1272 = vld [vmem:[%s1215 + $0x1c0] sm:$0xff]
  %v1273 = vld [vmem:[%s1215 + $0x1c8] sm:$0xff]
  %v1274 = vld [vmem:[%s1215 + $0x1d0] sm:$0xff]
  %v1275 = vld [vmem:[%s1215 + $0x1d8] sm:$0xff]
  %v1276 = vld [vmem:[%s1215 + $0x1e0] sm:$0xff]
  %v1277 = vld [vmem:[%s1215 + $0x1e8] sm:$0xff]
  %v1278 = vld [vmem:[%s1215 + $0x1f0] sm:$0xff]
  %v1279 = vld [vmem:[%s1215 + $0x1f8] sm:$0xff]
  %v1281 = vsel %vm128, %v1219, 0
  %v1284 = vsel %vm128, %v1223, 0
  %v1287 = vsel %vm128, %v1227, 0
  %v1290 = vsel %vm128, %v1231, 0
  %v1293 = vsel %vm128, %v1235, 0
  %v1296 = vsel %vm128, %v1239, 0
  %v1299 = vsel %vm128, %v1243, 0
  %v1302 = vsel %vm128, %v1247, 0
  %v1305 = vsel %vm128, %v1251, 0
  %v1308 = vsel %vm128, %v1255, 0
  %v1311 = vsel %vm128, %v1259, 0
  %v1314 = vsel %vm128, %v1263, 0
  %v1317 = vsel %vm128, %v1267, 0
  %v1320 = vsel %vm128, %v1271, 0
  %v1323 = vsel %vm128, %v1275, 0
  %v1326 = vsel %vm128, %v1279, 0
  %1328 = vmatpush.msra.mxu0 %v29
  %1329 = vmatpush.msra.mxu0 %v28
  %1330 = vmatpush.msra.mxu0 %v27
  %1331 = vmatpush.msra.mxu0 %v26
  %1332 = vmatpush.msra.mxu0 %v25
  %1333 = vmatpush.msra.mxu0 %v24
  %1334 = vmatpush.msra.mxu0 %v23
  %1335 = vmatpush.msra.mxu0 %v22
  %1336 = vmatpush.msra.mxu0 %v21
  %1337 = vmatpush.msra.mxu0 %v20
  %1338 = vmatpush.msra.mxu0 %v19
  %1339 = vmatpush.msra.mxu0 %v18
  %1340 = vmatpush.msra.mxu0 %v17
  %1341 = vmatpush.msra.mxu0 %v16
  %1342 = vmatpush.msra.mxu0 %v15
  %1343 = vmatpush.msra.mxu0 %v14
  %1344 = vmatmul.f32.gmra.mxu0 %v1216
  %v1345 = vpop.f32.mrf.mxu0
  %v1346 = vadd.f32 0.0, %v1345
  %1347 = vmatmul.f32.gmra.mxu0 %v1220
  %v1348 = vpop.f32.mrf.mxu0
  %v1349 = vadd.f32 0.0, %v1348
  %1350 = vmatmul.f32.gmra.mxu0 %v1224
  %v1351 = vpop.f32.mrf.mxu0
  %v1352 = vadd.f32 0.0, %v1351
  %1353 = vmatmul.f32.gmra.mxu0 %v1228
  %v1354 = vpop.f32.mrf.mxu0
  %v1355 = vadd.f32 0.0, %v1354
  %1356 = vmatmul.f32.gmra.mxu0 %v1232
  %v1357 = vpop.f32.mrf.mxu0
  %v1358 = vadd.f32 0.0, %v1357
  %1359 = vmatmul.f32.gmra.mxu0 %v1236
  %v1360 = vpop.f32.mrf.mxu0
  %v1361 = vadd.f32 0.0, %v1360
  %1362 = vmatmul.f32.gmra.mxu0 %v1240
  %v1363 = vpop.f32.mrf.mxu0
  %v1364 = vadd.f32 0.0, %v1363
  %1365 = vmatmul.f32.gmra.mxu0 %v1244
  %v1366 = vpop.f32.mrf.mxu0
  %v1367 = vadd.f32 0.0, %v1366
  %1368 = vmatmul.f32.gmra.mxu0 %v1248
  %v1369 = vpop.f32.mrf.mxu0
  %v1370 = vadd.f32 0.0, %v1369
  %1371 = vmatmul.f32.gmra.mxu0 %v1252
  %v1372 = vpop.f32.mrf.mxu0
  %v1373 = vadd.f32 0.0, %v1372
  %1374 = vmatmul.f32.gmra.mxu0 %v1256
  %v1375 = vpop.f32.mrf.mxu0
  %v1376 = vadd.f32 0.0, %v1375
  %1377 = vmatmul.f32.gmra.mxu0 %v1260
  %v1378 = vpop.f32.mrf.mxu0
  %v1379 = vadd.f32 0.0, %v1378
  %1380 = vmatmul.f32.gmra.mxu0 %v1264
  %v1381 = vpop.f32.mrf.mxu0
  %v1382 = vadd.f32 0.0, %v1381
  %1383 = vmatmul.f32.gmra.mxu0 %v1268
  %v1384 = vpop.f32.mrf.mxu0
  %v1385 = vadd.f32 0.0, %v1384
  %1386 = vmatmul.f32.gmra.mxu0 %v1272
  %v1387 = vpop.f32.mrf.mxu0
  %v1388 = vadd.f32 0.0, %v1387
  %1389 = vmatmul.f32.gmra.mxu0 %v1276
  %v1390 = vpop.f32.mrf.mxu0
  %v1391 = vadd.f32 0.0, %v1390
  %1392 = vdwg.mxu0
  %1393 = vmatpush.msra.mxu0 %v45
  %1394 = vmatpush.msra.mxu0 %v44
  %1395 = vmatpush.msra.mxu0 %v43
  %1396 = vmatpush.msra.mxu0 %v42
  %1397 = vmatpush.msra.mxu0 %v41
  %1398 = vmatpush.msra.mxu0 %v40
  %1399 = vmatpush.msra.mxu0 %v39
  %1400 = vmatpush.msra.mxu0 %v38
  %1401 = vmatpush.msra.mxu0 %v37
  %1402 = vmatpush.msra.mxu0 %v36
  %1403 = vmatpush.msra.mxu0 %v35
  %1404 = vmatpush.msra.mxu0 %v34
  %1405 = vmatpush.msra.mxu0 %v33
  %1406 = vmatpush.msra.mxu0 %v32
  %1407 = vmatpush.msra.mxu0 %v31
  %1408 = vmatpush.msra.mxu0 %v30
  %1409 = vmatmul.f32.gmra.mxu0 %v1217
  %v1410 = vpop.f32.mrf.mxu0
  %v1411 = vadd.f32 %v1346, %v1410
  %1412 = vmatmul.f32.gmra.mxu0 %v1221
  %v1413 = vpop.f32.mrf.mxu0
  %v1414 = vadd.f32 %v1349, %v1413
  %1415 = vmatmul.f32.gmra.mxu0 %v1225
  %v1416 = vpop.f32.mrf.mxu0
  %v1417 = vadd.f32 %v1352, %v1416
  %1418 = vmatmul.f32.gmra.mxu0 %v1229
  %v1419 = vpop.f32.mrf.mxu0
  %v1420 = vadd.f32 %v1355, %v1419
  %1421 = vmatmul.f32.gmra.mxu0 %v1233
  %v1422 = vpop.f32.mrf.mxu0
  %v1423 = vadd.f32 %v1358, %v1422
  %1424 = vmatmul.f32.gmra.mxu0 %v1237
  %v1425 = vpop.f32.mrf.mxu0
  %v1426 = vadd.f32 %v1361, %v1425
  %1427 = vmatmul.f32.gmra.mxu0 %v1241
  %v1428 = vpop.f32.mrf.mxu0
  %v1429 = vadd.f32 %v1364, %v1428
  %1430 = vmatmul.f32.gmra.mxu0 %v1245
  %v1431 = vpop.f32.mrf.mxu0
  %v1432 = vadd.f32 %v1367, %v1431
  %1433 = vmatmul.f32.gmra.mxu0 %v1249
  %v1434 = vpop.f32.mrf.mxu0
  %v1435 = vadd.f32 %v1370, %v1434
  %1436 = vmatmul.f32.gmra.mxu0 %v1253
  %v1437 = vpop.f32.mrf.mxu0
  %v1438 = vadd.f32 %v1373, %v1437
  %1439 = vmatmul.f32.gmra.mxu0 %v1257
  %v1440 = vpop.f32.mrf.mxu0
  %v1441 = vadd.f32 %v1376, %v1440
  %1442 = vmatmul.f32.gmra.mxu0 %v1261
  %v1443 = vpop.f32.mrf.mxu0
  %v1444 = vadd.f32 %v1379, %v1443
  %1445 = vmatmul.f32.gmra.mxu0 %v1265
  %v1446 = vpop.f32.mrf.mxu0
  %v1447 = vadd.f32 %v1382, %v1446
  %1448 = vmatmul.f32.gmra.mxu0 %v1269
  %v1449 = vpop.f32.mrf.mxu0
  %v1450 = vadd.f32 %v1385, %v1449
  %1451 = vmatmul.f32.gmra.mxu0 %v1273
  %v1452 = vpop.f32.mrf.mxu0
  %v1453 = vadd.f32 %v1388, %v1452
  %1454 = vmatmul.f32.gmra.mxu0 %v1277
  %v1455 = vpop.f32.mrf.mxu0
  %v1456 = vadd.f32 %v1391, %v1455
  %1457 = vdwg.mxu0
  %1458 = vmatpush.msra.mxu0 %v61
  %1459 = vmatpush.msra.mxu0 %v60
  %1460 = vmatpush.msra.mxu0 %v59
  %1461 = vmatpush.msra.mxu0 %v58
  %1462 = vmatpush.msra.mxu0 %v57
  %1463 = vmatpush.msra.mxu0 %v56
  %1464 = vmatpush.msra.mxu0 %v55
  %1465 = vmatpush.msra.mxu0 %v54
  %1466 = vmatpush.msra.mxu0 %v53
  %1467 = vmatpush.msra.mxu0 %v52
  %1468 = vmatpush.msra.mxu0 %v51
  %1469 = vmatpush.msra.mxu0 %v50
  %1470 = vmatpush.msra.mxu0 %v49
  %1471 = vmatpush.msra.mxu0 %v48
  %1472 = vmatpush.msra.mxu0 %v47
  %1473 = vmatpush.msra.mxu0 %v46
  %1474 = vmatmul.f32.gmra.mxu0 %v1218
  %v1475 = vpop.f32.mrf.mxu0
  %v1476 = vadd.f32 %v1411, %v1475
  %1477 = vmatmul.f32.gmra.mxu0 %v1222
  %v1478 = vpop.f32.mrf.mxu0
  %v1479 = vadd.f32 %v1414, %v1478
  %1480 = vmatmul.f32.gmra.mxu0 %v1226
  %v1481 = vpop.f32.mrf.mxu0
  %v1482 = vadd.f32 %v1417, %v1481
  %1483 = vmatmul.f32.gmra.mxu0 %v1230
  %v1484 = vpop.f32.mrf.mxu0
  %v1485 = vadd.f32 %v1420, %v1484
  %1486 = vmatmul.f32.gmra.mxu0 %v1234
  %v1487 = vpop.f32.mrf.mxu0
  %v1488 = vadd.f32 %v1423, %v1487
  %1489 = vmatmul.f32.gmra.mxu0 %v1238
  %v1490 = vpop.f32.mrf.mxu0
  %v1491 = vadd.f32 %v1426, %v1490
  %1492 = vmatmul.f32.gmra.mxu0 %v1242
  %v1493 = vpop.f32.mrf.mxu0
  %v1494 = vadd.f32 %v1429, %v1493
  %1495 = vmatmul.f32.gmra.mxu0 %v1246
  %v1496 = vpop.f32.mrf.mxu0
  %v1497 = vadd.f32 %v1432, %v1496
  %1498 = vmatmul.f32.gmra.mxu0 %v1250
  %v1499 = vpop.f32.mrf.mxu0
  %v1500 = vadd.f32 %v1435, %v1499
  %1501 = vmatmul.f32.gmra.mxu0 %v1254
  %v1502 = vpop.f32.mrf.mxu0
  %v1503 = vadd.f32 %v1438, %v1502
  %1504 = vmatmul.f32.gmra.mxu0 %v1258
  %v1505 = vpop.f32.mrf.mxu0
  %v1506 = vadd.f32 %v1441, %v1505
  %1507 = vmatmul.f32.gmra.mxu0 %v1262
  %v1508 = vpop.f32.mrf.mxu0
  %v1509 = vadd.f32 %v1444, %v1508
  %1510 = vmatmul.f32.gmra.mxu0 %v1266
  %v1511 = vpop.f32.mrf.mxu0
  %v1512 = vadd.f32 %v1447, %v1511
  %1513 = vmatmul.f32.gmra.mxu0 %v1270
  %v1514 = vpop.f32.mrf.mxu0
  %v1515 = vadd.f32 %v1450, %v1514
  %1516 = vmatmul.f32.gmra.mxu0 %v1274
  %v1517 = vpop.f32.mrf.mxu0
  %v1518 = vadd.f32 %v1453, %v1517
  %1519 = vmatmul.f32.gmra.mxu0 %v1278
  %v1520 = vpop.f32.mrf.mxu0
  %v1521 = vadd.f32 %v1456, %v1520
  %1522 = vdwg.mxu0
  %1523 = vmatpush.msra.mxu0 0.0
  %1524 = vmatpush.msra.mxu0 0.0
  %1525 = vmatpush.msra.mxu0 0.0
  %1526 = vmatpush.msra.mxu0 0.0
  %1527 = vmatpush.msra.mxu0 0.0
  %1528 = vmatpush.msra.mxu0 0.0
  %1529 = vmatpush.msra.mxu0 0.0
  %1530 = vmatpush.msra.mxu0 0.0
  %1531 = vmatpush.msra.mxu0 0.0
  %1532 = vmatpush.msra.mxu0 0.0
  %1533 = vmatpush.msra.mxu0 0.0
  %1534 = vmatpush.msra.mxu0 0.0
  %1535 = vmatpush.msra.mxu0 0.0
  %1536 = vmatpush.msra.mxu0 0.0
  %1537 = vmatpush.msra.mxu0 %v63
  %1538 = vmatpush.msra.mxu0 %v62
  %1539 = vmatmul.f32.gmra.mxu0 %v1281
  %v1540 = vpop.f32.mrf.mxu0
  %v1541 = vadd.f32 %v1476, %v1540
  %1542 = vmatmul.f32.gmra.mxu0 %v1284
  %v1543 = vpop.f32.mrf.mxu0
  %v1544 = vadd.f32 %v1479, %v1543
  %1545 = vmatmul.f32.gmra.mxu0 %v1287
  %v1546 = vpop.f32.mrf.mxu0
  %v1547 = vadd.f32 %v1482, %v1546
  %1548 = vmatmul.f32.gmra.mxu0 %v1290
  %v1549 = vpop.f32.mrf.mxu0
  %v1550 = vadd.f32 %v1485, %v1549
  %1551 = vmatmul.f32.gmra.mxu0 %v1293
  %v1552 = vpop.f32.mrf.mxu0
  %v1553 = vadd.f32 %v1488, %v1552
  %1554 = vmatmul.f32.gmra.mxu0 %v1296
  %v1555 = vpop.f32.mrf.mxu0
  %v1556 = vadd.f32 %v1491, %v1555
  %1557 = vmatmul.f32.gmra.mxu0 %v1299
  %v1558 = vpop.f32.mrf.mxu0
  %v1559 = vadd.f32 %v1494, %v1558
  %1560 = vmatmul.f32.gmra.mxu0 %v1302
  %v1561 = vpop.f32.mrf.mxu0
  %v1562 = vadd.f32 %v1497, %v1561
  %1563 = vmatmul.f32.gmra.mxu0 %v1305
  %v1564 = vpop.f32.mrf.mxu0
  %v1565 = vadd.f32 %v1500, %v1564
  %1566 = vmatmul.f32.gmra.mxu0 %v1308
  %v1567 = vpop.f32.mrf.mxu0
  %v1568 = vadd.f32 %v1503, %v1567
  %1569 = vmatmul.f32.gmra.mxu0 %v1311
  %v1570 = vpop.f32.mrf.mxu0
  %v1571 = vadd.f32 %v1506, %v1570
  %1572 = vmatmul.f32.gmra.mxu0 %v1314
  %v1573 = vpop.f32.mrf.mxu0
  %v1574 = vadd.f32 %v1509, %v1573
  %1575 = vmatmul.f32.gmra.mxu0 %v1317
  %v1576 = vpop.f32.mrf.mxu0
  %v1577 = vadd.f32 %v1512, %v1576
  %1578 = vmatmul.f32.gmra.mxu0 %v1320
  %v1579 = vpop.f32.mrf.mxu0
  %v1580 = vadd.f32 %v1515, %v1579
  %1581 = vmatmul.f32.gmra.mxu0 %v1323
  %v1582 = vpop.f32.mrf.mxu0
  %v1583 = vadd.f32 %v1518, %v1582
  %1584 = vmatmul.f32.gmra.mxu0 %v1326
  %v1585 = vpop.f32.mrf.mxu0
  %v1586 = vadd.f32 %v1521, %v1585
  %1587 = vdwg.mxu0
  %v1588 = vmax.f32 %v1199, %v1541
  %v1589 = vmax.f32 %v1200, %v1544
  %v1590 = vmax.f32 %v1201, %v1547
  %v1591 = vmax.f32 %v1202, %v1550
  %v1592 = vmax.f32 %v1203, %v1553
  %v1593 = vmax.f32 %v1204, %v1556
  %v1594 = vmax.f32 %v1205, %v1559
  %v1595 = vmax.f32 %v1206, %v1562
  %v1596 = vmax.f32 %v1207, %v1565
  %v1597 = vmax.f32 %v1208, %v1568
  %v1598 = vmax.f32 %v1209, %v1571
  %v1599 = vmax.f32 %v1210, %v1574
  %v1600 = vmax.f32 %v1211, %v1577
  %v1601 = vmax.f32 %v1212, %v1580
  %v1602 = vmax.f32 %v1213, %v1583
  %v1603 = vmax.f32 %v1214, %v1586
  %v1604 = vld [vmem:[%s2] sm:$0x1]
  %v1606 = vperm.slane %v1604, 0
  %v1608 = vadd.f32 %v1588, %v1606
  %v1609 = vadd.f32 %v1589, %v1606
  %v1610 = vadd.f32 %v1590, %v1606
  %v1611 = vadd.f32 %v1591, %v1606
  %v1612 = vadd.f32 %v1592, %v1606
  %v1613 = vadd.f32 %v1593, %v1606
  %v1614 = vadd.f32 %v1594, %v1606
  %v1615 = vadd.f32 %v1595, %v1606
  %v1616 = vadd.f32 %v1596, %v1606
  %v1617 = vadd.f32 %v1597, %v1606
  %v1618 = vadd.f32 %v1598, %v1606
  %v1619 = vadd.f32 %v1599, %v1606
  %v1620 = vadd.f32 %v1600, %v1606
  %v1621 = vadd.f32 %v1601, %v1606
  %v1622 = vadd.f32 %v1602, %v1606
  %v1623 = vadd.f32 %v1603, %v1606
  %v1624 = vmax.f32 %v1608, 0.0
  %v1625 = vmax.f32 %v1609, 0.0
  %v1626 = vmax.f32 %v1610, 0.0
  %v1627 = vmax.f32 %v1611, 0.0
  %v1628 = vmax.f32 %v1612, 0.0
  %v1629 = vmax.f32 %v1613, 0.0
  %v1630 = vmax.f32 %v1614, 0.0
  %v1631 = vmax.f32 %v1615, 0.0
  %v1632 = vmax.f32 %v1616, 0.0
  %v1633 = vmax.f32 %v1617, 0.0
  %v1634 = vmax.f32 %v1618, 0.0
  %v1635 = vmax.f32 %v1619, 0.0
  %v1636 = vmax.f32 %v1620, 0.0
  %v1637 = vmax.f32 %v1621, 0.0
  %v1638 = vmax.f32 %v1622, 0.0
  %v1639 = vmax.f32 %v1623, 0.0
  %vm1640 = vcmask 261120
  %1641 = vst.msk [vmem:[%s3] sm:$0xff] %vm1640, %v1624
  %1642 = vst.msk [vmem:[%s3 + $0x8] sm:$0xff] %vm1640, %v1625
  %1643 = vst.msk [vmem:[%s3 + $0x10] sm:$0xff] %vm1640, %v1626
  %1644 = vst.msk [vmem:[%s3 + $0x18] sm:$0xff] %vm1640, %v1627
  %1645 = vst.msk [vmem:[%s3 + $0x20] sm:$0xff] %vm1640, %v1628
  %1646 = vst.msk [vmem:[%s3 + $0x28] sm:$0xff] %vm1640, %v1629
  %1647 = vst.msk [vmem:[%s3 + $0x30] sm:$0xff] %vm1640, %v1630
  %1648 = vst.msk [vmem:[%s3 + $0x38] sm:$0xff] %vm1640, %v1631
  %1649 = vst.msk [vmem:[%s3 + $0x40] sm:$0xff] %vm1640, %v1632
  %1650 = vst.msk [vmem:[%s3 + $0x48] sm:$0xff] %vm1640, %v1633
  %1651 = vst.msk [vmem:[%s3 + $0x50] sm:$0xff] %vm1640, %v1634
  %1652 = vst.msk [vmem:[%s3 + $0x58] sm:$0xff] %vm1640, %v1635
  %1653 = vst.msk [vmem:[%s3 + $0x60] sm:$0xff] %vm1640, %v1636
  %1654 = vst.msk [vmem:[%s3 + $0x68] sm:$0xff] %vm1640, %v1637
  %1655 = vst.msk [vmem:[%s3 + $0x70] sm:$0xff] %vm1640, %v1638
  %1656 = vst.msk [vmem:[%s3 + $0x78] sm:$0xff] %vm1640, %v1639
  // Predicated region
  $region14: #{cnn_cifar_forward.4} parent=0 // pred_check
    _
  $region15: #{cnn_cifar_forward.4} parent=0 // pred_check_branch
    %1658 = sbr.rel (0) target = $region17
  $region16: #{cnn_cifar_forward.4} parent=0 // pred_region
    _
  $region17: #{cnn_cifar_forward.4} parent=0 // pred_fallthru
    _
  // Predicated region
  $region18: #{cnn_cifar_forward.4} parent=0 // pred_check
    _
  $region19: #{cnn_cifar_forward.4} parent=0 // pred_check_branch
    %1660 = sbr.rel (0) target = $region21
  $region20: #{cnn_cifar_forward.4} parent=0 // pred_region
    _
  $region21: #{cnn_cifar_forward.4} parent=0 // pred_fallthru
    _

// kernel: cnn_cifar_forward.5
$region0: #{cnn_cifar_forward.5}
  #allocation0 [shape = 'u32[]', space=smem, size = 0x4, offset = 0x4, fixed_abs, tag = 'smem constant byte address 0x4 - core index']
  #allocation1 [shape = 'u32[72,128]{1,0:T(1,128)}', space=vmem, size = 0x9000, scoped, tag = 'internal scratch']
  %s0 = inlined_call_operand.vmem [shape: f32[2,2048], index: 0, kind: input, shape index: {}]
  %s1 = inlined_call_operand.vmem [shape: f32[2048,10], index: 1, kind: input, shape index: {}]
  %s2 = inlined_call_operand.vmem [shape: f32[1,10], index: 2, kind: input, shape index: {}]
  %s3 = inlined_call_operand.hbm [shape: f32[2,10], index: 3, kind: output, shape index: {}]
  %s4 = sld [smem:[#allocation0]]
  $region22: #{cnn_cifar_forward.5} parent=0
    _
  %s6 = ssub.s32 1, %s4
  %s7 = scalar_select 0, %s6, %s4
  $region1: #{cnn_cifar_forward.5} parent=0
    #allocation2 [shape = 'u8[1024]{0}', space=vmem, size = 0x400, scoped, tag = 'output window, operand 0, single buffered']
    #allocation3 [shape = 's32[1]{0}', space=sflag, size = 0x4, scoped, tag = 'scoped memory for cnn_cifar_forward.5']
    %8 = vsyncpa [#allocation3], 0
    // Predicated region
    $region2: #{cnn_cifar_forward.5} parent=1 // pred_check
      _
    $region3: #{cnn_cifar_forward.5} parent=1 // pred_check_branch
      %10 = sbr.rel (0) target = $region5
    $region4: #{cnn_cifar_forward.5} parent=1 // pred_region
      _
    $region5: #{cnn_cifar_forward.5} parent=1 // pred_fallthru
      _
    // Predicated region
    $region6: #{cnn_cifar_forward.5} parent=1 // pred_check
      _
    $region7: #{cnn_cifar_forward.5} parent=1 // pred_check_branch
      %12 = sbr.rel (0) target = $region9
    $region8: #{cnn_cifar_forward.5} parent=1 // pred_region
      _
    $region9: #{cnn_cifar_forward.5} parent=1 // pred_fallthru
      _
    // Predicated region
    $region10: #{cnn_cifar_forward.5} parent=1 // pred_check
      _
    $region11: #{cnn_cifar_forward.5} parent=1 // pred_check_branch
      %14 = sbr.rel (0) target = $region13
    $region12: #{cnn_cifar_forward.5} parent=1 // pred_region
      _
    $region13: #{cnn_cifar_forward.5} parent=1 // pred_fallthru
      _
    %v15 = vld [vmem:[%s0] sm:$0xff]
    %v16 = vld [vmem:[%s0 + $0x8] sm:$0xff]
    %v17 = vld [vmem:[%s0 + $0x10] sm:$0xff]
    %v18 = vld [vmem:[%s0 + $0x18] sm:$0xff]
    %v19 = vld [vmem:[%s1] sm:$0xff]
    %v20 = vld [vmem:[%s1 + $0x8] sm:$0xff]
    %v21 = vld [vmem:[%s1 + $0x10] sm:$0xff]
    %v22 = vld [vmem:[%s1 + $0x18] sm:$0xff]
    %v23 = vld [vmem:[%s1 + $0x20] sm:$0xff]
    %v24 = vld [vmem:[%s1 + $0x28] sm:$0xff]
    %v25 = vld [vmem:[%s1 + $0x30] sm:$0xff]
    %v26 = vld [vmem:[%s1 + $0x38] sm:$0xff]
    %v27 = vld [vmem:[%s1 + $0x40] sm:$0xff]
    %v28 = vld [vmem:[%s1 + $0x48] sm:$0xff]
    %v29 = vld [vmem:[%s1 + $0x50] sm:$0xff]
    %v30 = vld [vmem:[%s1 + $0x58] sm:$0xff]
    %v31 = vld [vmem:[%s1 + $0x60] sm:$0xff]
    %v32 = vld [vmem:[%s1 + $0x68] sm:$0xff]
    %v33 = vld [vmem:[%s1 + $0x70] sm:$0xff]
    %v34 = vld [vmem:[%s1 + $0x78] sm:$0xff]
    %v35 = vld [vmem:[%s1 + $0x80] sm:$0xff]
    %v36 = vld [vmem:[%s1 + $0x88] sm:$0xff]
    %v37 = vld [vmem:[%s1 + $0x90] sm:$0xff]
    %v38 = vld [vmem:[%s1 + $0x98] sm:$0xff]
    %v39 = vld [vmem:[%s1 + $0xa0] sm:$0xff]
    %v40 = vld [vmem:[%s1 + $0xa8] sm:$0xff]
    %v41 = vld [vmem:[%s1 + $0xb0] sm:$0xff]
    %v42 = vld [vmem:[%s1 + $0xb8] sm:$0xff]
    %v43 = vld [vmem:[%s1 + $0xc0] sm:$0xff]
    %v44 = vld [vmem:[%s1 + $0xc8] sm:$0xff]
    %v45 = vld [vmem:[%s1 + $0xd0] sm:$0xff]
    %v46 = vld [vmem:[%s1 + $0xd8] sm:$0xff]
    %v47 = vld [vmem:[%s1 + $0xe0] sm:$0xff]
    %v48 = vld [vmem:[%s1 + $0xe8] sm:$0xff]
    %v49 = vld [vmem:[%s1 + $0xf0] sm:$0xff]
    %v50 = vld [vmem:[%s1 + $0xf8] sm:$0xff]
    %v51 = vld [vmem:[%s1 + $0x100] sm:$0xff]
    %v52 = vld [vmem:[%s1 + $0x108] sm:$0xff]
    %v53 = vld [vmem:[%s1 + $0x110] sm:$0xff]
    %v54 = vld [vmem:[%s1 + $0x118] sm:$0xff]
    %v55 = vld [vmem:[%s1 + $0x120] sm:$0xff]
    %v56 = vld [vmem:[%s1 + $0x128] sm:$0xff]
    %v57 = vld [vmem:[%s1 + $0x130] sm:$0xff]
    %v58 = vld [vmem:[%s1 + $0x138] sm:$0xff]
    %v59 = vld [vmem:[%s1 + $0x140] sm:$0xff]
    %v60 = vld [vmem:[%s1 + $0x148] sm:$0xff]
    %v61 = vld [vmem:[%s1 + $0x150] sm:$0xff]
    %v62 = vld [vmem:[%s1 + $0x158] sm:$0xff]
    %v63 = vld [vmem:[%s1 + $0x160] sm:$0xff]
    %v64 = vld [vmem:[%s1 + $0x168] sm:$0xff]
    %v65 = vld [vmem:[%s1 + $0x170] sm:$0xff]
    %v66 = vld [vmem:[%s1 + $0x178] sm:$0xff]
    %v67 = vld [vmem:[%s1 + $0x180] sm:$0xff]
    %v68 = vld [vmem:[%s1 + $0x188] sm:$0xff]
    %v69 = vld [vmem:[%s1 + $0x190] sm:$0xff]
    %v70 = vld [vmem:[%s1 + $0x198] sm:$0xff]
    %v71 = vld [vmem:[%s1 + $0x1a0] sm:$0xff]
    %v72 = vld [vmem:[%s1 + $0x1a8] sm:$0xff]
    %v73 = vld [vmem:[%s1 + $0x1b0] sm:$0xff]
    %v74 = vld [vmem:[%s1 + $0x1b8] sm:$0xff]
    %v75 = vld [vmem:[%s1 + $0x1c0] sm:$0xff]
    %v76 = vld [vmem:[%s1 + $0x1c8] sm:$0xff]
    %v77 = vld [vmem:[%s1 + $0x1d0] sm:$0xff]
    %v78 = vld [vmem:[%s1 + $0x1d8] sm:$0xff]
    %v79 = vld [vmem:[%s1 + $0x1e0] sm:$0xff]
    %v80 = vld [vmem:[%s1 + $0x1e8] sm:$0xff]
    %v81 = vld [vmem:[%s1 + $0x1f0] sm:$0xff]
    %v82 = vld [vmem:[%s1 + $0x1f8] sm:$0xff]
    %v83 = vld [vmem:[%s1 + $0x200] sm:$0xff]
    %v84 = vld [vmem:[%s1 + $0x208] sm:$0xff]
    %v85 = vld [vmem:[%s1 + $0x210] sm:$0xff]
    %v86 = vld [vmem:[%s1 + $0x218] sm:$0xff]
    %v87 = vld [vmem:[%s1 + $0x220] sm:$0xff]
    %v88 = vld [vmem:[%s1 + $0x228] sm:$0xff]
    %v89 = vld [vmem:[%s1 + $0x230] sm:$0xff]
    %v90 = vld [vmem:[%s1 + $0x238] sm:$0xff]
    %v91 = vld [vmem:[%s1 + $0x240] sm:$0xff]
    %v92 = vld [vmem:[%s1 + $0x248] sm:$0xff]
    %v93 = vld [vmem:[%s1 + $0x250] sm:$0xff]
    %v94 = vld [vmem:[%s1 + $0x258] sm:$0xff]
    %v95 = vld [vmem:[%s1 + $0x260] sm:$0xff]
    %v96 = vld [vmem:[%s1 + $0x268] sm:$0xff]
    %v97 = vld [vmem:[%s1 + $0x270] sm:$0xff]
    %v98 = vld [vmem:[%s1 + $0x278] sm:$0xff]
    %v99 = vld [vmem:[%s1 + $0x280] sm:$0xff]
    %v100 = vld [vmem:[%s1 + $0x288] sm:$0xff]
    %v101 = vld [vmem:[%s1 + $0x290] sm:$0xff]
    %v102 = vld [vmem:[%s1 + $0x298] sm:$0xff]
    %v103 = vld [vmem:[%s1 + $0x2a0] sm:$0xff]
    %v104 = vld [vmem:[%s1 + $0x2a8] sm:$0xff]
    %v105 = vld [vmem:[%s1 + $0x2b0] sm:$0xff]
    %v106 = vld [vmem:[%s1 + $0x2b8] sm:$0xff]
    %v107 = vld [vmem:[%s1 + $0x2c0] sm:$0xff]
    %v108 = vld [vmem:[%s1 + $0x2c8] sm:$0xff]
    %v109 = vld [vmem:[%s1 + $0x2d0] sm:$0xff]
    %v110 = vld [vmem:[%s1 + $0x2d8] sm:$0xff]
    %v111 = vld [vmem:[%s1 + $0x2e0] sm:$0xff]
    %v112 = vld [vmem:[%s1 + $0x2e8] sm:$0xff]
    %v113 = vld [vmem:[%s1 + $0x2f0] sm:$0xff]
    %v114 = vld [vmem:[%s1 + $0x2f8] sm:$0xff]
    %v115 = vld [vmem:[%s1 + $0x300] sm:$0xff]
    %v116 = vld [vmem:[%s1 + $0x308] sm:$0xff]
    %v117 = vld [vmem:[%s1 + $0x310] sm:$0xff]
    %v118 = vld [vmem:[%s1 + $0x318] sm:$0xff]
    %v119 = vld [vmem:[%s1 + $0x320] sm:$0xff]
    %v120 = vld [vmem:[%s1 + $0x328] sm:$0xff]
    %v121 = vld [vmem:[%s1 + $0x330] sm:$0xff]
    %v122 = vld [vmem:[%s1 + $0x338] sm:$0xff]
    %v123 = vld [vmem:[%s1 + $0x340] sm:$0xff]
    %v124 = vld [vmem:[%s1 + $0x348] sm:$0xff]
    %v125 = vld [vmem:[%s1 + $0x350] sm:$0xff]
    %v126 = vld [vmem:[%s1 + $0x358] sm:$0xff]
    %v127 = vld [vmem:[%s1 + $0x360] sm:$0xff]
    %v128 = vld [vmem:[%s1 + $0x368] sm:$0xff]
    %v129 = vld [vmem:[%s1 + $0x370] sm:$0xff]
    %v130 = vld [vmem:[%s1 + $0x378] sm:$0xff]
    %v131 = vld [vmem:[%s1 + $0x380] sm:$0xff]
    %v132 = vld [vmem:[%s1 + $0x388] sm:$0xff]
    %v133 = vld [vmem:[%s1 + $0x390] sm:$0xff]
    %v134 = vld [vmem:[%s1 + $0x398] sm:$0xff]
    %v135 = vld [vmem:[%s1 + $0x3a0] sm:$0xff]
    %v136 = vld [vmem:[%s1 + $0x3a8] sm:$0xff]
    %v137 = vld [vmem:[%s1 + $0x3b0] sm:$0xff]
    %v138 = vld [vmem:[%s1 + $0x3b8] sm:$0xff]
    %v139 = vld [vmem:[%s1 + $0x3c0] sm:$0xff]
    %v140 = vld [vmem:[%s1 + $0x3c8] sm:$0xff]
    %v141 = vld [vmem:[%s1 + $0x3d0] sm:$0xff]
    %v142 = vld [vmem:[%s1 + $0x3d8] sm:$0xff]
    %v143 = vld [vmem:[%s1 + $0x3e0] sm:$0xff]
    %v144 = vld [vmem:[%s1 + $0x3e8] sm:$0xff]
    %v145 = vld [vmem:[%s1 + $0x3f0] sm:$0xff]
    %v146 = vld [vmem:[%s1 + $0x3f8] sm:$0xff]
    %v147 = vld [vmem:[%s1 + $0x400] sm:$0xff]
    %v148 = vld [vmem:[%s1 + $0x408] sm:$0xff]
    %v149 = vld [vmem:[%s1 + $0x410] sm:$0xff]
    %v150 = vld [vmem:[%s1 + $0x418] sm:$0xff]
    %v151 = vld [vmem:[%s1 + $0x420] sm:$0xff]
    %v152 = vld [vmem:[%s1 + $0x428] sm:$0xff]
    %v153 = vld [vmem:[%s1 + $0x430] sm:$0xff]
    %v154 = vld [vmem:[%s1 + $0x438] sm:$0xff]
    %v155 = vld [vmem:[%s1 + $0x440] sm:$0xff]
    %v156 = vld [vmem:[%s1 + $0x448] sm:$0xff]
    %v157 = vld [vmem:[%s1 + $0x450] sm:$0xff]
    %v158 = vld [vmem:[%s1 + $0x458] sm:$0xff]
    %v159 = vld [vmem:[%s1 + $0x460] sm:$0xff]
    %v160 = vld [vmem:[%s1 + $0x468] sm:$0xff]
    %v161 = vld [vmem:[%s1 + $0x470] sm:$0xff]
    %v162 = vld [vmem:[%s1 + $0x478] sm:$0xff]
    %v163 = vld [vmem:[%s1 + $0x480] sm:$0xff]
    %v164 = vld [vmem:[%s1 + $0x488] sm:$0xff]
    %v165 = vld [vmem:[%s1 + $0x490] sm:$0xff]
    %v166 = vld [vmem:[%s1 + $0x498] sm:$0xff]
    %v167 = vld [vmem:[%s1 + $0x4a0] sm:$0xff]
    %v168 = vld [vmem:[%s1 + $0x4a8] sm:$0xff]
    %v169 = vld [vmem:[%s1 + $0x4b0] sm:$0xff]
    %v170 = vld [vmem:[%s1 + $0x4b8] sm:$0xff]
    %v171 = vld [vmem:[%s1 + $0x4c0] sm:$0xff]
    %v172 = vld [vmem:[%s1 + $0x4c8] sm:$0xff]
    %v173 = vld [vmem:[%s1 + $0x4d0] sm:$0xff]
    %v174 = vld [vmem:[%s1 + $0x4d8] sm:$0xff]
    %v175 = vld [vmem:[%s1 + $0x4e0] sm:$0xff]
    %v176 = vld [vmem:[%s1 + $0x4e8] sm:$0xff]
    %v177 = vld [vmem:[%s1 + $0x4f0] sm:$0xff]
    %v178 = vld [vmem:[%s1 + $0x4f8] sm:$0xff]
    %v179 = vld [vmem:[%s1 + $0x500] sm:$0xff]
    %v180 = vld [vmem:[%s1 + $0x508] sm:$0xff]
    %v181 = vld [vmem:[%s1 + $0x510] sm:$0xff]
    %v182 = vld [vmem:[%s1 + $0x518] sm:$0xff]
    %v183 = vld [vmem:[%s1 + $0x520] sm:$0xff]
    %v184 = vld [vmem:[%s1 + $0x528] sm:$0xff]
    %v185 = vld [vmem:[%s1 + $0x530] sm:$0xff]
    %v186 = vld [vmem:[%s1 + $0x538] sm:$0xff]
    %v187 = vld [vmem:[%s1 + $0x540] sm:$0xff]
    %v188 = vld [vmem:[%s1 + $0x548] sm:$0xff]
    %v189 = vld [vmem:[%s1 + $0x550] sm:$0xff]
    %v190 = vld [vmem:[%s1 + $0x558] sm:$0xff]
    %v191 = vld [vmem:[%s1 + $0x560] sm:$0xff]
    %v192 = vld [vmem:[%s1 + $0x568] sm:$0xff]
    %v193 = vld [vmem:[%s1 + $0x570] sm:$0xff]
    %v194 = vld [vmem:[%s1 + $0x578] sm:$0xff]
    %v195 = vld [vmem:[%s1 + $0x580] sm:$0xff]
    %v196 = vld [vmem:[%s1 + $0x588] sm:$0xff]
    %v197 = vld [vmem:[%s1 + $0x590] sm:$0xff]
    %v198 = vld [vmem:[%s1 + $0x598] sm:$0xff]
    %v199 = vld [vmem:[%s1 + $0x5a0] sm:$0xff]
    %v200 = vld [vmem:[%s1 + $0x5a8] sm:$0xff]
    %v201 = vld [vmem:[%s1 + $0x5b0] sm:$0xff]
    %v202 = vld [vmem:[%s1 + $0x5b8] sm:$0xff]
    %v203 = vld [vmem:[%s1 + $0x5c0] sm:$0xff]
    %v204 = vld [vmem:[%s1 + $0x5c8] sm:$0xff]
    %v205 = vld [vmem:[%s1 + $0x5d0] sm:$0xff]
    %v206 = vld [vmem:[%s1 + $0x5d8] sm:$0xff]
    %v207 = vld [vmem:[%s1 + $0x5e0] sm:$0xff]
    %v208 = vld [vmem:[%s1 + $0x5e8] sm:$0xff]
    %v209 = vld [vmem:[%s1 + $0x5f0] sm:$0xff]
    %v210 = vld [vmem:[%s1 + $0x5f8] sm:$0xff]
    %v211 = vld [vmem:[%s1 + $0x600] sm:$0xff]
    %v212 = vld [vmem:[%s1 + $0x608] sm:$0xff]
    %v213 = vld [vmem:[%s1 + $0x610] sm:$0xff]
    %v214 = vld [vmem:[%s1 + $0x618] sm:$0xff]
    %v215 = vld [vmem:[%s1 + $0x620] sm:$0xff]
    %v216 = vld [vmem:[%s1 + $0x628] sm:$0xff]
    %v217 = vld [vmem:[%s1 + $0x630] sm:$0xff]
    %v218 = vld [vmem:[%s1 + $0x638] sm:$0xff]
    %v219 = vld [vmem:[%s1 + $0x640] sm:$0xff]
    %v220 = vld [vmem:[%s1 + $0x648] sm:$0xff]
    %v221 = vld [vmem:[%s1 + $0x650] sm:$0xff]
    %v222 = vld [vmem:[%s1 + $0x658] sm:$0xff]
    %v223 = vld [vmem:[%s1 + $0x660] sm:$0xff]
    %v224 = vld [vmem:[%s1 + $0x668] sm:$0xff]
    %v225 = vld [vmem:[%s1 + $0x670] sm:$0xff]
    %v226 = vld [vmem:[%s1 + $0x678] sm:$0xff]
    %v227 = vld [vmem:[%s1 + $0x680] sm:$0xff]
    %v228 = vld [vmem:[%s1 + $0x688] sm:$0xff]
    %v229 = vld [vmem:[%s1 + $0x690] sm:$0xff]
    %v230 = vld [vmem:[%s1 + $0x698] sm:$0xff]
    %v231 = vld [vmem:[%s1 + $0x6a0] sm:$0xff]
    %v232 = vld [vmem:[%s1 + $0x6a8] sm:$0xff]
    %v233 = vld [vmem:[%s1 + $0x6b0] sm:$0xff]
    %v234 = vld [vmem:[%s1 + $0x6b8] sm:$0xff]
    %v235 = vld [vmem:[%s1 + $0x6c0] sm:$0xff]
    %v236 = vld [vmem:[%s1 + $0x6c8] sm:$0xff]
    %v237 = vld [vmem:[%s1 + $0x6d0] sm:$0xff]
    %v238 = vld [vmem:[%s1 + $0x6d8] sm:$0xff]
    %v239 = vld [vmem:[%s1 + $0x6e0] sm:$0xff]
    %v240 = vld [vmem:[%s1 + $0x6e8] sm:$0xff]
    %v241 = vld [vmem:[%s1 + $0x6f0] sm:$0xff]
    %v242 = vld [vmem:[%s1 + $0x6f8] sm:$0xff]
    %v243 = vld [vmem:[%s1 + $0x700] sm:$0xff]
    %v244 = vld [vmem:[%s1 + $0x708] sm:$0xff]
    %v245 = vld [vmem:[%s1 + $0x710] sm:$0xff]
    %v246 = vld [vmem:[%s1 + $0x718] sm:$0xff]
    %v247 = vld [vmem:[%s1 + $0x720] sm:$0xff]
    %v248 = vld [vmem:[%s1 + $0x728] sm:$0xff]
    %v249 = vld [vmem:[%s1 + $0x730] sm:$0xff]
    %v250 = vld [vmem:[%s1 + $0x738] sm:$0xff]
    %v251 = vld [vmem:[%s1 + $0x740] sm:$0xff]
    %v252 = vld [vmem:[%s1 + $0x748] sm:$0xff]
    %v253 = vld [vmem:[%s1 + $0x750] sm:$0xff]
    %v254 = vld [vmem:[%s1 + $0x758] sm:$0xff]
    %v255 = vld [vmem:[%s1 + $0x760] sm:$0xff]
    %v256 = vld [vmem:[%s1 + $0x768] sm:$0xff]
    %v257 = vld [vmem:[%s1 + $0x770] sm:$0xff]
    %v258 = vld [vmem:[%s1 + $0x778] sm:$0xff]
    %v259 = vld [vmem:[%s1 + $0x780] sm:$0xff]
    %v260 = vld [vmem:[%s1 + $0x788] sm:$0xff]
    %v261 = vld [vmem:[%s1 + $0x790] sm:$0xff]
    %v262 = vld [vmem:[%s1 + $0x798] sm:$0xff]
    %v263 = vld [vmem:[%s1 + $0x7a0] sm:$0xff]
    %v264 = vld [vmem:[%s1 + $0x7a8] sm:$0xff]
    %v265 = vld [vmem:[%s1 + $0x7b0] sm:$0xff]
    %v266 = vld [vmem:[%s1 + $0x7b8] sm:$0xff]
    %v267 = vld [vmem:[%s1 + $0x7c0] sm:$0xff]
    %v268 = vld [vmem:[%s1 + $0x7c8] sm:$0xff]
    %v269 = vld [vmem:[%s1 + $0x7d0] sm:$0xff]
    %v270 = vld [vmem:[%s1 + $0x7d8] sm:$0xff]
    %v271 = vld [vmem:[%s1 + $0x7e0] sm:$0xff]
    %v272 = vld [vmem:[%s1 + $0x7e8] sm:$0xff]
    %v273 = vld [vmem:[%s1 + $0x7f0] sm:$0xff]
    %v274 = vld [vmem:[%s1 + $0x7f8] sm:$0xff]
    %v275 = vld [vmem:[%s2] sm:$0x1]
    %v277 = vperm.slane %v275, 0
    %283 = vst [vmem:[#allocation1] ss:$4 sm:$0xff] %v15
    %s284 = scalar_lea.vmem [#allocation1], 32
    %285 = vst [vmem:[%s284] ss:$4 sm:$0xff] %v16
    %v286 = vld.sshfl [vmem:[#allocation1] sm:$0xff pattern:$0x73625140]
    %v287 = vld.sshfl [vmem:[#allocation1 + $0x8] sm:$0xff pattern:$0x73625140]
    %v288 = vld.sshfl [vmem:[#allocation1 + $0x10] sm:$0xff pattern:$0x73625140]
    %v289 = vld.sshfl [vmem:[#allocation1 + $0x18] sm:$0xff pattern:$0x73625140]
    %v290 = vld.sshfl [vmem:[#allocation1 + $0x20] sm:$0xff pattern:$0x73625140]
    %v291 = vld.sshfl [vmem:[#allocation1 + $0x28] sm:$0xff pattern:$0x73625140]
    %v292 = vld.sshfl [vmem:[#allocation1 + $0x30] sm:$0xff pattern:$0x73625140]
    %v293 = vld.sshfl [vmem:[#allocation1 + $0x38] sm:$0xff pattern:$0x73625140]
    %294 = vst [vmem:[#allocation1] ss:$4 sm:$0xff] %v17
    %295 = vst [vmem:[%s284] ss:$4 sm:$0xff] %v18
    %v296 = vld.sshfl [vmem:[#allocation1] sm:$0xff pattern:$0x73625140]
    %v297 = vld.sshfl [vmem:[#allocation1 + $0x8] sm:$0xff pattern:$0x73625140]
    %v298 = vld.sshfl [vmem:[#allocation1 + $0x10] sm:$0xff pattern:$0x73625140]
    %v299 = vld.sshfl [vmem:[#allocation1 + $0x18] sm:$0xff pattern:$0x73625140]
    %v300 = vld.sshfl [vmem:[#allocation1 + $0x20] sm:$0xff pattern:$0x73625140]
    %v301 = vld.sshfl [vmem:[#allocation1 + $0x28] sm:$0xff pattern:$0x73625140]
    %v302 = vld.sshfl [vmem:[#allocation1 + $0x30] sm:$0xff pattern:$0x73625140]
    %v303 = vld.sshfl [vmem:[#allocation1 + $0x38] sm:$0xff pattern:$0x73625140]
    %320 = vmatpush.msra.mxu0 %v34
    %321 = vmatpush.msra.mxu0 %v33
    %322 = vmatpush.msra.mxu0 %v32
    %323 = vmatpush.msra.mxu0 %v31
    %324 = vmatpush.msra.mxu0 %v30
    %325 = vmatpush.msra.mxu0 %v29
    %326 = vmatpush.msra.mxu0 %v28
    %327 = vmatpush.msra.mxu0 %v27
    %328 = vmatpush.msra.mxu0 %v26
    %329 = vmatpush.msra.mxu0 %v25
    %330 = vmatpush.msra.mxu0 %v24
    %331 = vmatpush.msra.mxu0 %v23
    %332 = vmatpush.msra.mxu0 %v22
    %333 = vmatpush.msra.mxu0 %v21
    %334 = vmatpush.msra.mxu0 %v20
    %335 = vmatpush.msra.mxu0 %v19
    %336 = vmatmul.f32.gmra.mxu0 %v286
    %v337 = vpop.f32.mrf.mxu0
    %v338 = vadd.f32 %v277, %v337
    %339 = vdwg.mxu0
    %340 = vmatpush.msra.mxu0 %v50
    %341 = vmatpush.msra.mxu0 %v49
    %342 = vmatpush.msra.mxu0 %v48
    %343 = vmatpush.msra.mxu0 %v47
    %344 = vmatpush.msra.mxu0 %v46
    %345 = vmatpush.msra.mxu0 %v45
    %346 = vmatpush.msra.mxu0 %v44
    %347 = vmatpush.msra.mxu0 %v43
    %348 = vmatpush.msra.mxu0 %v42
    %349 = vmatpush.msra.mxu0 %v41
    %350 = vmatpush.msra.mxu0 %v40
    %351 = vmatpush.msra.mxu0 %v39
    %352 = vmatpush.msra.mxu0 %v38
    %353 = vmatpush.msra.mxu0 %v37
    %354 = vmatpush.msra.mxu0 %v36
    %355 = vmatpush.msra.mxu0 %v35
    %356 = vmatmul.f32.gmra.mxu0 %v287
    %v357 = vpop.f32.mrf.mxu0
    %v358 = vadd.f32 %v338, %v357
    %359 = vdwg.mxu0
    %360 = vmatpush.msra.mxu0 %v66
    %361 = vmatpush.msra.mxu0 %v65
    %362 = vmatpush.msra.mxu0 %v64
    %363 = vmatpush.msra.mxu0 %v63
    %364 = vmatpush.msra.mxu0 %v62
    %365 = vmatpush.msra.mxu0 %v61
    %366 = vmatpush.msra.mxu0 %v60
    %367 = vmatpush.msra.mxu0 %v59
    %368 = vmatpush.msra.mxu0 %v58
    %369 = vmatpush.msra.mxu0 %v57
    %370 = vmatpush.msra.mxu0 %v56
    %371 = vmatpush.msra.mxu0 %v55
    %372 = vmatpush.msra.mxu0 %v54
    %373 = vmatpush.msra.mxu0 %v53
    %374 = vmatpush.msra.mxu0 %v52
    %375 = vmatpush.msra.mxu0 %v51
    %376 = vmatmul.f32.gmra.mxu0 %v288
    %v377 = vpop.f32.mrf.mxu0
    %v378 = vadd.f32 %v358, %v377
    %379 = vdwg.mxu0
    %380 = vmatpush.msra.mxu0 %v82
    %381 = vmatpush.msra.mxu0 %v81
    %382 = vmatpush.msra.mxu0 %v80
    %383 = vmatpush.msra.mxu0 %v79
    %384 = vmatpush.msra.mxu0 %v78
    %385 = vmatpush.msra.mxu0 %v77
    %386 = vmatpush.msra.mxu0 %v76
    %387 = vmatpush.msra.mxu0 %v75
    %388 = vmatpush.msra.mxu0 %v74
    %389 = vmatpush.msra.mxu0 %v73
    %390 = vmatpush.msra.mxu0 %v72
    %391 = vmatpush.msra.mxu0 %v71
    %392 = vmatpush.msra.mxu0 %v70
    %393 = vmatpush.msra.mxu0 %v69
    %394 = vmatpush.msra.mxu0 %v68
    %395 = vmatpush.msra.mxu0 %v67
    %396 = vmatmul.f32.gmra.mxu0 %v289
    %v397 = vpop.f32.mrf.mxu0
    %v398 = vadd.f32 %v378, %v397
    %399 = vdwg.mxu0
    %400 = vmatpush.msra.mxu0 %v98
    %401 = vmatpush.msra.mxu0 %v97
    %402 = vmatpush.msra.mxu0 %v96
    %403 = vmatpush.msra.mxu0 %v95
    %404 = vmatpush.msra.mxu0 %v94
    %405 = vmatpush.msra.mxu0 %v93
    %406 = vmatpush.msra.mxu0 %v92
    %407 = vmatpush.msra.mxu0 %v91
    %408 = vmatpush.msra.mxu0 %v90
    %409 = vmatpush.msra.mxu0 %v89
    %410 = vmatpush.msra.mxu0 %v88
    %411 = vmatpush.msra.mxu0 %v87
    %412 = vmatpush.msra.mxu0 %v86
    %413 = vmatpush.msra.mxu0 %v85
    %414 = vmatpush.msra.mxu0 %v84
    %415 = vmatpush.msra.mxu0 %v83
    %416 = vmatmul.f32.gmra.mxu0 %v290
    %v417 = vpop.f32.mrf.mxu0
    %v418 = vadd.f32 %v398, %v417
    %419 = vdwg.mxu0
    %420 = vmatpush.msra.mxu0 %v114
    %421 = vmatpush.msra.mxu0 %v113
    %422 = vmatpush.msra.mxu0 %v112
    %423 = vmatpush.msra.mxu0 %v111
    %424 = vmatpush.msra.mxu0 %v110
    %425 = vmatpush.msra.mxu0 %v109
    %426 = vmatpush.msra.mxu0 %v108
    %427 = vmatpush.msra.mxu0 %v107
    %428 = vmatpush.msra.mxu0 %v106
    %429 = vmatpush.msra.mxu0 %v105
    %430 = vmatpush.msra.mxu0 %v104
    %431 = vmatpush.msra.mxu0 %v103
    %432 = vmatpush.msra.mxu0 %v102
    %433 = vmatpush.msra.mxu0 %v101
    %434 = vmatpush.msra.mxu0 %v100
    %435 = vmatpush.msra.mxu0 %v99
    %436 = vmatmul.f32.gmra.mxu0 %v291
    %v437 = vpop.f32.mrf.mxu0
    %v438 = vadd.f32 %v418, %v437
    %439 = vdwg.mxu0
    %440 = vmatpush.msra.mxu0 %v130
    %441 = vmatpush.msra.mxu0 %v129
    %442 = vmatpush.msra.mxu0 %v128
    %443 = vmatpush.msra.mxu0 %v127
    %444 = vmatpush.msra.mxu0 %v126
    %445 = vmatpush.msra.mxu0 %v125
    %446 = vmatpush.msra.mxu0 %v124
    %447 = vmatpush.msra.mxu0 %v123
    %448 = vmatpush.msra.mxu0 %v122
    %449 = vmatpush.msra.mxu0 %v121
    %450 = vmatpush.msra.mxu0 %v120
    %451 = vmatpush.msra.mxu0 %v119
    %452 = vmatpush.msra.mxu0 %v118
    %453 = vmatpush.msra.mxu0 %v117
    %454 = vmatpush.msra.mxu0 %v116
    %455 = vmatpush.msra.mxu0 %v115
    %456 = vmatmul.f32.gmra.mxu0 %v292
    %v457 = vpop.f32.mrf.mxu0
    %v458 = vadd.f32 %v438, %v457
    %459 = vdwg.mxu0
    %460 = vmatpush.msra.mxu0 %v146
    %461 = vmatpush.msra.mxu0 %v145
    %462 = vmatpush.msra.mxu0 %v144
    %463 = vmatpush.msra.mxu0 %v143
    %464 = vmatpush.msra.mxu0 %v142
    %465 = vmatpush.msra.mxu0 %v141
    %466 = vmatpush.msra.mxu0 %v140
    %467 = vmatpush.msra.mxu0 %v139
    %468 = vmatpush.msra.mxu0 %v138
    %469 = vmatpush.msra.mxu0 %v137
    %470 = vmatpush.msra.mxu0 %v136
    %471 = vmatpush.msra.mxu0 %v135
    %472 = vmatpush.msra.mxu0 %v134
    %473 = vmatpush.msra.mxu0 %v133
    %474 = vmatpush.msra.mxu0 %v132
    %475 = vmatpush.msra.mxu0 %v131
    %476 = vmatmul.f32.gmra.mxu0 %v293
    %v477 = vpop.f32.mrf.mxu0
    %v478 = vadd.f32 %v458, %v477
    %479 = vdwg.mxu0
    %480 = vmatpush.msra.mxu0 %v162
    %481 = vmatpush.msra.mxu0 %v161
    %482 = vmatpush.msra.mxu0 %v160
    %483 = vmatpush.msra.mxu0 %v159
    %484 = vmatpush.msra.mxu0 %v158
    %485 = vmatpush.msra.mxu0 %v157
    %486 = vmatpush.msra.mxu0 %v156
    %487 = vmatpush.msra.mxu0 %v155
    %488 = vmatpush.msra.mxu0 %v154
    %489 = vmatpush.msra.mxu0 %v153
    %490 = vmatpush.msra.mxu0 %v152
    %491 = vmatpush.msra.mxu0 %v151
    %492 = vmatpush.msra.mxu0 %v150
    %493 = vmatpush.msra.mxu0 %v149
    %494 = vmatpush.msra.mxu0 %v148
    %495 = vmatpush.msra.mxu0 %v147
    %496 = vmatmul.f32.gmra.mxu0 %v296
    %v497 = vpop.f32.mrf.mxu0
    %v498 = vadd.f32 %v478, %v497
    %499 = vdwg.mxu0
    %500 = vmatpush.msra.mxu0 %v178
    %501 = vmatpush.msra.mxu0 %v177
    %502 = vmatpush.msra.mxu0 %v176
    %503 = vmatpush.msra.mxu0 %v175
    %504 = vmatpush.msra.mxu0 %v174
    %505 = vmatpush.msra.mxu0 %v173
    %506 = vmatpush.msra.mxu0 %v172
    %507 = vmatpush.msra.mxu0 %v171
    %508 = vmatpush.msra.mxu0 %v170
    %509 = vmatpush.msra.mxu0 %v169
    %510 = vmatpush.msra.mxu0 %v168
    %511 = vmatpush.msra.mxu0 %v167
    %512 = vmatpush.msra.mxu0 %v166
    %513 = vmatpush.msra.mxu0 %v165
    %514 = vmatpush.msra.mxu0 %v164
    %515 = vmatpush.msra.mxu0 %v163
    %516 = vmatmul.f32.gmra.mxu0 %v297
    %v517 = vpop.f32.mrf.mxu0
    %v518 = vadd.f32 %v498, %v517
    %519 = vdwg.mxu0
    %520 = vmatpush.msra.mxu0 %v194
    %521 = vmatpush.msra.mxu0 %v193
    %522 = vmatpush.msra.mxu0 %v192
    %523 = vmatpush.msra.mxu0 %v191
    %524 = vmatpush.msra.mxu0 %v190
    %525 = vmatpush.msra.mxu0 %v189
    %526 = vmatpush.msra.mxu0 %v188
    %527 = vmatpush.msra.mxu0 %v187
    %528 = vmatpush.msra.mxu0 %v186
    %529 = vmatpush.msra.mxu0 %v185
    %530 = vmatpush.msra.mxu0 %v184
    %531 = vmatpush.msra.mxu0 %v183
    %532 = vmatpush.msra.mxu0 %v182
    %533 = vmatpush.msra.mxu0 %v181
    %534 = vmatpush.msra.mxu0 %v180
    %535 = vmatpush.msra.mxu0 %v179
    %536 = vmatmul.f32.gmra.mxu0 %v298
    %v537 = vpop.f32.mrf.mxu0
    %v538 = vadd.f32 %v518, %v537
    %539 = vdwg.mxu0
    %540 = vmatpush.msra.mxu0 %v210
    %541 = vmatpush.msra.mxu0 %v209
    %542 = vmatpush.msra.mxu0 %v208
    %543 = vmatpush.msra.mxu0 %v207
    %544 = vmatpush.msra.mxu0 %v206
    %545 = vmatpush.msra.mxu0 %v205
    %546 = vmatpush.msra.mxu0 %v204
    %547 = vmatpush.msra.mxu0 %v203
    %548 = vmatpush.msra.mxu0 %v202
    %549 = vmatpush.msra.mxu0 %v201
    %550 = vmatpush.msra.mxu0 %v200
    %551 = vmatpush.msra.mxu0 %v199
    %552 = vmatpush.msra.mxu0 %v198
    %553 = vmatpush.msra.mxu0 %v197
    %554 = vmatpush.msra.mxu0 %v196
    %555 = vmatpush.msra.mxu0 %v195
    %556 = vmatmul.f32.gmra.mxu0 %v299
    %v557 = vpop.f32.mrf.mxu0
    %v558 = vadd.f32 %v538, %v557
    %559 = vdwg.mxu0
    %560 = vmatpush.msra.mxu0 %v226
    %561 = vmatpush.msra.mxu0 %v225
    %562 = vmatpush.msra.mxu0 %v224
    %563 = vmatpush.msra.mxu0 %v223
    %564 = vmatpush.msra.mxu0 %v222
    %565 = vmatpush.msra.mxu0 %v221
    %566 = vmatpush.msra.mxu0 %v220
    %567 = vmatpush.msra.mxu0 %v219
    %568 = vmatpush.msra.mxu0 %v218
    %569 = vmatpush.msra.mxu0 %v217
    %570 = vmatpush.msra.mxu0 %v216
    %571 = vmatpush.msra.mxu0 %v215
    %572 = vmatpush.msra.mxu0 %v214
    %573 = vmatpush.msra.mxu0 %v213
    %574 = vmatpush.msra.mxu0 %v212
    %575 = vmatpush.msra.mxu0 %v211
    %576 = vmatmul.f32.gmra.mxu0 %v300
    %v577 = vpop.f32.mrf.mxu0
    %v578 = vadd.f32 %v558, %v577
    %579 = vdwg.mxu0
    %580 = vmatpush.msra.mxu0 %v242
    %581 = vmatpush.msra.mxu0 %v241
    %582 = vmatpush.msra.mxu0 %v240
    %583 = vmatpush.msra.mxu0 %v239
    %584 = vmatpush.msra.mxu0 %v238
    %585 = vmatpush.msra.mxu0 %v237
    %586 = vmatpush.msra.mxu0 %v236
    %587 = vmatpush.msra.mxu0 %v235
    %588 = vmatpush.msra.mxu0 %v234
    %589 = vmatpush.msra.mxu0 %v233
    %590 = vmatpush.msra.mxu0 %v232
    %591 = vmatpush.msra.mxu0 %v231
    %592 = vmatpush.msra.mxu0 %v230
    %593 = vmatpush.msra.mxu0 %v229
    %594 = vmatpush.msra.mxu0 %v228
    %595 = vmatpush.msra.mxu0 %v227
    %596 = vmatmul.f32.gmra.mxu0 %v301
    %v597 = vpop.f32.mrf.mxu0
    %v598 = vadd.f32 %v578, %v597
    %599 = vdwg.mxu0
    %600 = vmatpush.msra.mxu0 %v258
    %601 = vmatpush.msra.mxu0 %v257
    %602 = vmatpush.msra.mxu0 %v256
    %603 = vmatpush.msra.mxu0 %v255
    %604 = vmatpush.msra.mxu0 %v254
    %605 = vmatpush.msra.mxu0 %v253
    %606 = vmatpush.msra.mxu0 %v252
    %607 = vmatpush.msra.mxu0 %v251
    %608 = vmatpush.msra.mxu0 %v250
    %609 = vmatpush.msra.mxu0 %v249
    %610 = vmatpush.msra.mxu0 %v248
    %611 = vmatpush.msra.mxu0 %v247
    %612 = vmatpush.msra.mxu0 %v246
    %613 = vmatpush.msra.mxu0 %v245
    %614 = vmatpush.msra.mxu0 %v244
    %615 = vmatpush.msra.mxu0 %v243
    %616 = vmatmul.f32.gmra.mxu0 %v302
    %v617 = vpop.f32.mrf.mxu0
    %v618 = vadd.f32 %v598, %v617
    %619 = vdwg.mxu0
    %620 = vmatpush.msra.mxu0 %v274
    %621 = vmatpush.msra.mxu0 %v273
    %622 = vmatpush.msra.mxu0 %v272
    %623 = vmatpush.msra.mxu0 %v271
    %624 = vmatpush.msra.mxu0 %v270
    %625 = vmatpush.msra.mxu0 %v269
    %626 = vmatpush.msra.mxu0 %v268
    %627 = vmatpush.msra.mxu0 %v267
    %628 = vmatpush.msra.mxu0 %v266
    %629 = vmatpush.msra.mxu0 %v265
    %630 = vmatpush.msra.mxu0 %v264
    %631 = vmatpush.msra.mxu0 %v263
    %632 = vmatpush.msra.mxu0 %v262
    %633 = vmatpush.msra.mxu0 %v261
    %634 = vmatpush.msra.mxu0 %v260
    %635 = vmatpush.msra.mxu0 %v259
    %636 = vmatmul.f32.gmra.mxu0 %v303
    %v637 = vpop.f32.mrf.mxu0
    %v638 = vadd.f32 %v618, %v637
    %639 = vdwg.mxu0
    %vm640 = vcmask 74752
    %v641 = vsel %vm640, %v638, -inf
    %642 = vmax.xlane.f32.xlu0 %v641
    %v643 = vpop.xlane.xlu0 %642
    %v644 = vsub.f32 %v638, %v643
    %v645 = vmul.f32 %v644, 1.442695
    %v646 = vpow.pop %v645
    %v647 = vsel %vm640, %v646, 0.0
    %648 = vadd.xlane.f32.xlu0 %v647
    %v649 = vpop.xlane.xlu0 %648
    %v650 = vlog2.pop %v649
    %v651 = vmul.f32 %v650, 0.6931472
    %v652 = vsub.f32 %v644, %v651
    %653 = vst.msk [vmem:[#allocation2] sm:$0x3] %vm640, %v652
    // Predicated region
    $region14: #{cnn_cifar_forward.5} parent=1 // pred_check
      _
    $region15: #{cnn_cifar_forward.5} parent=1 // pred_check_branch
      %655 = sbr.rel (0) target = $region17
    $region16: #{cnn_cifar_forward.5} parent=1 // pred_region
      %657 = vsyncadd [#allocation3], 0
      %s659 = sshll.u32 [#allocation2], 4
      %s660 = int_to_ptr.vmem [resolvable:$true] %s659
      %s661 = sshll.u32 %s3, 4
      %s662 = int_to_ptr.hbm [resolvable:$true] %s661
      %664 = dma.vmem_to_hbm [thread:$0]  %s660, 32, %s662, [#allocation3]
    $region17: #{cnn_cifar_forward.5} parent=1 // pred_fallthru
      _
    // Predicated region
    $region18: #{cnn_cifar_forward.5} parent=1 // pred_check
      _
    $region19: #{cnn_cifar_forward.5} parent=1 // pred_check_branch
      %666 = sbr.rel (0) target = $region21
    $region20: #{cnn_cifar_forward.5} parent=1 // pred_region
      %668 = dma.done [#allocation3], 32
    $region21: #{cnn_cifar_forward.5} parent=1 // pred_fallthru
      _
    %669 = vsyncpa [#allocation3], 1

</llo_original>
